<compile_context>
chip_gen: v7x
topology: tpu7x:2x2x1
jax: 0.10.0
libtpu: 0.0.40
codegen_flags: <defaults>
</compile_context>

<pallas_src>
import math

import jax
import jax.numpy as jnp
from jax.experimental import pallas as pl
from jax.experimental.pallas import tpu as pltpu


LANE = 128
SUBLANE = 8


def _round_up(x, m):
    return ((x + m - 1) // m) * m


# ----------------------------- Pallas kernel --------------------------------
def anthill_kernel(x_ref, z_ref, t_ref, ad_ref,
                   w1_ref, b1_ref, w2_ref, b2_ref, w3_ref, b3_ref, w4_ref,
                   o_ref):
    # x_ref/z_ref: (TL, E); t_ref: (TL, 1); ad_ref: (1, D); o_ref: (TL, D).
    x = x_ref[...] + z_ref[...]                                              # (TL, E)

    h = jnp.sin(jnp.dot(x, w1_ref[...], preferred_element_type=jnp.float32) + b1_ref[...])
    h = jnp.sin(jnp.dot(h, w2_ref[...], preferred_element_type=jnp.float32) + b2_ref[...])
    h = jnp.sin(jnp.dot(h, w3_ref[...], preferred_element_type=jnp.float32) + b3_ref[...])
    h = jnp.dot(h, w4_ref[...], preferred_element_type=jnp.float32)         # (TL, D)

    # Exponential modulation in-kernel: (TL,1) * (1,D) broadcast, EUP exp is free slot-wise.
    decay = jnp.exp(-t_ref[...] * ad_ref[...])
    o_ref[...] = (h * decay).astype(o_ref.dtype)


# ------------------------------ tiling helpers -------------------------------
def _pick_tl(L, E, D, *, budget_bytes=32 << 20, max_tl=2048):
    """Largest TL (multiple of 8, <= max_tl) whose (8,128)-tiled streamed buffers fit the budget."""
    Ep, Dp = _round_up(E, LANE), _round_up(D, LANE)
    # x, z (TL,E), t (TL,1), out (TL,D): f32, lane-padded, double-buffered.
    per_row = 4 * 2 * (2 * Ep + LANE + Dp)
    tl = (budget_bytes // per_row) // SUBLANE * SUBLANE
    tl = max(SUBLANE, min(max_tl, tl))
    return min(tl, _round_up(L, SUBLANE))


def anthill_forward(x, kparams, tl=None, mask=None):
    """x: (B, L, emb_dim) f32 -> (B, L, d_model) f32."""
    # TODO(synk): `mask` has no defined semantics in the spec; only the mask=None path is implemented.
    z, t, ad, w1, b1, w2, b2, w3, b3, w4 = kparams
    B, L, E = x.shape
    Op = w1.shape[1]
    D = w4.shape[1]

    TL = _pick_tl(L, E, D) if tl is None else _round_up(tl, SUBLANE)
    Lp = _round_up(L, TL)
    if Lp != L:                         # pad L to a multiple of TL; sliced off below
        padL = ((0, 0), (0, Lp - L), (0, 0))
        x, z, t = jnp.pad(x, padL), jnp.pad(z, padL), jnp.pad(t, padL)

    grid = (Lp // TL, B)                # batch innermost: z/t blocks persist across the batch loop

    const = lambda shape: pl.BlockSpec(shape, lambda l, b: (0, 0))   # resident constants

    # True (8,128)-tiled VMEM footprint for the limit hint (capped below v7x's 64 MiB).
    Ep, Dp, Opp = _round_up(E, LANE), _round_up(D, LANE), _round_up(Op, LANE)
    stream_bytes = 4 * 2 * TL * (2 * Ep + LANE + Dp)
    weight_bytes = 4 * (_round_up(E, SUBLANE) * Opp + 2 * Op * Opp + Op * Dp
                        + 3 * SUBLANE * Opp + SUBLANE * Dp)
    vmem_limit = int(min(max(2 * (stream_bytes + 2 * weight_bytes), 32 << 20), 48 << 20))

    cost = pl.CostEstimate(
        flops=2 * B * Lp * (E * Op + 2 * Op * Op + Op * D),
        transcendentals=B * Lp * (3 * Op + D),
        bytes_accessed=4 * (B * Lp * (E + D) + Lp * (E + 1)
                            + E * Op + 2 * Op * Op + Op * D + 3 * Op + D),
    )

    out = pl.pallas_call(
        anthill_kernel,
        out_shape=jax.ShapeDtypeStruct((B, Lp, D), jnp.float32),
        grid=grid,
        in_specs=[
            pl.BlockSpec((None, TL, E), lambda l, b: (b, l, 0)),   # x       (batch-tiled)
            pl.BlockSpec((None, TL, E), lambda l, b: (0, l, 0)),   # z       (batch-invariant, not re-DMA'd)
            pl.BlockSpec((None, TL, 1), lambda l, b: (0, l, 0)),   # t       (batch-invariant column)
            const((1, D)),                                         # |deltas| (resident)
            const((E, Op)), const((1, Op)),                        # Linear1 (freq-folded)
            const((Op, Op)), const((1, Op)),                       # Linear2 (freq-folded)
            const((Op, Op)), const((1, Op)),                       # Linear3 (freq-folded)
            const((Op, D)),                                        # Linear4 (no bias, unpadded d_model)
        ],
        out_specs=pl.BlockSpec((None, TL, D), lambda l, b: (b, l, 0)),
        compiler_params=pltpu.CompilerParams(
            dimension_semantics=("parallel", "arbitrary"),
            vmem_limit_bytes=vmem_limit,
        ),
        cost_estimate=cost,
    )(x, z, t, ad, w1, b1, w2, b2, w3, b3, w4)

    return out[:, :L, :] if Lp != L else out


# --------------------------- parameter construction --------------------------
def make_params(d_model, emb_dim, order, seq_len, key):
    """Raw (unpadded, unfused) module parameters; used by the pure-JAX reference."""
    # PositionalEmbedding (complex exponential features), deterministic:
    t_norm = jnp.linspace(0.0, 1.0, seq_len, dtype=jnp.float32)[None, :, None]      # (1, L, 1)
    bands = (emb_dim - 1) // 2
    t_resc = jnp.linspace(0.0, seq_len - 1, seq_len, dtype=jnp.float32)[None, :, None]
    w_ang = 2.0 * math.pi * t_resc / seq_len                                         # (1, L, 1)
    f = jnp.linspace(1e-4, bands - 1, bands, dtype=jnp.float32)[None, None, :]       # (1, 1, bands)
    zc = jnp.exp(-1j * (f * w_ang).astype(jnp.complex64))
    z = jnp.concatenate([t_norm, jnp.real(zc), jnp.imag(zc)], axis=-1).astype(jnp.float32)  # (1, L, E)

    # HyenaFilter implicit MLP weights (deterministic PRNG init), stored (in, out):
    k1, k2, k3, k4 = jax.random.split(key, 4)
    w1 = jax.random.normal(k1, (emb_dim, order), jnp.float32) / math.sqrt(emb_dim)
    b1 = jnp.zeros((1, order), jnp.float32)
    w2 = jax.random.normal(k2, (order, order), jnp.float32) / math.sqrt(order)
    b2 = jnp.zeros((1, order), jnp.float32)
    w3 = jax.random.normal(k3, (order, order), jnp.float32) / math.sqrt(order)
    b3 = jnp.zeros((1, order), jnp.float32)
    w4 = jax.random.normal(k4, (order, d_model), jnp.float32) / math.sqrt(order)
    f1 = jnp.ones((1, order), jnp.float32)   # Sin activation freqs, w=1
    f2 = jnp.ones((1, order), jnp.float32)
    f3 = jnp.ones((1, order), jnp.float32)

    # ExponentialModulation(d_model, fast_decay_pct=0.5, slow_decay_pct=0.5), target=1e-2.
    # Note: fast==slow==0.5 (per the spec's constructor args) makes all channel decays equal.
    max_decay = math.log(1e-2) / 0.5
    min_decay = math.log(1e-2) / 0.5
    deltas = jnp.linspace(min_decay, max_decay, d_model, dtype=jnp.float32)[None, :]  # (1, D)

    return (z, t_norm, w1, b1, f1, w2, b2, f2, w3, b3, f3, w4, deltas)


def prepare_kernel_params(params, lane=LANE):
    """Fold Sin freqs into weights, pad the hidden order dim to 128 lanes, keep d_model unpadded."""
    (z, t, w1, b1, f1, w2, b2, f2, w3, b3, f3, w4, deltas) = params
    E, O = w1.shape
    D = w4.shape[1]
    Op = _round_up(O, lane)

    # sin(f * (xW + b)) == sin(x (W*f) + b*f)
    w1f, b1f = w1 * f1, b1 * f1
    w2f, b2f = w2 * f2, b2 * f2
    w3f, b3f = w3 * f3, b3 * f3

    pad2 = lambda a, r, c: jnp.pad(a, ((0, r - a.shape[0]), (0, c - a.shape[1])))
    w1p, b1p = pad2(w1f, E, Op), pad2(b1f, 1, Op)
    w2p, b2p = pad2(w2f, Op, Op), pad2(b2f, 1, Op)
    w3p, b3p = pad2(w3f, Op, Op), pad2(b3f, 1, Op)
    w4p = pad2(w4, Op, D)                       # d_model left unpadded: lane-exact HBM output

    ad = jnp.abs(deltas)                        # (1, D); modulation computed in-kernel from t * |deltas|

    return (z, t, ad, w1p, b1p, w2p, b2p, w3p, b3p, w4p)


# ------------------------------- pure-JAX ref --------------------------------
def anthill_ref(x, params):
    (z, t, w1, b1, f1, w2, b2, f2, w3, b3, f3, w4, deltas) = params
    h = x + z
    h = jnp.sin(f1 * (h @ w1 + b1))
    h = jnp.sin(f2 * (h @ w2 + b2))
    h = jnp.sin(f3 * (h @ w3 + b3))
    h = h @ w4
    decay = jnp.exp(-t * jnp.abs(deltas)[None])
    return h * decay


if __name__ == "__main__":
    B, L, emb_dim, order, d_model = 2, 256, 5, 16, 32

    key = jax.random.PRNGKey(0)
    kx, kp = jax.random.split(key)
    x = jax.random.normal(kx, (B, L, emb_dim), jnp.float32)

    params = make_params(d_model, emb_dim, order, L, kp)
    kparams = prepare_kernel_params(params)

    out = anthill_forward(x, kparams, tl=64)   # grid = (4, 2): L tiles outer, batch inner
    out = jax.block_until_ready(out)

    ref = anthill_ref(x, params)
    assert out.shape == (B, L, d_model)
    err = float(jnp.max(jnp.abs(out - ref)))
    assert jnp.allclose(out, ref, atol=1e-4, rtol=1e-4), err
    print("KERNEL_OK")
</pallas_src>

<mosaic_0001>
module attributes {stable_mosaic.version = 11 : i64} {
  func.func @anthill_kernel(%arg0: i32, %arg1: i32, %arg2: memref<1x64x5xf32, #tpu.memory_space<vmem>>, %arg3: memref<1x64x5xf32, #tpu.memory_space<vmem>>, %arg4: memref<1x64x1xf32, #tpu.memory_space<vmem>>, %arg5: memref<1x32xf32, #tpu.memory_space<vmem>>, %arg6: memref<5x128xf32, #tpu.memory_space<vmem>>, %arg7: memref<1x128xf32, #tpu.memory_space<vmem>>, %arg8: memref<128x128xf32, #tpu.memory_space<vmem>>, %arg9: memref<1x128xf32, #tpu.memory_space<vmem>>, %arg10: memref<128x128xf32, #tpu.memory_space<vmem>>, %arg11: memref<1x128xf32, #tpu.memory_space<vmem>>, %arg12: memref<128x32xf32, #tpu.memory_space<vmem>>, %arg13: memref<1x64x32xf32, #tpu.memory_space<vmem>>) attributes {dimension_semantics = [#tpu.dimension_semantics<parallel>, #tpu.dimension_semantics<arbitrary>], iteration_bounds = array<i64: 4, 2>, scalar_prefetch = 0 : i64, scratch_operands = 0 : i64, tpu.core_type = #tpu.core_type<tc>, window_params = [{transform_indices = @transform_0, window_bounds = array<i64: 1, 64, 5>}, {transform_indices = @transform_1, window_bounds = array<i64: 1, 64, 5>}, {transform_indices = @transform_2, window_bounds = array<i64: 1, 64, 1>}, {pipeline_mode = #tpu.pipeline_mode<synchronous>, transform_indices = @transform_3, window_bounds = array<i64: 1, 32>}, {pipeline_mode = #tpu.pipeline_mode<synchronous>, transform_indices = @transform_4, window_bounds = array<i64: 5, 128>}, {pipeline_mode = #tpu.pipeline_mode<synchronous>, transform_indices = @transform_5, window_bounds = array<i64: 1, 128>}, {pipeline_mode = #tpu.pipeline_mode<synchronous>, transform_indices = @transform_6, window_bounds = array<i64: 128, 128>}, {pipeline_mode = #tpu.pipeline_mode<synchronous>, transform_indices = @transform_7, window_bounds = array<i64: 1, 128>}, {pipeline_mode = #tpu.pipeline_mode<synchronous>, transform_indices = @transform_8, window_bounds = array<i64: 128, 128>}, {pipeline_mode = #tpu.pipeline_mode<synchronous>, transform_indices = @transform_9, window_bounds = array<i64: 1, 128>}, {pipeline_mode = #tpu.pipeline_mode<synchronous>, transform_indices = @transform_10, window_bounds = array<i64: 128, 32>}, {transform_indices = @transform_11, window_bounds = array<i64: 1, 64, 32>}]} {
    %c0 = arith.constant 0 : index
    %c0_0 = arith.constant 0 : index
    %c0_1 = arith.constant 0 : index
    %0 = vector.load %arg2[%c0, %c0_0, %c0_1] : memref<1x64x5xf32, #tpu.memory_space<vmem>>, vector<1x64x5xf32>
    %1 = vector.shape_cast %0 : vector<1x64x5xf32> to vector<64x5xf32>
    %c0_2 = arith.constant 0 : index
    %c0_3 = arith.constant 0 : index
    %c0_4 = arith.constant 0 : index
    %2 = vector.load %arg3[%c0_2, %c0_3, %c0_4] : memref<1x64x5xf32, #tpu.memory_space<vmem>>, vector<1x64x5xf32>
    %3 = vector.shape_cast %2 : vector<1x64x5xf32> to vector<64x5xf32>
    %4 = arith.addf %1, %3 : vector<64x5xf32>
    %c0_5 = arith.constant 0 : index
    %c0_6 = arith.constant 0 : index
    %5 = vector.load %arg6[%c0_5, %c0_6] : memref<5x128xf32, #tpu.memory_space<vmem>>, vector<5x128xf32>
    %cst = arith.constant dense<0.000000e+00> : vector<64x128xf32>
    %6 = tpu.matmul %4, %5, %cst {dimension_numbers = #tpu.dot_dimension_numbers<[1], [0], [0], [1], [0, 0, 1, 1], [], []>} : vector<64x5xf32>, vector<5x128xf32>, vector<64x128xf32> -> vector<64x128xf32>
    %c0_7 = arith.constant 0 : index
    %c0_8 = arith.constant 0 : index
    %7 = vector.load %arg7[%c0_7, %c0_8] : memref<1x128xf32, #tpu.memory_space<vmem>>, vector<1x128xf32>
    %8 = vector.broadcast %7 : vector<1x128xf32> to vector<64x128xf32>
    %9 = arith.addf %6, %8 : vector<64x128xf32>
    %10 = math.sin %9 : vector<64x128xf32>
    %c0_9 = arith.constant 0 : index
    %c0_10 = arith.constant 0 : index
    %11 = vector.load %arg8[%c0_9, %c0_10] : memref<128x128xf32, #tpu.memory_space<vmem>>, vector<128x128xf32>
    %cst_11 = arith.constant dense<0.000000e+00> : vector<64x128xf32>
    %12 = tpu.matmul %10, %11, %cst_11 {dimension_numbers = #tpu.dot_dimension_numbers<[1], [0], [0], [1], [0, 0, 1, 1], [], []>} : vector<64x128xf32>, vector<128x128xf32>, vector<64x128xf32> -> vector<64x128xf32>
    %c0_12 = arith.constant 0 : index
    %c0_13 = arith.constant 0 : index
    %13 = vector.load %arg9[%c0_12, %c0_13] : memref<1x128xf32, #tpu.memory_space<vmem>>, vector<1x128xf32>
    %14 = vector.broadcast %13 : vector<1x128xf32> to vector<64x128xf32>
    %15 = arith.addf %12, %14 : vector<64x128xf32>
    %16 = math.sin %15 : vector<64x128xf32>
    %c0_14 = arith.constant 0 : index
    %c0_15 = arith.constant 0 : index
    %17 = vector.load %arg10[%c0_14, %c0_15] : memref<128x128xf32, #tpu.memory_space<vmem>>, vector<128x128xf32>
    %cst_16 = arith.constant dense<0.000000e+00> : vector<64x128xf32>
    %18 = tpu.matmul %16, %17, %cst_16 {dimension_numbers = #tpu.dot_dimension_numbers<[1], [0], [0], [1], [0, 0, 1, 1], [], []>} : vector<64x128xf32>, vector<128x128xf32>, vector<64x128xf32> -> vector<64x128xf32>
    %c0_17 = arith.constant 0 : index
    %c0_18 = arith.constant 0 : index
    %19 = vector.load %arg11[%c0_17, %c0_18] : memref<1x128xf32, #tpu.memory_space<vmem>>, vector<1x128xf32>
    %20 = vector.broadcast %19 : vector<1x128xf32> to vector<64x128xf32>
    %21 = arith.addf %18, %20 : vector<64x128xf32>
    %22 = math.sin %21 : vector<64x128xf32>
    %c0_19 = arith.constant 0 : index
    %c0_20 = arith.constant 0 : index
    %23 = vector.load %arg12[%c0_19, %c0_20] : memref<128x32xf32, #tpu.memory_space<vmem>>, vector<128x32xf32>
    %cst_21 = arith.constant dense<0.000000e+00> : vector<64x32xf32>
    %24 = tpu.matmul %22, %23, %cst_21 {dimension_numbers = #tpu.dot_dimension_numbers<[1], [0], [0], [1], [0, 0, 1, 1], [], []>} : vector<64x128xf32>, vector<128x32xf32>, vector<64x32xf32> -> vector<64x32xf32>
    %c0_22 = arith.constant 0 : index
    %c0_23 = arith.constant 0 : index
    %c0_24 = arith.constant 0 : index
    %25 = vector.load %arg4[%c0_22, %c0_23, %c0_24] : memref<1x64x1xf32, #tpu.memory_space<vmem>>, vector<1x64x1xf32>
    %26 = vector.shape_cast %25 : vector<1x64x1xf32> to vector<64x1xf32>
    %cst_25 = arith.constant 0.000000e+00 : f32
    %27 = vector.broadcast %cst_25 : f32 to vector<64x1xf32>
    %28 = arith.subf %27, %26 : vector<64x1xf32>
    %c0_26 = arith.constant 0 : index
    %c0_27 = arith.constant 0 : index
    %29 = vector.load %arg5[%c0_26, %c0_27] : memref<1x32xf32, #tpu.memory_space<vmem>>, vector<1x32xf32>
    %30 = vector.broadcast %28 : vector<64x1xf32> to vector<64x32xf32>
    %31 = vector.broadcast %29 : vector<1x32xf32> to vector<64x32xf32>
    %32 = arith.mulf %30, %31 : vector<64x32xf32>
    %33 = math.exp %32 : vector<64x32xf32>
    %34 = arith.mulf %24, %33 : vector<64x32xf32>
    %c0_28 = arith.constant 0 : index
    %c0_29 = arith.constant 0 : index
    %c0_30 = arith.constant 0 : index
    %35 = vector.load %arg13[%c0_28, %c0_29, %c0_30] : memref<1x64x32xf32, #tpu.memory_space<vmem>>, vector<1x64x32xf32>
    %36 = vector.shape_cast %35 : vector<1x64x32xf32> to vector<64x32xf32>
    %37 = vector.shape_cast %34 : vector<64x32xf32> to vector<1x64x32xf32>
    tpu.vector_store %arg13[%c0_28, %c0_29, %c0_30], %37 {strides = array<i32>} : memref<1x64x32xf32, #tpu.memory_space<vmem>>, vector<1x64x32xf32>,
    return
  }
  func.func @transform_0(%arg0: i32, %arg1: i32) -> (i32, i32, i32) {
    %c0_i32 = arith.constant 0 : i32
    %c0_i32_0 = arith.constant 0 : i32
    return %arg1, %arg0, %c0_i32 : i32, i32, i32
  }
  func.func @transform_1(%arg0: i32, %arg1: i32) -> (i32, i32, i32) {
    %c0_i32 = arith.constant 0 : i32
    %c0_i32_0 = arith.constant 0 : i32
    %c0_i32_1 = arith.constant 0 : i32
    return %c0_i32, %arg0, %c0_i32_0 : i32, i32, i32
  }
  func.func @transform_2(%arg0: i32, %arg1: i32) -> (i32, i32, i32) {
    %c0_i32 = arith.constant 0 : i32
    %c0_i32_0 = arith.constant 0 : i32
    %c0_i32_1 = arith.constant 0 : i32
    return %c0_i32, %arg0, %c0_i32_0 : i32, i32, i32
  }
  func.func @transform_3(%arg0: i32, %arg1: i32) -> (i32, i32) {
    %c0_i32 = arith.constant 0 : i32
    %c0_i32_0 = arith.constant 0 : i32
    %c0_i32_1 = arith.constant 0 : i32
    return %c0_i32, %c0_i32_0 : i32, i32
  }
  func.func @transform_4(%arg0: i32, %arg1: i32) -> (i32, i32) {
    %c0_i32 = arith.constant 0 : i32
    %c0_i32_0 = arith.constant 0 : i32
    %c0_i32_1 = arith.constant 0 : i32
    return %c0_i32, %c0_i32_0 : i32, i32
  }
  func.func @transform_5(%arg0: i32, %arg1: i32) -> (i32, i32) {
    %c0_i32 = arith.constant 0 : i32
    %c0_i32_0 = arith.constant 0 : i32
    %c0_i32_1 = arith.constant 0 : i32
    return %c0_i32, %c0_i32_0 : i32, i32
  }
  func.func @transform_6(%arg0: i32, %arg1: i32) -> (i32, i32) {
    %c0_i32 = arith.constant 0 : i32
    %c0_i32_0 = arith.constant 0 : i32
    %c0_i32_1 = arith.constant 0 : i32
    return %c0_i32, %c0_i32_0 : i32, i32
  }
  func.func @transform_7(%arg0: i32, %arg1: i32) -> (i32, i32) {
    %c0_i32 = arith.constant 0 : i32
    %c0_i32_0 = arith.constant 0 : i32
    %c0_i32_1 = arith.constant 0 : i32
    return %c0_i32, %c0_i32_0 : i32, i32
  }
  func.func @transform_8(%arg0: i32, %arg1: i32) -> (i32, i32) {
    %c0_i32 = arith.constant 0 : i32
    %c0_i32_0 = arith.constant 0 : i32
    %c0_i32_1 = arith.constant 0 : i32
    return %c0_i32, %c0_i32_0 : i32, i32
  }
  func.func @transform_9(%arg0: i32, %arg1: i32) -> (i32, i32) {
    %c0_i32 = arith.constant 0 : i32
    %c0_i32_0 = arith.constant 0 : i32
    %c0_i32_1 = arith.constant 0 : i32
    return %c0_i32, %c0_i32_0 : i32, i32
  }
  func.func @transform_10(%arg0: i32, %arg1: i32) -> (i32, i32) {
    %c0_i32 = arith.constant 0 : i32
    %c0_i32_0 = arith.constant 0 : i32
    %c0_i32_1 = arith.constant 0 : i32
    return %c0_i32, %c0_i32_0 : i32, i32
  }
  func.func @transform_11(%arg0: i32, %arg1: i32) -> (i32, i32, i32) {
    %c0_i32 = arith.constant 0 : i32
    %c0_i32_0 = arith.constant 0 : i32
    return %arg1, %arg0, %c0_i32 : i32, i32, i32
  }
}

</mosaic_0001>

<llo_original>
// kernel: tpu_custom_call.1
$region0: #{tpu_custom_call.1}
  #allocation0 [shape = 'u32[]', space=smem, size = 0x4, offset = 0x4, fixed_abs, tag = 'smem constant byte address 0x4 - core index']
  #allocation1 [shape = 'u32[144,128]{1,0:T(1,128)}', space=vmem, size = 0x12000, scoped, tag = 'internal scratch']
  %s0 = inlined_call_operand.vmem [shape: f32[2,256,5], index: 0, kind: input, shape index: {}]
  %s1 = inlined_call_operand.vmem [shape: f32[1,256,5], index: 1, kind: input, shape index: {}]
  %s2 = inlined_call_operand.vmem [shape: f32[1,256,1], index: 2, kind: input, shape index: {}]
  %s3 = inlined_call_operand.vmem [shape: f32[1,32], index: 3, kind: input, shape index: {}]
  %s4 = inlined_call_operand.vmem [shape: f32[5,128], index: 4, kind: input, shape index: {}]
  %s5 = inlined_call_operand.vmem [shape: f32[1,128], index: 5, kind: input, shape index: {}]
  %s6 = inlined_call_operand.vmem [shape: f32[128,128], index: 6, kind: input, shape index: {}]
  %s7 = inlined_call_operand.vmem [shape: f32[1,128], index: 7, kind: input, shape index: {}]
  %s8 = inlined_call_operand.vmem [shape: f32[128,128], index: 8, kind: input, shape index: {}]
  %s9 = inlined_call_operand.vmem [shape: f32[1,128], index: 9, kind: input, shape index: {}]
  %s10 = inlined_call_operand.vmem [shape: f32[128,32], index: 10, kind: input, shape index: {}]
  %s11 = inlined_call_operand.vmem [shape: f32[2,256,32], index: 11, kind: output, shape index: {}]
  %s12 = sld [smem:[#allocation0]]
  $region77: #{tpu_custom_call.1} parent=0
    _
  %s14 = ssub.s32 1, %s12
  %s15 = scalar_select 0, %s14, %s12
  loop: start=0, step=1, limit=10
  $region2: #{tpu_custom_call.1} parent=0 // loop_pre_header
    _
  $region3: #{tpu_custom_call.1} parent=0 // loop_header
    %s17 = sphi 0, %s21
    %p18 = scmp.ge.s32.totalorder %s17, 10
    %s24 = sphi 0, %s36
    %s25 = sphi 0, %s32
    %s26 = sphi 0, %s24
    %s27 = sphi 0, %s25
    %s28 = sphi 0, %s26
    %s29 = sphi 0, %s27
    %s41 = sphi 0, %s43
    %s44 = sphi 0, %s41
    %s45 = sphi 0, %s44
    %s61 = sphi 0, %s45
    %s67 = sphi 0, %s69
    %s70 = sphi 0, %s67
    %s71 = sphi 0, %s70
    %s87 = sphi 0, %s71
    %s93 = sphi 0, %s95
    %s96 = sphi 0, %s93
    %s97 = sphi 0, %s96
    %s113 = sphi 0, %s97
    %s117 = sphi 0, %s117
    %s119 = sphi 0, %s117
    %s120 = sphi 0, %s119
    %s134 = sphi 0, %s120
    %s138 = sphi 0, %s138
    %s140 = sphi 0, %s138
    %s141 = sphi 0, %s140
    %s155 = sphi 0, %s141
    %s159 = sphi 0, %s159
    %s161 = sphi 0, %s159
    %s162 = sphi 0, %s161
    %s176 = sphi 0, %s162
    %s180 = sphi 0, %s180
    %s182 = sphi 0, %s180
    %s183 = sphi 0, %s182
    %s197 = sphi 0, %s183
    %s201 = sphi 0, %s201
    %s203 = sphi 0, %s201
    %s204 = sphi 0, %s203
    %s218 = sphi 0, %s204
    %s222 = sphi 0, %s222
    %s224 = sphi 0, %s222
    %s225 = sphi 0, %s224
    %s239 = sphi 0, %s225
    %s243 = sphi 0, %s243
    %s245 = sphi 0, %s243
    %s246 = sphi 0, %s245
    %s260 = sphi 0, %s246
    %s264 = sphi 0, %s264
    %s266 = sphi 0, %s264
    %s267 = sphi 0, %s266
    %s281 = sphi 0, %s267
    %s289 = sphi 0, %s291
    %s292 = sphi 0, %s289
    %s293 = sphi 0, %s292
    %s309 = sphi 0, %s293
  $region4: #{tpu_custom_call.1} parent=0 // loop_header_branch
    %20 = sbr.rel (%p18) target = $region8
  $region5: #{tpu_custom_call.1} parent=0 // loop_body
    %s22 = ssub.s32 %s17, 1
    %s23 = ssub.s32 %s17, 2
    %s30 = sadd.s32 1, %s25
    %p31 = scmp.ge.s32.totalorder %s30, 2
    %s32 = scalar_select %p31, 0, %s30
    %s33 = sadd.s32 1, %s24
    %s34 = scalar_select %p31, %s33, %s24
    %p35 = scmp.ge.s32.totalorder %s34, 4
    %s36 = scalar_select %p35, 0, %s34
    %s37 = ssub.s32 %s25, %s32
    %s38 = ssub.s32 %s24, %s36
    %s39 = sor.u32 %s37, %s38
    %p40 = scmp.eq.s32.totalorder %s39, 0
    %s42 = sadd.s32 %s41, 1
    %s43 = scalar_select %p40, %s41, %s42
    %p46 = pneg %p40
    %p47 = scmp.eq.s32.totalorder %s17, 7
    %p48 = por %p46, %p47
    %p49 = scmp.ne.s32.totalorder %s41, %s44
    %p50 = scmp.eq.s32.totalorder %s17, 0
    %p51 = por %p49, %p50
    %p52 = scmp.ne.s32.totalorder %s41, %s44
    %p53 = scmp.eq.s32.totalorder %s22, 7
    %p54 = por %p52, %p53
    %p55 = scmp.ne.s32.totalorder %s44, %s45
    %p56 = scmp.eq.s32.totalorder %s22, 0
    %p57 = por %p55, %p56
    %p58 = scmp.ne.s32.totalorder %s44, %s45
    %p59 = scmp.eq.s32.totalorder %s23, 7
    %p60 = por %p58, %p59
    %p62 = scmp.ne.s32.totalorder %s45, %s61
    %p63 = scmp.eq.s32.totalorder %s23, 0
    %p64 = por %p62, %p63
    %s65 = ssub.s32 %s24, %s36
    %p66 = scmp.eq.s32.totalorder %s65, 0
    %s68 = sadd.s32 %s67, 1
    %s69 = scalar_select %p66, %s67, %s68
    %p72 = pneg %p66
    %p73 = scmp.eq.s32.totalorder %s17, 7
    %p74 = por %p72, %p73
    %p75 = scmp.ne.s32.totalorder %s67, %s70
    %p76 = scmp.eq.s32.totalorder %s17, 0
    %p77 = por %p75, %p76
    %p78 = scmp.ne.s32.totalorder %s67, %s70
    %p79 = scmp.eq.s32.totalorder %s22, 7
    %p80 = por %p78, %p79
    %p81 = scmp.ne.s32.totalorder %s70, %s71
    %p82 = scmp.eq.s32.totalorder %s22, 0
    %p83 = por %p81, %p82
    %p84 = scmp.ne.s32.totalorder %s70, %s71
    %p85 = scmp.eq.s32.totalorder %s23, 7
    %p86 = por %p84, %p85
    %p88 = scmp.ne.s32.totalorder %s71, %s87
    %p89 = scmp.eq.s32.totalorder %s23, 0
    %p90 = por %p88, %p89
    %s91 = ssub.s32 %s24, %s36
    %p92 = scmp.eq.s32.totalorder %s91, 0
    %s94 = sadd.s32 %s93, 1
    %s95 = scalar_select %p92, %s93, %s94
    %p98 = pneg %p92
    %p99 = scmp.eq.s32.totalorder %s17, 7
    %p100 = por %p98, %p99
    %p101 = scmp.ne.s32.totalorder %s93, %s96
    %p102 = scmp.eq.s32.totalorder %s17, 0
    %p103 = por %p101, %p102
    %p104 = scmp.ne.s32.totalorder %s93, %s96
    %p105 = scmp.eq.s32.totalorder %s22, 7
    %p106 = por %p104, %p105
    %p107 = scmp.ne.s32.totalorder %s96, %s97
    %p108 = scmp.eq.s32.totalorder %s22, 0
    %p109 = por %p107, %p108
    %p110 = scmp.ne.s32.totalorder %s96, %s97
    %p111 = scmp.eq.s32.totalorder %s23, 7
    %p112 = por %p110, %p111
    %p114 = scmp.ne.s32.totalorder %s97, %s113
    %p115 = scmp.eq.s32.totalorder %s23, 0
    %p116 = por %p114, %p115
    %s118 = sadd.s32 %s117, 1
    %p121 = scmp.eq.s32.totalorder %s17, 7
    %p122 = scmp.ne.s32.totalorder %s117, %s119
    %p123 = scmp.eq.s32.totalorder %s17, 0
    %p124 = por %p122, %p123
    %p125 = scmp.ne.s32.totalorder %s117, %s119
    %p126 = scmp.eq.s32.totalorder %s22, 7
    %p127 = por %p125, %p126
    %p128 = scmp.ne.s32.totalorder %s119, %s120
    %p129 = scmp.eq.s32.totalorder %s22, 0
    %p130 = por %p128, %p129
    %p131 = scmp.ne.s32.totalorder %s119, %s120
    %p132 = scmp.eq.s32.totalorder %s23, 7
    %p133 = por %p131, %p132
    %p135 = scmp.ne.s32.totalorder %s120, %s134
    %p136 = scmp.eq.s32.totalorder %s23, 0
    %p137 = por %p135, %p136
    %s139 = sadd.s32 %s138, 1
    %p142 = scmp.eq.s32.totalorder %s17, 7
    %p143 = scmp.ne.s32.totalorder %s138, %s140
    %p144 = scmp.eq.s32.totalorder %s17, 0
    %p145 = por %p143, %p144
    %p146 = scmp.ne.s32.totalorder %s138, %s140
    %p147 = scmp.eq.s32.totalorder %s22, 7
    %p148 = por %p146, %p147
    %p149 = scmp.ne.s32.totalorder %s140, %s141
    %p150 = scmp.eq.s32.totalorder %s22, 0
    %p151 = por %p149, %p150
    %p152 = scmp.ne.s32.totalorder %s140, %s141
    %p153 = scmp.eq.s32.totalorder %s23, 7
    %p154 = por %p152, %p153
    %p156 = scmp.ne.s32.totalorder %s141, %s155
    %p157 = scmp.eq.s32.totalorder %s23, 0
    %p158 = por %p156, %p157
    %s160 = sadd.s32 %s159, 1
    %p163 = scmp.eq.s32.totalorder %s17, 7
    %p164 = scmp.ne.s32.totalorder %s159, %s161
    %p165 = scmp.eq.s32.totalorder %s17, 0
    %p166 = por %p164, %p165
    %p167 = scmp.ne.s32.totalorder %s159, %s161
    %p168 = scmp.eq.s32.totalorder %s22, 7
    %p169 = por %p167, %p168
    %p170 = scmp.ne.s32.totalorder %s161, %s162
    %p171 = scmp.eq.s32.totalorder %s22, 0
    %p172 = por %p170, %p171
    %p173 = scmp.ne.s32.totalorder %s161, %s162
    %p174 = scmp.eq.s32.totalorder %s23, 7
    %p175 = por %p173, %p174
    %p177 = scmp.ne.s32.totalorder %s162, %s176
    %p178 = scmp.eq.s32.totalorder %s23, 0
    %p179 = por %p177, %p178
    %s181 = sadd.s32 %s180, 1
    %p184 = scmp.eq.s32.totalorder %s17, 7
    %p185 = scmp.ne.s32.totalorder %s180, %s182
    %p186 = scmp.eq.s32.totalorder %s17, 0
    %p187 = por %p185, %p186
    %p188 = scmp.ne.s32.totalorder %s180, %s182
    %p189 = scmp.eq.s32.totalorder %s22, 7
    %p190 = por %p188, %p189
    %p191 = scmp.ne.s32.totalorder %s182, %s183
    %p192 = scmp.eq.s32.totalorder %s22, 0
    %p193 = por %p191, %p192
    %p194 = scmp.ne.s32.totalorder %s182, %s183
    %p195 = scmp.eq.s32.totalorder %s23, 7
    %p196 = por %p194, %p195
    %p198 = scmp.ne.s32.totalorder %s183, %s197
    %p199 = scmp.eq.s32.totalorder %s23, 0
    %p200 = por %p198, %p199
    %s202 = sadd.s32 %s201, 1
    %p205 = scmp.eq.s32.totalorder %s17, 7
    %p206 = scmp.ne.s32.totalorder %s201, %s203
    %p207 = scmp.eq.s32.totalorder %s17, 0
    %p208 = por %p206, %p207
    %p209 = scmp.ne.s32.totalorder %s201, %s203
    %p210 = scmp.eq.s32.totalorder %s22, 7
    %p211 = por %p209, %p210
    %p212 = scmp.ne.s32.totalorder %s203, %s204
    %p213 = scmp.eq.s32.totalorder %s22, 0
    %p214 = por %p212, %p213
    %p215 = scmp.ne.s32.totalorder %s203, %s204
    %p216 = scmp.eq.s32.totalorder %s23, 7
    %p217 = por %p215, %p216
    %p219 = scmp.ne.s32.totalorder %s204, %s218
    %p220 = scmp.eq.s32.totalorder %s23, 0
    %p221 = por %p219, %p220
    %s223 = sadd.s32 %s222, 1
    %p226 = scmp.eq.s32.totalorder %s17, 7
    %p227 = scmp.ne.s32.totalorder %s222, %s224
    %p228 = scmp.eq.s32.totalorder %s17, 0
    %p229 = por %p227, %p228
    %p230 = scmp.ne.s32.totalorder %s222, %s224
    %p231 = scmp.eq.s32.totalorder %s22, 7
    %p232 = por %p230, %p231
    %p233 = scmp.ne.s32.totalorder %s224, %s225
    %p234 = scmp.eq.s32.totalorder %s22, 0
    %p235 = por %p233, %p234
    %p236 = scmp.ne.s32.totalorder %s224, %s225
    %p237 = scmp.eq.s32.totalorder %s23, 7
    %p238 = por %p236, %p237
    %p240 = scmp.ne.s32.totalorder %s225, %s239
    %p241 = scmp.eq.s32.totalorder %s23, 0
    %p242 = por %p240, %p241
    %s244 = sadd.s32 %s243, 1
    %p247 = scmp.eq.s32.totalorder %s17, 7
    %p248 = scmp.ne.s32.totalorder %s243, %s245
    %p249 = scmp.eq.s32.totalorder %s17, 0
    %p250 = por %p248, %p249
    %p251 = scmp.ne.s32.totalorder %s243, %s245
    %p252 = scmp.eq.s32.totalorder %s22, 7
    %p253 = por %p251, %p252
    %p254 = scmp.ne.s32.totalorder %s245, %s246
    %p255 = scmp.eq.s32.totalorder %s22, 0
    %p256 = por %p254, %p255
    %p257 = scmp.ne.s32.totalorder %s245, %s246
    %p258 = scmp.eq.s32.totalorder %s23, 7
    %p259 = por %p257, %p258
    %p261 = scmp.ne.s32.totalorder %s246, %s260
    %p262 = scmp.eq.s32.totalorder %s23, 0
    %p263 = por %p261, %p262
    %s265 = sadd.s32 %s264, 1
    %p268 = scmp.eq.s32.totalorder %s17, 7
    %p269 = scmp.ne.s32.totalorder %s264, %s266
    %p270 = scmp.eq.s32.totalorder %s17, 0
    %p271 = por %p269, %p270
    %p272 = scmp.ne.s32.totalorder %s264, %s266
    %p273 = scmp.eq.s32.totalorder %s22, 7
    %p274 = por %p272, %p273
    %p275 = scmp.ne.s32.totalorder %s266, %s267
    %p276 = scmp.eq.s32.totalorder %s22, 0
    %p277 = por %p275, %p276
    %p278 = scmp.ne.s32.totalorder %s266, %s267
    %p279 = scmp.eq.s32.totalorder %s23, 7
    %p280 = por %p278, %p279
    %p282 = scmp.ne.s32.totalorder %s267, %s281
    %p283 = scmp.eq.s32.totalorder %s23, 0
    %p284 = por %p282, %p283
    %s285 = ssub.s32 %s25, %s32
    %s286 = ssub.s32 %s24, %s36
    %s287 = sor.u32 %s285, %s286
    %p288 = scmp.eq.s32.totalorder %s287, 0
    %s290 = sadd.s32 %s289, 1
    %s291 = scalar_select %p288, %s289, %s290
    %p294 = pneg %p288
    %p295 = scmp.eq.s32.totalorder %s17, 7
    %p296 = por %p294, %p295
    %p297 = scmp.ne.s32.totalorder %s289, %s292
    %p298 = scmp.eq.s32.totalorder %s17, 0
    %p299 = por %p297, %p298
    %p300 = scmp.ne.s32.totalorder %s289, %s292
    %p301 = scmp.eq.s32.totalorder %s22, 7
    %p302 = por %p300, %p301
    %p303 = scmp.ne.s32.totalorder %s292, %s293
    %p304 = scmp.eq.s32.totalorder %s22, 0
    %p305 = por %p303, %p304
    %p306 = scmp.ne.s32.totalorder %s292, %s293
    %p307 = scmp.eq.s32.totalorder %s23, 7
    %p308 = por %p306, %p307
    %p310 = scmp.ne.s32.totalorder %s293, %s309
    %p311 = scmp.eq.s32.totalorder %s23, 0
    %p312 = por %p310, %p311
    %p313 = scmp.le.s32.totalorder 1, %s17
    %p314 = scmp.lt.s32.totalorder %s17, 9
    %p315 = pnand %p313, %p314
    %p316 = pneg %p315
    // Predicated region
    $region9: #{tpu_custom_call.1} parent=5 // pred_check
      _
    $region10: #{tpu_custom_call.1} parent=5 // pred_check_branch
      %318 = sbr.rel (%p315) target = $region12
    $region11: #{tpu_custom_call.1} parent=5 // pred_region
      %s319 = ssub.s32 %s17, 1
      // Predicated region
      $region13: #{tpu_custom_call.1} parent=11 // pred_check
        %p320 = pneg %p130
      $region14: #{tpu_custom_call.1} parent=11 // pred_check_branch
        %322 = sbr.rel (%p320) target = $region16
      $region15: #{tpu_custom_call.1} parent=11 // pred_region
        _
      $region16: #{tpu_custom_call.1} parent=11 // pred_fallthru
        _
      // Predicated region
      $region17: #{tpu_custom_call.1} parent=11 // pred_check
        %p323 = pneg %p151
      $region18: #{tpu_custom_call.1} parent=11 // pred_check_branch
        %325 = sbr.rel (%p323) target = $region20
      $region19: #{tpu_custom_call.1} parent=11 // pred_region
        _
      $region20: #{tpu_custom_call.1} parent=11 // pred_fallthru
        _
      // Predicated region
      $region21: #{tpu_custom_call.1} parent=11 // pred_check
        %p326 = pneg %p172
      $region22: #{tpu_custom_call.1} parent=11 // pred_check_branch
        %328 = sbr.rel (%p326) target = $region24
      $region23: #{tpu_custom_call.1} parent=11 // pred_region
        _
      $region24: #{tpu_custom_call.1} parent=11 // pred_fallthru
        _
      // Predicated region
      $region25: #{tpu_custom_call.1} parent=11 // pred_check
        %p329 = pneg %p193
      $region26: #{tpu_custom_call.1} parent=11 // pred_check_branch
        %331 = sbr.rel (%p329) target = $region28
      $region27: #{tpu_custom_call.1} parent=11 // pred_region
        _
      $region28: #{tpu_custom_call.1} parent=11 // pred_fallthru
        _
      // Predicated region
      $region29: #{tpu_custom_call.1} parent=11 // pred_check
        %p332 = pneg %p214
      $region30: #{tpu_custom_call.1} parent=11 // pred_check_branch
        %334 = sbr.rel (%p332) target = $region32
      $region31: #{tpu_custom_call.1} parent=11 // pred_region
        _
      $region32: #{tpu_custom_call.1} parent=11 // pred_fallthru
        _
      // Predicated region
      $region33: #{tpu_custom_call.1} parent=11 // pred_check
        %p335 = pneg %p235
      $region34: #{tpu_custom_call.1} parent=11 // pred_check_branch
        %337 = sbr.rel (%p335) target = $region36
      $region35: #{tpu_custom_call.1} parent=11 // pred_region
        _
      $region36: #{tpu_custom_call.1} parent=11 // pred_fallthru
        _
      // Predicated region
      $region37: #{tpu_custom_call.1} parent=11 // pred_check
        %p338 = pneg %p256
      $region38: #{tpu_custom_call.1} parent=11 // pred_check_branch
        %340 = sbr.rel (%p338) target = $region40
      $region39: #{tpu_custom_call.1} parent=11 // pred_region
        _
      $region40: #{tpu_custom_call.1} parent=11 // pred_fallthru
        _
      // Predicated region
      $region41: #{tpu_custom_call.1} parent=11 // pred_check
        %p341 = pneg %p277
      $region42: #{tpu_custom_call.1} parent=11 // pred_check_branch
        %343 = sbr.rel (%p341) target = $region44
      $region43: #{tpu_custom_call.1} parent=11 // pred_region
        _
      $region44: #{tpu_custom_call.1} parent=11 // pred_fallthru
        _
    $region12: #{tpu_custom_call.1} parent=5 // pred_fallthru
      _
    %p344 = scmp.lt.s32.totalorder %s17, 8
    // Predicated region
    $region45: #{tpu_custom_call.1} parent=5 // pred_check
      %p345 = pneg %p344
    $region46: #{tpu_custom_call.1} parent=5 // pred_check_branch
      %347 = sbr.rel (%p345) target = $region48
    $region47: #{tpu_custom_call.1} parent=5 // pred_region
      // Predicated region
      $region49: #{tpu_custom_call.1} parent=47 // pred_check
        %p348 = pneg %p51
      $region50: #{tpu_custom_call.1} parent=47 // pred_check_branch
        %350 = sbr.rel (%p348) target = $region52
      $region51: #{tpu_custom_call.1} parent=47 // pred_region
        %s351 = smul.u32 8, %s24
        %p352 = scmp.lt.s32.totalorder %s25, 1
        %s353 = scalar_select %p352, %s25, 1
        %p354 = scmp.lt.s32.totalorder %s351, 31
        %s355 = scalar_select %p354, %s351, 31
        %s356 = smul.addr %s353, 32
        %s357 = sadd.s32 %s355, %s356
        %s358 = smul.addr %s357, 8
        %s359 = scalar_lea.vmem %s0, %s358
        %s360 = smul.u32 8, %s24
      $region52: #{tpu_custom_call.1} parent=47 // pred_fallthru
        _
      // Predicated region
      $region53: #{tpu_custom_call.1} parent=47 // pred_check
        %p361 = pneg %p77
      $region54: #{tpu_custom_call.1} parent=47 // pred_check_branch
        %363 = sbr.rel (%p361) target = $region56
      $region55: #{tpu_custom_call.1} parent=47 // pred_region
        %s364 = smul.u32 8, %s24
        %p365 = scmp.lt.s32.totalorder %s364, 31
        %s366 = scalar_select %p365, %s364, 31
        %s367 = smul.addr %s366, 8
        %s368 = scalar_lea.vmem %s1, %s367
        %s369 = smul.u32 8, %s24
      $region56: #{tpu_custom_call.1} parent=47 // pred_fallthru
        _
      // Predicated region
      $region57: #{tpu_custom_call.1} parent=47 // pred_check
        %p370 = pneg %p103
      $region58: #{tpu_custom_call.1} parent=47 // pred_check_branch
        %372 = sbr.rel (%p370) target = $region60
      $region59: #{tpu_custom_call.1} parent=47 // pred_region
        %s373 = smul.u32 8, %s24
        %p374 = scmp.lt.s32.totalorder %s373, 31
        %s375 = scalar_select %p374, %s373, 31
        %s376 = smul.addr %s375, 8
        %s377 = scalar_lea.vmem %s2, %s376
        %s378 = smul.u32 8, %s24
      $region60: #{tpu_custom_call.1} parent=47 // pred_fallthru
        _
    $region48: #{tpu_custom_call.1} parent=5 // pred_fallthru
      _
    %p379 = scmp.le.s32.totalorder 1, %s17
    %p380 = scmp.lt.s32.totalorder %s17, 9
    %p381 = pnand %p379, %p380
    %p382 = pneg %p381
    // Predicated region
    $region61: #{tpu_custom_call.1} parent=5 // pred_check
      _
    $region62: #{tpu_custom_call.1} parent=5 // pred_check_branch
      %384 = sbr.rel (%p381) target = $region64
    $region63: #{tpu_custom_call.1} parent=5 // pred_region
      %s385 = ssub.s32 %s17, 1
      %s386 = smul.u32 8, %s26
      %p387 = scmp.lt.s32.totalorder %s27, 1
      %s388 = scalar_select %p387, %s27, 1
      %p389 = scmp.lt.s32.totalorder %s386, 31
      %s390 = scalar_select %p389, %s386, 31
      %s391 = smul.addr %s388, 32
      %s392 = sadd.s32 %s390, %s391
      %s393 = smul.addr %s392, 8
      %s394 = scalar_lea.vmem %s0, %s393
      %p395 = pneg %p57
      %p396 = pneg %p54
      %s397 = smul.u32 8, %s26
      %p398 = scmp.lt.s32.totalorder %s397, 31
      %s399 = scalar_select %p398, %s397, 31
      %s400 = smul.addr %s399, 8
      %s401 = scalar_lea.vmem %s1, %s400
      %p402 = pneg %p83
      %p403 = pneg %p80
      %s404 = smul.u32 8, %s26
      %p405 = scmp.lt.s32.totalorder %s404, 31
      %s406 = scalar_select %p405, %s404, 31
      %s407 = smul.addr %s406, 8
      %s408 = scalar_lea.vmem %s2, %s407
      %p409 = pneg %p109
      %p410 = pneg %p106
      %p411 = pneg %p130
      %p412 = pneg %p127
      %p413 = pneg %p151
      %p414 = pneg %p148
      %p415 = pneg %p172
      %p416 = pneg %p169
      %p417 = pneg %p193
      %p418 = pneg %p190
      %p419 = pneg %p214
      %p420 = pneg %p211
      %p421 = pneg %p235
      %p422 = pneg %p232
      %p423 = pneg %p256
      %p424 = pneg %p253
      %p425 = pneg %p277
      %p426 = pneg %p274
      %p427 = pneg %p305
      %p428 = pneg %p302
      %s429 = smul.u32 8, %s26
      %p430 = scmp.lt.s32.totalorder %s27, 1
      %s431 = scalar_select %p430, %s27, 1
      %p432 = scmp.lt.s32.totalorder %s429, 31
      %s433 = scalar_select %p432, %s429, 31
      %s434 = smul.addr %s431, 32
      %s435 = sadd.s32 %s433, %s434
      %s436 = smul.addr %s435, 8
      %s437 = scalar_lea.vmem %s11, %s436
      %s438 = smul.u32 8, %s26
      %p439 = scmp.lt.s32.totalorder %s27, 1
      %s440 = scalar_select %p439, %s27, 1
      %p441 = scmp.lt.s32.totalorder %s438, 31
      %s442 = scalar_select %p441, %s438, 31
      %s443 = smul.addr %s440, 32
      %s444 = sadd.s32 %s442, %s443
      %s445 = smul.addr %s444, 8
      %s446 = scalar_lea.vmem %s0, %s445
      %s447 = smul.u32 8, %s26
      %s448 = smul.u32 8, %s26
      %p449 = scmp.lt.s32.totalorder %s448, 31
      %s450 = scalar_select %p449, %s448, 31
      %s451 = smul.addr %s450, 8
      %s452 = scalar_lea.vmem %s1, %s451
      %s453 = smul.u32 8, %s26
      %s454 = smul.u32 8, %s26
      %p455 = scmp.lt.s32.totalorder %s454, 31
      %s456 = scalar_select %p455, %s454, 31
      %s457 = smul.addr %s456, 8
      %s458 = scalar_lea.vmem %s2, %s457
      %s459 = smul.u32 8, %s26
      %s460 = smul.u32 8, %s26
      %p461 = scmp.lt.s32.totalorder %s27, 1
      %s462 = scalar_select %p461, %s27, 1
      %p463 = scmp.lt.s32.totalorder %s460, 31
      %s464 = scalar_select %p463, %s460, 31
      %s465 = smul.addr %s462, 32
      %s466 = sadd.s32 %s464, %s465
      %s467 = smul.addr %s466, 8
      %s468 = scalar_lea.vmem %s11, %s467
      %s469 = smul.u32 8, %s26
      %v470 = vld [vmem:[%s446] sm:$0xff]
      %v471 = vld [vmem:[%s446 + $0x8] sm:$0xff]
      %v472 = vld [vmem:[%s446 + $0x10] sm:$0xff]
      %v473 = vld [vmem:[%s446 + $0x18] sm:$0xff]
      %v474 = vld [vmem:[%s446 + $0x20] sm:$0xff]
      %v475 = vld [vmem:[%s446 + $0x28] sm:$0xff]
      %v476 = vld [vmem:[%s446 + $0x30] sm:$0xff]
      %v477 = vld [vmem:[%s446 + $0x38] sm:$0xff]
      %v478 = vld [vmem:[%s452] sm:$0xff]
      %v479 = vld [vmem:[%s452 + $0x8] sm:$0xff]
      %v480 = vld [vmem:[%s452 + $0x10] sm:$0xff]
      %v481 = vld [vmem:[%s452 + $0x18] sm:$0xff]
      %v482 = vld [vmem:[%s452 + $0x20] sm:$0xff]
      %v483 = vld [vmem:[%s452 + $0x28] sm:$0xff]
      %v484 = vld [vmem:[%s452 + $0x30] sm:$0xff]
      %v485 = vld [vmem:[%s452 + $0x38] sm:$0xff]
      %v486 = vadd.f32 %v470, %v478
      %v487 = vadd.f32 %v471, %v479
      %v488 = vadd.f32 %v472, %v480
      %v489 = vadd.f32 %v473, %v481
      %v490 = vadd.f32 %v474, %v482
      %v491 = vadd.f32 %v475, %v483
      %v492 = vadd.f32 %v476, %v484
      %v493 = vadd.f32 %v477, %v485
      %v494 = vld [vmem:[%s4] sm:$0x1f]
      %v495 = vld [vmem:[%s5] sm:$0x1]
      %v497 = vlaneseq
      %v498 = vshrl.u32 %v497, 7
      %v499 = vsub.s32 0, %v498
      %v500 = vrot.slane %v495, %v499
      %vm502 = vcmask 39936
      %v504 = vsel %vm502, %v486, 0
      %v507 = vsel %vm502, %v487, 0
      %v510 = vsel %vm502, %v488, 0
      %v513 = vsel %vm502, %v489, 0
      %v516 = vsel %vm502, %v490, 0
      %v519 = vsel %vm502, %v491, 0
      %v522 = vsel %vm502, %v492, 0
      %v525 = vsel %vm502, %v493, 0
      %vm527 = vcmask 1044480
      %v529 = vsel %vm527, %v494, 0
      %531 = vmatprep.subr.mxu0 0.0
      %532 = vmatpush1.msra.mxu0 %v529
      %533 = vmatprep.subr.mxu0 0.0
      %534 = vmatpush1.msra.mxu0 0.0
      %535 = vmatprep.subr.mxu0 0.0
      %536 = vmatpush1.msra.mxu0 0.0
      %537 = vmatprep.subr.mxu0 0.0
      %538 = vmatpush1.msra.mxu0 0.0
      %539 = vmatprep.subr.mxu0 0.0
      %540 = vmatpush1.msra.mxu0 0.0
      %541 = vmatprep.subr.mxu0 0.0
      %542 = vmatpush1.msra.mxu0 0.0
      %543 = vmatprep.subr.mxu0 0.0
      %544 = vmatpush1.msra.mxu0 0.0
      %545 = vmatprep.subr.mxu0 0.0
      %546 = vmatpush1.msra.mxu0 0.0
      %547 = vmatprep.subr.mxu0 0.0
      %548 = vmatpush1.msra.mxu0 0.0
      %549 = vmatprep.subr.mxu0 0.0
      %550 = vmatpush1.msra.mxu0 0.0
      %551 = vmatprep.subr.mxu0 0.0
      %552 = vmatpush1.msra.mxu0 0.0
      %553 = vmatprep.subr.mxu0 0.0
      %554 = vmatpush1.msra.mxu0 0.0
      %555 = vmatprep.subr.mxu0 0.0
      %556 = vmatpush1.msra.mxu0 0.0
      %557 = vmatprep.subr.mxu0 0.0
      %558 = vmatpush1.msra.mxu0 0.0
      %559 = vmatprep.subr.mxu0 0.0
      %560 = vmatpush1.msra.mxu0 0.0
      %561 = vmatprep.subr.mxu0 0.0
      %562 = vmatpush1.msra.mxu0 0.0
      %563 = vmatprep.subr.mxu0 0.0
      %564 = vmatpush1.msra.mxu0 0.0
      %565 = vmatprep.subr.mxu0 0.0
      %566 = vmatpush1.msra.mxu0 0.0
      %567 = vmatprep.subr.mxu0 0.0
      %568 = vmatpush1.msra.mxu0 0.0
      %569 = vmatprep.subr.mxu0 0.0
      %570 = vmatpush1.msra.mxu0 0.0
      %571 = vmatprep.subr.mxu0 0.0
      %572 = vmatpush1.msra.mxu0 0.0
      %573 = vmatprep.subr.mxu0 0.0
      %574 = vmatpush1.msra.mxu0 0.0
      %575 = vmatprep.subr.mxu0 0.0
      %576 = vmatpush1.msra.mxu0 0.0
      %577 = vmatprep.subr.mxu0 0.0
      %578 = vmatpush1.msra.mxu0 0.0
      %579 = vmatprep.subr.mxu0 0.0
      %580 = vmatpush1.msra.mxu0 0.0
      %581 = vmatprep.subr.mxu0 0.0
      %582 = vmatpush1.msra.mxu0 0.0
      %583 = vmatprep.subr.mxu0 0.0
      %584 = vmatpush1.msra.mxu0 0.0
      %585 = vmatprep.subr.mxu0 0.0
      %586 = vmatpush1.msra.mxu0 0.0
      %587 = vmatprep.subr.mxu0 0.0
      %588 = vmatpush1.msra.mxu0 0.0
      %589 = vmatprep.subr.mxu0 0.0
      %590 = vmatpush1.msra.mxu0 0.0
      %591 = vmatprep.subr.mxu0 0.0
      %592 = vmatpush1.msra.mxu0 0.0
      %593 = vmatprep.subr.mxu0 0.0
      %594 = vmatpush1.msra.mxu0 0.0
      %595 = vmatprep.mubr.f32.mxu0 0.0
      %596 = vmatmul.mubr.f32.gmra.mrb[0].mxu0 %v504
      %v597 = vpop.f32.mrb[0].mxu0
      %v598 = vadd.f32 %v500, %v597
      %v599 = vpop.f32.mrb[0].mxu0
      %600 = vmatprep.mubr.f32.mxu0 0.0
      %601 = vmatmul.mubr.f32.gmra.mrb[0].mxu0 %v507
      %v602 = vpop.f32.mrb[0].mxu0
      %v603 = vadd.f32 %v500, %v602
      %v604 = vpop.f32.mrb[0].mxu0
      %605 = vmatprep.mubr.f32.mxu0 0.0
      %606 = vmatmul.mubr.f32.gmra.mrb[0].mxu0 %v510
      %v607 = vpop.f32.mrb[0].mxu0
      %v608 = vadd.f32 %v500, %v607
      %v609 = vpop.f32.mrb[0].mxu0
      %610 = vmatprep.mubr.f32.mxu0 0.0
      %611 = vmatmul.mubr.f32.gmra.mrb[0].mxu0 %v513
      %v612 = vpop.f32.mrb[0].mxu0
      %v613 = vadd.f32 %v500, %v612
      %v614 = vpop.f32.mrb[0].mxu0
      %615 = vmatprep.mubr.f32.mxu0 0.0
      %616 = vmatmul.mubr.f32.gmra.mrb[0].mxu0 %v516
      %v617 = vpop.f32.mrb[0].mxu0
      %v618 = vadd.f32 %v500, %v617
      %v619 = vpop.f32.mrb[0].mxu0
      %620 = vmatprep.mubr.f32.mxu0 0.0
      %621 = vmatmul.mubr.f32.gmra.mrb[0].mxu0 %v519
      %v622 = vpop.f32.mrb[0].mxu0
      %v623 = vadd.f32 %v500, %v622
      %v624 = vpop.f32.mrb[0].mxu0
      %625 = vmatprep.mubr.f32.mxu0 0.0
      %626 = vmatmul.mubr.f32.gmra.mrb[0].mxu0 %v522
      %v627 = vpop.f32.mrb[0].mxu0
      %v628 = vadd.f32 %v500, %v627
      %v629 = vpop.f32.mrb[0].mxu0
      %630 = vmatprep.mubr.f32.mxu0 0.0
      %631 = vmatmul.mubr.f32.gmra.mrb[0].mxu0 %v525
      %v632 = vpop.f32.mrb[0].mxu0
      %v633 = vadd.f32 %v500, %v632
      %v634 = vpop.f32.mrb[0].mxu0
      %635 = vdwg.mxu0
      %v636 = vand.u32 2147483647, %v598
      %vm637 = vcmp.le.f32.partialorder %v636, 0.7853982
      %vm638 = vcmp.lt.s32.totalorder %v598, 0
      %v639 = vand.u32 %v598, 2139095040
      %v640 = vshrl.u32 %v639, 23
      %v641 = vsub.s32 %v640, 127
      %v642 = vand.u32 2147483647, %v598
      %v643 = vand.u32 %v642, 8388607
      %v644 = vor.u32 %v643, 8388608
      %v645 = vsub.s32 0, %v644
      %v646 = vadd.s32 %v641, 1
      %vm647 = vcmp.gt.s32.totalorder %v646, 0
      %v648 = vsel %vm647, %v646, 0
      %v649 = vshrl.u32 %v648, 5
      %v650 = vand.u32 %v648, 31
      %v651 = vsub.s32 32, %v650
      %v652 = vshrl.u32 683565275, %v651
      %v653 = vshll.u32 683565275, %v650
      %v654 = vshrl.u32 2475754826, %v651
      %v655 = vor.u32 %v653, %v654
      %v656 = vshll.u32 2475754826, %v650
      %v657 = vshrl.u32 2131351028, %v651
      %v658 = vor.u32 %v656, %v657
      %v659 = vshll.u32 2131351028, %v650
      %v660 = vshrl.u32 2102212464, %v651
      %v661 = vor.u32 %v659, %v660
      %v662 = vshll.u32 2102212464, %v650
      %v663 = vshrl.u32 920167782, %v651
      %v664 = vor.u32 %v662, %v663
      %v665 = vshll.u32 920167782, %v650
      %v666 = vshrl.u32 1326507024, %v651
      %v667 = vor.u32 %v665, %v666
      %vm668 = vcmp.lt.s32.totalorder %v649, 1
      %vm669 = vcmp.lt.s32.totalorder %v649, 2
      %vm670 = vcmp.lt.s32.totalorder %v649, 3
      %vm671 = vcmp.lt.s32.totalorder %v649, 4
      %v672 = vsel %vm668, %v652, %v655
      %v673 = vsel %vm671, %v661, 2102212464
      %v674 = vsel %vm670, %v658, %v673
      %v675 = vsel %vm669, %v672, %v674
      %v676 = vsel %vm668, %v655, %v658
      %v677 = vsel %vm671, %v664, 920167782
      %v678 = vsel %vm670, %v661, %v677
      %v679 = vsel %vm669, %v676, %v678
      %v680 = vsel %vm668, %v658, %v661
      %v681 = vsel %vm671, %v667, 1326507024
      %v682 = vsel %vm670, %v664, %v681
      %v683 = vsel %vm669, %v680, %v682
      %v684 = vshll.u32 %v644, 8
      %v685 = vmul.u32.u64.compose %v684, %v683
      %v686 = vextract.low.u32 %v685
      %v687 = vextract.high.u32 %v685
      %v688 = vmul.u32.u64.compose %v684, %v679
      %v689 = vextract.low.u32 %v688
      %v690 = vextract.high.u32 %v688
      %v691 = vmul.u32 %v684, %v675
      %v692 = vadd.s32 %v687, %v689
      %vm693 = vc.u32 %v687, %v689
      %v694 = vadd.s32 %v690, 1
      %v695 = vsel %vm693, %v694, %v690
      %v696 = vadd.s32 %v691, %v695
      %v697 = vadd.s32 %v696, 536870912
      %v698 = vshrl.u32 %v697, 30
      %v699 = vshll.u32 %v698, 30
      %v700 = vsub.s32 %v696, %v699
      %vm701 = vcmp.lt.s32.totalorder %v700, 0
      %v702 = vsub.s32 0, %v700
      %v703 = vsel %vm701, %v702, %v700
      %v704 = vclz %v703
      %v705 = vsub.s32 %v704, 2
      %vm706 = vcmp.gt.s32.totalorder 0, %v705
      %v707 = vsel %vm706, 0, %v705
      %v708 = vsub.s32 32, %v707
      %v709 = vshll.u32 %v700, %v707
      %v710 = vshrl.u32 %v692, %v708
      %v711 = vor.u32 %v709, %v710
      %v712 = vsub.s32 4294967266, %v707
      %v713 = vadd.s32 %v712, 127
      %v714 = vshll.u32 %v713, 23
      %v715 = vor.u32 4788187, %v714
      %v716 = vand.u32 2147483647, %v715
      %v718 = vcvt.s32.f32 %v711
      %v719 = vmul.f32 %v718, %v716
      %v720 = vxor.u32 %v719, 2147483648
      %v721 = vsel %vm638, %v720, %v719
      %v722 = vsub.s32 4, %v698
      %v723 = vsel %vm638, %v722, %v698
      %v724 = vsel %vm637, %v598, %v721
      %v725 = vsel %vm637, 0, %v723
      %v726 = vcosq.f32.pop %v724
      %v727 = vsinq.f32.pop %v724
      %vm728 = vweird.f32 %v598
      %v729 = vadd.s32 %v725, 3
      %v730 = vand.u32 %v729, 3
      %vm731 = vcmp.lt.s32.totalorder %v730, 2
      %vm732 = vcmp.eq.s32.totalorder %v730, 0
      %v733 = vxor.u32 %v727, 2147483648
      %v734 = vsel %vm732, %v726, %v733
      %vm735 = vcmp.eq.s32.totalorder %v730, 2
      %v736 = vxor.u32 %v726, 2147483648
      %v737 = vsel %vm735, %v736, %v727
      %v738 = vsel %vm731, %v734, %v737
      %v739 = vsel %vm728, nan, %v738
      %v740 = vand.u32 2147483647, %v603
      %vm741 = vcmp.le.f32.partialorder %v740, 0.7853982
      %vm742 = vcmp.lt.s32.totalorder %v603, 0
      %v743 = vand.u32 %v603, 2139095040
      %v744 = vshrl.u32 %v743, 23
      %v745 = vsub.s32 %v744, 127
      %v746 = vand.u32 2147483647, %v603
      %v747 = vand.u32 %v746, 8388607
      %v748 = vor.u32 %v747, 8388608
      %v749 = vsub.s32 0, %v748
      %v750 = vadd.s32 %v745, 1
      %vm751 = vcmp.gt.s32.totalorder %v750, 0
      %v752 = vsel %vm751, %v750, 0
      %v753 = vshrl.u32 %v752, 5
      %v754 = vand.u32 %v752, 31
      %v755 = vsub.s32 32, %v754
      %v756 = vshrl.u32 683565275, %v755
      %v757 = vshll.u32 683565275, %v754
      %v758 = vshrl.u32 2475754826, %v755
      %v759 = vor.u32 %v757, %v758
      %v760 = vshll.u32 2475754826, %v754
      %v761 = vshrl.u32 2131351028, %v755
      %v762 = vor.u32 %v760, %v761
      %v763 = vshll.u32 2131351028, %v754
      %v764 = vshrl.u32 2102212464, %v755
      %v765 = vor.u32 %v763, %v764
      %v766 = vshll.u32 2102212464, %v754
      %v767 = vshrl.u32 920167782, %v755
      %v768 = vor.u32 %v766, %v767
      %v769 = vshll.u32 920167782, %v754
      %v770 = vshrl.u32 1326507024, %v755
      %v771 = vor.u32 %v769, %v770
      %vm772 = vcmp.lt.s32.totalorder %v753, 1
      %vm773 = vcmp.lt.s32.totalorder %v753, 2
      %vm774 = vcmp.lt.s32.totalorder %v753, 3
      %vm775 = vcmp.lt.s32.totalorder %v753, 4
      %v776 = vsel %vm772, %v756, %v759
      %v777 = vsel %vm775, %v765, 2102212464
      %v778 = vsel %vm774, %v762, %v777
      %v779 = vsel %vm773, %v776, %v778
      %v780 = vsel %vm772, %v759, %v762
      %v781 = vsel %vm775, %v768, 920167782
      %v782 = vsel %vm774, %v765, %v781
      %v783 = vsel %vm773, %v780, %v782
      %v784 = vsel %vm772, %v762, %v765
      %v785 = vsel %vm775, %v771, 1326507024
      %v786 = vsel %vm774, %v768, %v785
      %v787 = vsel %vm773, %v784, %v786
      %v788 = vshll.u32 %v748, 8
      %v789 = vmul.u32.u64.compose %v788, %v787
      %v790 = vextract.low.u32 %v789
      %v791 = vextract.high.u32 %v789
      %v792 = vmul.u32.u64.compose %v788, %v783
      %v793 = vextract.low.u32 %v792
      %v794 = vextract.high.u32 %v792
      %v795 = vmul.u32 %v788, %v779
      %v796 = vadd.s32 %v791, %v793
      %vm797 = vc.u32 %v791, %v793
      %v798 = vadd.s32 %v794, 1
      %v799 = vsel %vm797, %v798, %v794
      %v800 = vadd.s32 %v795, %v799
      %v801 = vadd.s32 %v800, 536870912
      %v802 = vshrl.u32 %v801, 30
      %v803 = vshll.u32 %v802, 30
      %v804 = vsub.s32 %v800, %v803
      %vm805 = vcmp.lt.s32.totalorder %v804, 0
      %v806 = vsub.s32 0, %v804
      %v807 = vsel %vm805, %v806, %v804
      %v808 = vclz %v807
      %v809 = vsub.s32 %v808, 2
      %vm810 = vcmp.gt.s32.totalorder 0, %v809
      %v811 = vsel %vm810, 0, %v809
      %v812 = vsub.s32 32, %v811
      %v813 = vshll.u32 %v804, %v811
      %v814 = vshrl.u32 %v796, %v812
      %v815 = vor.u32 %v813, %v814
      %v816 = vsub.s32 4294967266, %v811
      %v817 = vadd.s32 %v816, 127
      %v818 = vshll.u32 %v817, 23
      %v819 = vor.u32 4788187, %v818
      %v820 = vand.u32 2147483647, %v819
      %v822 = vcvt.s32.f32 %v815
      %v823 = vmul.f32 %v822, %v820
      %v824 = vxor.u32 %v823, 2147483648
      %v825 = vsel %vm742, %v824, %v823
      %v826 = vsub.s32 4, %v802
      %v827 = vsel %vm742, %v826, %v802
      %v828 = vsel %vm741, %v603, %v825
      %v829 = vsel %vm741, 0, %v827
      %v830 = vcosq.f32.pop %v828
      %v831 = vsinq.f32.pop %v828
      %vm832 = vweird.f32 %v603
      %v833 = vadd.s32 %v829, 3
      %v834 = vand.u32 %v833, 3
      %vm835 = vcmp.lt.s32.totalorder %v834, 2
      %vm836 = vcmp.eq.s32.totalorder %v834, 0
      %v837 = vxor.u32 %v831, 2147483648
      %v838 = vsel %vm836, %v830, %v837
      %vm839 = vcmp.eq.s32.totalorder %v834, 2
      %v840 = vxor.u32 %v830, 2147483648
      %v841 = vsel %vm839, %v840, %v831
      %v842 = vsel %vm835, %v838, %v841
      %v843 = vsel %vm832, nan, %v842
      %v844 = vand.u32 2147483647, %v608
      %vm845 = vcmp.le.f32.partialorder %v844, 0.7853982
      %vm846 = vcmp.lt.s32.totalorder %v608, 0
      %v847 = vand.u32 %v608, 2139095040
      %v848 = vshrl.u32 %v847, 23
      %v849 = vsub.s32 %v848, 127
      %v850 = vand.u32 2147483647, %v608
      %v851 = vand.u32 %v850, 8388607
      %v852 = vor.u32 %v851, 8388608
      %v853 = vsub.s32 0, %v852
      %v854 = vadd.s32 %v849, 1
      %vm855 = vcmp.gt.s32.totalorder %v854, 0
      %v856 = vsel %vm855, %v854, 0
      %v857 = vshrl.u32 %v856, 5
      %v858 = vand.u32 %v856, 31
      %v859 = vsub.s32 32, %v858
      %v860 = vshrl.u32 683565275, %v859
      %v861 = vshll.u32 683565275, %v858
      %v862 = vshrl.u32 2475754826, %v859
      %v863 = vor.u32 %v861, %v862
      %v864 = vshll.u32 2475754826, %v858
      %v865 = vshrl.u32 2131351028, %v859
      %v866 = vor.u32 %v864, %v865
      %v867 = vshll.u32 2131351028, %v858
      %v868 = vshrl.u32 2102212464, %v859
      %v869 = vor.u32 %v867, %v868
      %v870 = vshll.u32 2102212464, %v858
      %v871 = vshrl.u32 920167782, %v859
      %v872 = vor.u32 %v870, %v871
      %v873 = vshll.u32 920167782, %v858
      %v874 = vshrl.u32 1326507024, %v859
      %v875 = vor.u32 %v873, %v874
      %vm876 = vcmp.lt.s32.totalorder %v857, 1
      %vm877 = vcmp.lt.s32.totalorder %v857, 2
      %vm878 = vcmp.lt.s32.totalorder %v857, 3
      %vm879 = vcmp.lt.s32.totalorder %v857, 4
      %v880 = vsel %vm876, %v860, %v863
      %v881 = vsel %vm879, %v869, 2102212464
      %v882 = vsel %vm878, %v866, %v881
      %v883 = vsel %vm877, %v880, %v882
      %v884 = vsel %vm876, %v863, %v866
      %v885 = vsel %vm879, %v872, 920167782
      %v886 = vsel %vm878, %v869, %v885
      %v887 = vsel %vm877, %v884, %v886
      %v888 = vsel %vm876, %v866, %v869
      %v889 = vsel %vm879, %v875, 1326507024
      %v890 = vsel %vm878, %v872, %v889
      %v891 = vsel %vm877, %v888, %v890
      %v892 = vshll.u32 %v852, 8
      %v893 = vmul.u32.u64.compose %v892, %v891
      %v894 = vextract.low.u32 %v893
      %v895 = vextract.high.u32 %v893
      %v896 = vmul.u32.u64.compose %v892, %v887
      %v897 = vextract.low.u32 %v896
      %v898 = vextract.high.u32 %v896
      %v899 = vmul.u32 %v892, %v883
      %v900 = vadd.s32 %v895, %v897
      %vm901 = vc.u32 %v895, %v897
      %v902 = vadd.s32 %v898, 1
      %v903 = vsel %vm901, %v902, %v898
      %v904 = vadd.s32 %v899, %v903
      %v905 = vadd.s32 %v904, 536870912
      %v906 = vshrl.u32 %v905, 30
      %v907 = vshll.u32 %v906, 30
      %v908 = vsub.s32 %v904, %v907
      %vm909 = vcmp.lt.s32.totalorder %v908, 0
      %v910 = vsub.s32 0, %v908
      %v911 = vsel %vm909, %v910, %v908
      %v912 = vclz %v911
      %v913 = vsub.s32 %v912, 2
      %vm914 = vcmp.gt.s32.totalorder 0, %v913
      %v915 = vsel %vm914, 0, %v913
      %v916 = vsub.s32 32, %v915
      %v917 = vshll.u32 %v908, %v915
      %v918 = vshrl.u32 %v900, %v916
      %v919 = vor.u32 %v917, %v918
      %v920 = vsub.s32 4294967266, %v915
      %v921 = vadd.s32 %v920, 127
      %v922 = vshll.u32 %v921, 23
      %v923 = vor.u32 4788187, %v922
      %v924 = vand.u32 2147483647, %v923
      %v926 = vcvt.s32.f32 %v919
      %v927 = vmul.f32 %v926, %v924
      %v928 = vxor.u32 %v927, 2147483648
      %v929 = vsel %vm846, %v928, %v927
      %v930 = vsub.s32 4, %v906
      %v931 = vsel %vm846, %v930, %v906
      %v932 = vsel %vm845, %v608, %v929
      %v933 = vsel %vm845, 0, %v931
      %v934 = vcosq.f32.pop %v932
      %v935 = vsinq.f32.pop %v932
      %vm936 = vweird.f32 %v608
      %v937 = vadd.s32 %v933, 3
      %v938 = vand.u32 %v937, 3
      %vm939 = vcmp.lt.s32.totalorder %v938, 2
      %vm940 = vcmp.eq.s32.totalorder %v938, 0
      %v941 = vxor.u32 %v935, 2147483648
      %v942 = vsel %vm940, %v934, %v941
      %vm943 = vcmp.eq.s32.totalorder %v938, 2
      %v944 = vxor.u32 %v934, 2147483648
      %v945 = vsel %vm943, %v944, %v935
      %v946 = vsel %vm939, %v942, %v945
      %v947 = vsel %vm936, nan, %v946
      %v948 = vand.u32 2147483647, %v613
      %vm949 = vcmp.le.f32.partialorder %v948, 0.7853982
      %vm950 = vcmp.lt.s32.totalorder %v613, 0
      %v951 = vand.u32 %v613, 2139095040
      %v952 = vshrl.u32 %v951, 23
      %v953 = vsub.s32 %v952, 127
      %v954 = vand.u32 2147483647, %v613
      %v955 = vand.u32 %v954, 8388607
      %v956 = vor.u32 %v955, 8388608
      %v957 = vsub.s32 0, %v956
      %v958 = vadd.s32 %v953, 1
      %vm959 = vcmp.gt.s32.totalorder %v958, 0
      %v960 = vsel %vm959, %v958, 0
      %v961 = vshrl.u32 %v960, 5
      %v962 = vand.u32 %v960, 31
      %v963 = vsub.s32 32, %v962
      %v964 = vshrl.u32 683565275, %v963
      %v965 = vshll.u32 683565275, %v962
      %v966 = vshrl.u32 2475754826, %v963
      %v967 = vor.u32 %v965, %v966
      %v968 = vshll.u32 2475754826, %v962
      %v969 = vshrl.u32 2131351028, %v963
      %v970 = vor.u32 %v968, %v969
      %v971 = vshll.u32 2131351028, %v962
      %v972 = vshrl.u32 2102212464, %v963
      %v973 = vor.u32 %v971, %v972
      %v974 = vshll.u32 2102212464, %v962
      %v975 = vshrl.u32 920167782, %v963
      %v976 = vor.u32 %v974, %v975
      %v977 = vshll.u32 920167782, %v962
      %v978 = vshrl.u32 1326507024, %v963
      %v979 = vor.u32 %v977, %v978
      %vm980 = vcmp.lt.s32.totalorder %v961, 1
      %vm981 = vcmp.lt.s32.totalorder %v961, 2
      %vm982 = vcmp.lt.s32.totalorder %v961, 3
      %vm983 = vcmp.lt.s32.totalorder %v961, 4
      %v984 = vsel %vm980, %v964, %v967
      %v985 = vsel %vm983, %v973, 2102212464
      %v986 = vsel %vm982, %v970, %v985
      %v987 = vsel %vm981, %v984, %v986
      %v988 = vsel %vm980, %v967, %v970
      %v989 = vsel %vm983, %v976, 920167782
      %v990 = vsel %vm982, %v973, %v989
      %v991 = vsel %vm981, %v988, %v990
      %v992 = vsel %vm980, %v970, %v973
      %v993 = vsel %vm983, %v979, 1326507024
      %v994 = vsel %vm982, %v976, %v993
      %v995 = vsel %vm981, %v992, %v994
      %v996 = vshll.u32 %v956, 8
      %v997 = vmul.u32.u64.compose %v996, %v995
      %v998 = vextract.low.u32 %v997
      %v999 = vextract.high.u32 %v997
      %v1000 = vmul.u32.u64.compose %v996, %v991
      %v1001 = vextract.low.u32 %v1000
      %v1002 = vextract.high.u32 %v1000
      %v1003 = vmul.u32 %v996, %v987
      %v1004 = vadd.s32 %v999, %v1001
      %vm1005 = vc.u32 %v999, %v1001
      %v1006 = vadd.s32 %v1002, 1
      %v1007 = vsel %vm1005, %v1006, %v1002
      %v1008 = vadd.s32 %v1003, %v1007
      %v1009 = vadd.s32 %v1008, 536870912
      %v1010 = vshrl.u32 %v1009, 30
      %v1011 = vshll.u32 %v1010, 30
      %v1012 = vsub.s32 %v1008, %v1011
      %vm1013 = vcmp.lt.s32.totalorder %v1012, 0
      %v1014 = vsub.s32 0, %v1012
      %v1015 = vsel %vm1013, %v1014, %v1012
      %v1016 = vclz %v1015
      %v1017 = vsub.s32 %v1016, 2
      %vm1018 = vcmp.gt.s32.totalorder 0, %v1017
      %v1019 = vsel %vm1018, 0, %v1017
      %v1020 = vsub.s32 32, %v1019
      %v1021 = vshll.u32 %v1012, %v1019
      %v1022 = vshrl.u32 %v1004, %v1020
      %v1023 = vor.u32 %v1021, %v1022
      %v1024 = vsub.s32 4294967266, %v1019
      %v1025 = vadd.s32 %v1024, 127
      %v1026 = vshll.u32 %v1025, 23
      %v1027 = vor.u32 4788187, %v1026
      %v1028 = vand.u32 2147483647, %v1027
      %v1030 = vcvt.s32.f32 %v1023
      %v1031 = vmul.f32 %v1030, %v1028
      %v1032 = vxor.u32 %v1031, 2147483648
      %v1033 = vsel %vm950, %v1032, %v1031
      %v1034 = vsub.s32 4, %v1010
      %v1035 = vsel %vm950, %v1034, %v1010
      %v1036 = vsel %vm949, %v613, %v1033
      %v1037 = vsel %vm949, 0, %v1035
      %v1038 = vcosq.f32.pop %v1036
      %v1039 = vsinq.f32.pop %v1036
      %vm1040 = vweird.f32 %v613
      %v1041 = vadd.s32 %v1037, 3
      %v1042 = vand.u32 %v1041, 3
      %vm1043 = vcmp.lt.s32.totalorder %v1042, 2
      %vm1044 = vcmp.eq.s32.totalorder %v1042, 0
      %v1045 = vxor.u32 %v1039, 2147483648
      %v1046 = vsel %vm1044, %v1038, %v1045
      %vm1047 = vcmp.eq.s32.totalorder %v1042, 2
      %v1048 = vxor.u32 %v1038, 2147483648
      %v1049 = vsel %vm1047, %v1048, %v1039
      %v1050 = vsel %vm1043, %v1046, %v1049
      %v1051 = vsel %vm1040, nan, %v1050
      %v1052 = vand.u32 2147483647, %v618
      %vm1053 = vcmp.le.f32.partialorder %v1052, 0.7853982
      %vm1054 = vcmp.lt.s32.totalorder %v618, 0
      %v1055 = vand.u32 %v618, 2139095040
      %v1056 = vshrl.u32 %v1055, 23
      %v1057 = vsub.s32 %v1056, 127
      %v1058 = vand.u32 2147483647, %v618
      %v1059 = vand.u32 %v1058, 8388607
      %v1060 = vor.u32 %v1059, 8388608
      %v1061 = vsub.s32 0, %v1060
      %v1062 = vadd.s32 %v1057, 1
      %vm1063 = vcmp.gt.s32.totalorder %v1062, 0
      %v1064 = vsel %vm1063, %v1062, 0
      %v1065 = vshrl.u32 %v1064, 5
      %v1066 = vand.u32 %v1064, 31
      %v1067 = vsub.s32 32, %v1066
      %v1068 = vshrl.u32 683565275, %v1067
      %v1069 = vshll.u32 683565275, %v1066
      %v1070 = vshrl.u32 2475754826, %v1067
      %v1071 = vor.u32 %v1069, %v1070
      %v1072 = vshll.u32 2475754826, %v1066
      %v1073 = vshrl.u32 2131351028, %v1067
      %v1074 = vor.u32 %v1072, %v1073
      %v1075 = vshll.u32 2131351028, %v1066
      %v1076 = vshrl.u32 2102212464, %v1067
      %v1077 = vor.u32 %v1075, %v1076
      %v1078 = vshll.u32 2102212464, %v1066
      %v1079 = vshrl.u32 920167782, %v1067
      %v1080 = vor.u32 %v1078, %v1079
      %v1081 = vshll.u32 920167782, %v1066
      %v1082 = vshrl.u32 1326507024, %v1067
      %v1083 = vor.u32 %v1081, %v1082
      %vm1084 = vcmp.lt.s32.totalorder %v1065, 1
      %vm1085 = vcmp.lt.s32.totalorder %v1065, 2
      %vm1086 = vcmp.lt.s32.totalorder %v1065, 3
      %vm1087 = vcmp.lt.s32.totalorder %v1065, 4
      %v1088 = vsel %vm1084, %v1068, %v1071
      %v1089 = vsel %vm1087, %v1077, 2102212464
      %v1090 = vsel %vm1086, %v1074, %v1089
      %v1091 = vsel %vm1085, %v1088, %v1090
      %v1092 = vsel %vm1084, %v1071, %v1074
      %v1093 = vsel %vm1087, %v1080, 920167782
      %v1094 = vsel %vm1086, %v1077, %v1093
      %v1095 = vsel %vm1085, %v1092, %v1094
      %v1096 = vsel %vm1084, %v1074, %v1077
      %v1097 = vsel %vm1087, %v1083, 1326507024
      %v1098 = vsel %vm1086, %v1080, %v1097
      %v1099 = vsel %vm1085, %v1096, %v1098
      %v1100 = vshll.u32 %v1060, 8
      %v1101 = vmul.u32.u64.compose %v1100, %v1099
      %v1102 = vextract.low.u32 %v1101
      %v1103 = vextract.high.u32 %v1101
      %v1104 = vmul.u32.u64.compose %v1100, %v1095
      %v1105 = vextract.low.u32 %v1104
      %v1106 = vextract.high.u32 %v1104
      %v1107 = vmul.u32 %v1100, %v1091
      %v1108 = vadd.s32 %v1103, %v1105
      %vm1109 = vc.u32 %v1103, %v1105
      %v1110 = vadd.s32 %v1106, 1
      %v1111 = vsel %vm1109, %v1110, %v1106
      %v1112 = vadd.s32 %v1107, %v1111
      %v1113 = vadd.s32 %v1112, 536870912
      %v1114 = vshrl.u32 %v1113, 30
      %v1115 = vshll.u32 %v1114, 30
      %v1116 = vsub.s32 %v1112, %v1115
      %vm1117 = vcmp.lt.s32.totalorder %v1116, 0
      %v1118 = vsub.s32 0, %v1116
      %v1119 = vsel %vm1117, %v1118, %v1116
      %v1120 = vclz %v1119
      %v1121 = vsub.s32 %v1120, 2
      %vm1122 = vcmp.gt.s32.totalorder 0, %v1121
      %v1123 = vsel %vm1122, 0, %v1121
      %v1124 = vsub.s32 32, %v1123
      %v1125 = vshll.u32 %v1116, %v1123
      %v1126 = vshrl.u32 %v1108, %v1124
      %v1127 = vor.u32 %v1125, %v1126
      %v1128 = vsub.s32 4294967266, %v1123
      %v1129 = vadd.s32 %v1128, 127
      %v1130 = vshll.u32 %v1129, 23
      %v1131 = vor.u32 4788187, %v1130
      %v1132 = vand.u32 2147483647, %v1131
      %v1134 = vcvt.s32.f32 %v1127
      %v1135 = vmul.f32 %v1134, %v1132
      %v1136 = vxor.u32 %v1135, 2147483648
      %v1137 = vsel %vm1054, %v1136, %v1135
      %v1138 = vsub.s32 4, %v1114
      %v1139 = vsel %vm1054, %v1138, %v1114
      %v1140 = vsel %vm1053, %v618, %v1137
      %v1141 = vsel %vm1053, 0, %v1139
      %v1142 = vcosq.f32.pop %v1140
      %v1143 = vsinq.f32.pop %v1140
      %vm1144 = vweird.f32 %v618
      %v1145 = vadd.s32 %v1141, 3
      %v1146 = vand.u32 %v1145, 3
      %vm1147 = vcmp.lt.s32.totalorder %v1146, 2
      %vm1148 = vcmp.eq.s32.totalorder %v1146, 0
      %v1149 = vxor.u32 %v1143, 2147483648
      %v1150 = vsel %vm1148, %v1142, %v1149
      %vm1151 = vcmp.eq.s32.totalorder %v1146, 2
      %v1152 = vxor.u32 %v1142, 2147483648
      %v1153 = vsel %vm1151, %v1152, %v1143
      %v1154 = vsel %vm1147, %v1150, %v1153
      %v1155 = vsel %vm1144, nan, %v1154
      %v1156 = vand.u32 2147483647, %v623
      %vm1157 = vcmp.le.f32.partialorder %v1156, 0.7853982
      %vm1158 = vcmp.lt.s32.totalorder %v623, 0
      %v1159 = vand.u32 %v623, 2139095040
      %v1160 = vshrl.u32 %v1159, 23
      %v1161 = vsub.s32 %v1160, 127
      %v1162 = vand.u32 2147483647, %v623
      %v1163 = vand.u32 %v1162, 8388607
      %v1164 = vor.u32 %v1163, 8388608
      %v1165 = vsub.s32 0, %v1164
      %v1166 = vadd.s32 %v1161, 1
      %vm1167 = vcmp.gt.s32.totalorder %v1166, 0
      %v1168 = vsel %vm1167, %v1166, 0
      %v1169 = vshrl.u32 %v1168, 5
      %v1170 = vand.u32 %v1168, 31
      %v1171 = vsub.s32 32, %v1170
      %v1172 = vshrl.u32 683565275, %v1171
      %v1173 = vshll.u32 683565275, %v1170
      %v1174 = vshrl.u32 2475754826, %v1171
      %v1175 = vor.u32 %v1173, %v1174
      %v1176 = vshll.u32 2475754826, %v1170
      %v1177 = vshrl.u32 2131351028, %v1171
      %v1178 = vor.u32 %v1176, %v1177
      %v1179 = vshll.u32 2131351028, %v1170
      %v1180 = vshrl.u32 2102212464, %v1171
      %v1181 = vor.u32 %v1179, %v1180
      %v1182 = vshll.u32 2102212464, %v1170
      %v1183 = vshrl.u32 920167782, %v1171
      %v1184 = vor.u32 %v1182, %v1183
      %v1185 = vshll.u32 920167782, %v1170
      %v1186 = vshrl.u32 1326507024, %v1171
      %v1187 = vor.u32 %v1185, %v1186
      %vm1188 = vcmp.lt.s32.totalorder %v1169, 1
      %vm1189 = vcmp.lt.s32.totalorder %v1169, 2
      %vm1190 = vcmp.lt.s32.totalorder %v1169, 3
      %vm1191 = vcmp.lt.s32.totalorder %v1169, 4
      %v1192 = vsel %vm1188, %v1172, %v1175
      %v1193 = vsel %vm1191, %v1181, 2102212464
      %v1194 = vsel %vm1190, %v1178, %v1193
      %v1195 = vsel %vm1189, %v1192, %v1194
      %v1196 = vsel %vm1188, %v1175, %v1178
      %v1197 = vsel %vm1191, %v1184, 920167782
      %v1198 = vsel %vm1190, %v1181, %v1197
      %v1199 = vsel %vm1189, %v1196, %v1198
      %v1200 = vsel %vm1188, %v1178, %v1181
      %v1201 = vsel %vm1191, %v1187, 1326507024
      %v1202 = vsel %vm1190, %v1184, %v1201
      %v1203 = vsel %vm1189, %v1200, %v1202
      %v1204 = vshll.u32 %v1164, 8
      %v1205 = vmul.u32.u64.compose %v1204, %v1203
      %v1206 = vextract.low.u32 %v1205
      %v1207 = vextract.high.u32 %v1205
      %v1208 = vmul.u32.u64.compose %v1204, %v1199
      %v1209 = vextract.low.u32 %v1208
      %v1210 = vextract.high.u32 %v1208
      %v1211 = vmul.u32 %v1204, %v1195
      %v1212 = vadd.s32 %v1207, %v1209
      %vm1213 = vc.u32 %v1207, %v1209
      %v1214 = vadd.s32 %v1210, 1
      %v1215 = vsel %vm1213, %v1214, %v1210
      %v1216 = vadd.s32 %v1211, %v1215
      %v1217 = vadd.s32 %v1216, 536870912
      %v1218 = vshrl.u32 %v1217, 30
      %v1219 = vshll.u32 %v1218, 30
      %v1220 = vsub.s32 %v1216, %v1219
      %vm1221 = vcmp.lt.s32.totalorder %v1220, 0
      %v1222 = vsub.s32 0, %v1220
      %v1223 = vsel %vm1221, %v1222, %v1220
      %v1224 = vclz %v1223
      %v1225 = vsub.s32 %v1224, 2
      %vm1226 = vcmp.gt.s32.totalorder 0, %v1225
      %v1227 = vsel %vm1226, 0, %v1225
      %v1228 = vsub.s32 32, %v1227
      %v1229 = vshll.u32 %v1220, %v1227
      %v1230 = vshrl.u32 %v1212, %v1228
      %v1231 = vor.u32 %v1229, %v1230
      %v1232 = vsub.s32 4294967266, %v1227
      %v1233 = vadd.s32 %v1232, 127
      %v1234 = vshll.u32 %v1233, 23
      %v1235 = vor.u32 4788187, %v1234
      %v1236 = vand.u32 2147483647, %v1235
      %v1238 = vcvt.s32.f32 %v1231
      %v1239 = vmul.f32 %v1238, %v1236
      %v1240 = vxor.u32 %v1239, 2147483648
      %v1241 = vsel %vm1158, %v1240, %v1239
      %v1242 = vsub.s32 4, %v1218
      %v1243 = vsel %vm1158, %v1242, %v1218
      %v1244 = vsel %vm1157, %v623, %v1241
      %v1245 = vsel %vm1157, 0, %v1243
      %v1246 = vcosq.f32.pop %v1244
      %v1247 = vsinq.f32.pop %v1244
      %vm1248 = vweird.f32 %v623
      %v1249 = vadd.s32 %v1245, 3
      %v1250 = vand.u32 %v1249, 3
      %vm1251 = vcmp.lt.s32.totalorder %v1250, 2
      %vm1252 = vcmp.eq.s32.totalorder %v1250, 0
      %v1253 = vxor.u32 %v1247, 2147483648
      %v1254 = vsel %vm1252, %v1246, %v1253
      %vm1255 = vcmp.eq.s32.totalorder %v1250, 2
      %v1256 = vxor.u32 %v1246, 2147483648
      %v1257 = vsel %vm1255, %v1256, %v1247
      %v1258 = vsel %vm1251, %v1254, %v1257
      %v1259 = vsel %vm1248, nan, %v1258
      %v1260 = vand.u32 2147483647, %v628
      %vm1261 = vcmp.le.f32.partialorder %v1260, 0.7853982
      %vm1262 = vcmp.lt.s32.totalorder %v628, 0
      %v1263 = vand.u32 %v628, 2139095040
      %v1264 = vshrl.u32 %v1263, 23
      %v1265 = vsub.s32 %v1264, 127
      %v1266 = vand.u32 2147483647, %v628
      %v1267 = vand.u32 %v1266, 8388607
      %v1268 = vor.u32 %v1267, 8388608
      %v1269 = vsub.s32 0, %v1268
      %v1270 = vadd.s32 %v1265, 1
      %vm1271 = vcmp.gt.s32.totalorder %v1270, 0
      %v1272 = vsel %vm1271, %v1270, 0
      %v1273 = vshrl.u32 %v1272, 5
      %v1274 = vand.u32 %v1272, 31
      %v1275 = vsub.s32 32, %v1274
      %v1276 = vshrl.u32 683565275, %v1275
      %v1277 = vshll.u32 683565275, %v1274
      %v1278 = vshrl.u32 2475754826, %v1275
      %v1279 = vor.u32 %v1277, %v1278
      %v1280 = vshll.u32 2475754826, %v1274
      %v1281 = vshrl.u32 2131351028, %v1275
      %v1282 = vor.u32 %v1280, %v1281
      %v1283 = vshll.u32 2131351028, %v1274
      %v1284 = vshrl.u32 2102212464, %v1275
      %v1285 = vor.u32 %v1283, %v1284
      %v1286 = vshll.u32 2102212464, %v1274
      %v1287 = vshrl.u32 920167782, %v1275
      %v1288 = vor.u32 %v1286, %v1287
      %v1289 = vshll.u32 920167782, %v1274
      %v1290 = vshrl.u32 1326507024, %v1275
      %v1291 = vor.u32 %v1289, %v1290
      %vm1292 = vcmp.lt.s32.totalorder %v1273, 1
      %vm1293 = vcmp.lt.s32.totalorder %v1273, 2
      %vm1294 = vcmp.lt.s32.totalorder %v1273, 3
      %vm1295 = vcmp.lt.s32.totalorder %v1273, 4
      %v1296 = vsel %vm1292, %v1276, %v1279
      %v1297 = vsel %vm1295, %v1285, 2102212464
      %v1298 = vsel %vm1294, %v1282, %v1297
      %v1299 = vsel %vm1293, %v1296, %v1298
      %v1300 = vsel %vm1292, %v1279, %v1282
      %v1301 = vsel %vm1295, %v1288, 920167782
      %v1302 = vsel %vm1294, %v1285, %v1301
      %v1303 = vsel %vm1293, %v1300, %v1302
      %v1304 = vsel %vm1292, %v1282, %v1285
      %v1305 = vsel %vm1295, %v1291, 1326507024
      %v1306 = vsel %vm1294, %v1288, %v1305
      %v1307 = vsel %vm1293, %v1304, %v1306
      %v1308 = vshll.u32 %v1268, 8
      %v1309 = vmul.u32.u64.compose %v1308, %v1307
      %v1310 = vextract.low.u32 %v1309
      %v1311 = vextract.high.u32 %v1309
      %v1312 = vmul.u32.u64.compose %v1308, %v1303
      %v1313 = vextract.low.u32 %v1312
      %v1314 = vextract.high.u32 %v1312
      %v1315 = vmul.u32 %v1308, %v1299
      %v1316 = vadd.s32 %v1311, %v1313
      %vm1317 = vc.u32 %v1311, %v1313
      %v1318 = vadd.s32 %v1314, 1
      %v1319 = vsel %vm1317, %v1318, %v1314
      %v1320 = vadd.s32 %v1315, %v1319
      %v1321 = vadd.s32 %v1320, 536870912
      %v1322 = vshrl.u32 %v1321, 30
      %v1323 = vshll.u32 %v1322, 30
      %v1324 = vsub.s32 %v1320, %v1323
      %vm1325 = vcmp.lt.s32.totalorder %v1324, 0
      %v1326 = vsub.s32 0, %v1324
      %v1327 = vsel %vm1325, %v1326, %v1324
      %v1328 = vclz %v1327
      %v1329 = vsub.s32 %v1328, 2
      %vm1330 = vcmp.gt.s32.totalorder 0, %v1329
      %v1331 = vsel %vm1330, 0, %v1329
      %v1332 = vsub.s32 32, %v1331
      %v1333 = vshll.u32 %v1324, %v1331
      %v1334 = vshrl.u32 %v1316, %v1332
      %v1335 = vor.u32 %v1333, %v1334
      %v1336 = vsub.s32 4294967266, %v1331
      %v1337 = vadd.s32 %v1336, 127
      %v1338 = vshll.u32 %v1337, 23
      %v1339 = vor.u32 4788187, %v1338
      %v1340 = vand.u32 2147483647, %v1339
      %v1342 = vcvt.s32.f32 %v1335
      %v1343 = vmul.f32 %v1342, %v1340
      %v1344 = vxor.u32 %v1343, 2147483648
      %v1345 = vsel %vm1262, %v1344, %v1343
      %v1346 = vsub.s32 4, %v1322
      %v1347 = vsel %vm1262, %v1346, %v1322
      %v1348 = vsel %vm1261, %v628, %v1345
      %v1349 = vsel %vm1261, 0, %v1347
      %v1350 = vcosq.f32.pop %v1348
      %v1351 = vsinq.f32.pop %v1348
      %vm1352 = vweird.f32 %v628
      %v1353 = vadd.s32 %v1349, 3
      %v1354 = vand.u32 %v1353, 3
      %vm1355 = vcmp.lt.s32.totalorder %v1354, 2
      %vm1356 = vcmp.eq.s32.totalorder %v1354, 0
      %v1357 = vxor.u32 %v1351, 2147483648
      %v1358 = vsel %vm1356, %v1350, %v1357
      %vm1359 = vcmp.eq.s32.totalorder %v1354, 2
      %v1360 = vxor.u32 %v1350, 2147483648
      %v1361 = vsel %vm1359, %v1360, %v1351
      %v1362 = vsel %vm1355, %v1358, %v1361
      %v1363 = vsel %vm1352, nan, %v1362
      %v1364 = vand.u32 2147483647, %v633
      %vm1365 = vcmp.le.f32.partialorder %v1364, 0.7853982
      %vm1366 = vcmp.lt.s32.totalorder %v633, 0
      %v1367 = vand.u32 %v633, 2139095040
      %v1368 = vshrl.u32 %v1367, 23
      %v1369 = vsub.s32 %v1368, 127
      %v1370 = vand.u32 2147483647, %v633
      %v1371 = vand.u32 %v1370, 8388607
      %v1372 = vor.u32 %v1371, 8388608
      %v1373 = vsub.s32 0, %v1372
      %v1374 = vadd.s32 %v1369, 1
      %vm1375 = vcmp.gt.s32.totalorder %v1374, 0
      %v1376 = vsel %vm1375, %v1374, 0
      %v1377 = vshrl.u32 %v1376, 5
      %v1378 = vand.u32 %v1376, 31
      %v1379 = vsub.s32 32, %v1378
      %v1380 = vshrl.u32 683565275, %v1379
      %v1381 = vshll.u32 683565275, %v1378
      %v1382 = vshrl.u32 2475754826, %v1379
      %v1383 = vor.u32 %v1381, %v1382
      %v1384 = vshll.u32 2475754826, %v1378
      %v1385 = vshrl.u32 2131351028, %v1379
      %v1386 = vor.u32 %v1384, %v1385
      %v1387 = vshll.u32 2131351028, %v1378
      %v1388 = vshrl.u32 2102212464, %v1379
      %v1389 = vor.u32 %v1387, %v1388
      %v1390 = vshll.u32 2102212464, %v1378
      %v1391 = vshrl.u32 920167782, %v1379
      %v1392 = vor.u32 %v1390, %v1391
      %v1393 = vshll.u32 920167782, %v1378
      %v1394 = vshrl.u32 1326507024, %v1379
      %v1395 = vor.u32 %v1393, %v1394
      %vm1396 = vcmp.lt.s32.totalorder %v1377, 1
      %vm1397 = vcmp.lt.s32.totalorder %v1377, 2
      %vm1398 = vcmp.lt.s32.totalorder %v1377, 3
      %vm1399 = vcmp.lt.s32.totalorder %v1377, 4
      %v1400 = vsel %vm1396, %v1380, %v1383
      %v1401 = vsel %vm1399, %v1389, 2102212464
      %v1402 = vsel %vm1398, %v1386, %v1401
      %v1403 = vsel %vm1397, %v1400, %v1402
      %v1404 = vsel %vm1396, %v1383, %v1386
      %v1405 = vsel %vm1399, %v1392, 920167782
      %v1406 = vsel %vm1398, %v1389, %v1405
      %v1407 = vsel %vm1397, %v1404, %v1406
      %v1408 = vsel %vm1396, %v1386, %v1389
      %v1409 = vsel %vm1399, %v1395, 1326507024
      %v1410 = vsel %vm1398, %v1392, %v1409
      %v1411 = vsel %vm1397, %v1408, %v1410
      %v1412 = vshll.u32 %v1372, 8
      %v1413 = vmul.u32.u64.compose %v1412, %v1411
      %v1414 = vextract.low.u32 %v1413
      %v1415 = vextract.high.u32 %v1413
      %v1416 = vmul.u32.u64.compose %v1412, %v1407
      %v1417 = vextract.low.u32 %v1416
      %v1418 = vextract.high.u32 %v1416
      %v1419 = vmul.u32 %v1412, %v1403
      %v1420 = vadd.s32 %v1415, %v1417
      %vm1421 = vc.u32 %v1415, %v1417
      %v1422 = vadd.s32 %v1418, 1
      %v1423 = vsel %vm1421, %v1422, %v1418
      %v1424 = vadd.s32 %v1419, %v1423
      %v1425 = vadd.s32 %v1424, 536870912
      %v1426 = vshrl.u32 %v1425, 30
      %v1427 = vshll.u32 %v1426, 30
      %v1428 = vsub.s32 %v1424, %v1427
      %vm1429 = vcmp.lt.s32.totalorder %v1428, 0
      %v1430 = vsub.s32 0, %v1428
      %v1431 = vsel %vm1429, %v1430, %v1428
      %v1432 = vclz %v1431
      %v1433 = vsub.s32 %v1432, 2
      %vm1434 = vcmp.gt.s32.totalorder 0, %v1433
      %v1435 = vsel %vm1434, 0, %v1433
      %v1436 = vsub.s32 32, %v1435
      %v1437 = vshll.u32 %v1428, %v1435
      %v1438 = vshrl.u32 %v1420, %v1436
      %v1439 = vor.u32 %v1437, %v1438
      %v1440 = vsub.s32 4294967266, %v1435
      %v1441 = vadd.s32 %v1440, 127
      %v1442 = vshll.u32 %v1441, 23
      %v1443 = vor.u32 4788187, %v1442
      %v1444 = vand.u32 2147483647, %v1443
      %v1446 = vcvt.s32.f32 %v1439
      %v1447 = vmul.f32 %v1446, %v1444
      %v1448 = vxor.u32 %v1447, 2147483648
      %v1449 = vsel %vm1366, %v1448, %v1447
      %v1450 = vsub.s32 4, %v1426
      %v1451 = vsel %vm1366, %v1450, %v1426
      %v1452 = vsel %vm1365, %v633, %v1449
      %v1453 = vsel %vm1365, 0, %v1451
      %v1454 = vcosq.f32.pop %v1452
      %v1455 = vsinq.f32.pop %v1452
      %vm1456 = vweird.f32 %v633
      %v1457 = vadd.s32 %v1453, 3
      %v1458 = vand.u32 %v1457, 3
      %vm1459 = vcmp.lt.s32.totalorder %v1458, 2
      %vm1460 = vcmp.eq.s32.totalorder %v1458, 0
      %v1461 = vxor.u32 %v1455, 2147483648
      %v1462 = vsel %vm1460, %v1454, %v1461
      %vm1463 = vcmp.eq.s32.totalorder %v1458, 2
      %v1464 = vxor.u32 %v1454, 2147483648
      %v1465 = vsel %vm1463, %v1464, %v1455
      %v1466 = vsel %vm1459, %v1462, %v1465
      %v1467 = vsel %vm1456, nan, %v1466
      %v1468 = vld [vmem:[%s6] sm:$0xff]
      %v1469 = vld [vmem:[%s6 + $0x8] sm:$0xff]
      %v1470 = vld [vmem:[%s6 + $0x10] sm:$0xff]
      %v1471 = vld [vmem:[%s6 + $0x18] sm:$0xff]
      %v1472 = vld [vmem:[%s6 + $0x20] sm:$0xff]
      %v1473 = vld [vmem:[%s6 + $0x28] sm:$0xff]
      %v1474 = vld [vmem:[%s6 + $0x30] sm:$0xff]
      %v1475 = vld [vmem:[%s6 + $0x38] sm:$0xff]
      %v1476 = vld [vmem:[%s6 + $0x40] sm:$0xff]
      %v1477 = vld [vmem:[%s6 + $0x48] sm:$0xff]
      %v1478 = vld [vmem:[%s6 + $0x50] sm:$0xff]
      %v1479 = vld [vmem:[%s6 + $0x58] sm:$0xff]
      %v1480 = vld [vmem:[%s6 + $0x60] sm:$0xff]
      %v1481 = vld [vmem:[%s6 + $0x68] sm:$0xff]
      %v1482 = vld [vmem:[%s6 + $0x70] sm:$0xff]
      %v1483 = vld [vmem:[%s6 + $0x78] sm:$0xff]
      %v1484 = vld [vmem:[%s7] sm:$0x1]
      %v1486 = vlaneseq
      %v1487 = vshrl.u32 %v1486, 7
      %v1488 = vsub.s32 0, %v1487
      %v1489 = vrot.slane %v1484, %v1488
      %1491 = vmatprep.subr.mxu0 0.0
      %1492 = vmatpush1.msra.mxu0 %v1468
      %1493 = vmatprep.subr.mxu0 0.0
      %1494 = vmatpush1.msra.mxu0 %v1469
      %1495 = vmatprep.subr.mxu0 0.0
      %1496 = vmatpush1.msra.mxu0 %v1470
      %1497 = vmatprep.subr.mxu0 0.0
      %1498 = vmatpush1.msra.mxu0 %v1471
      %1499 = vmatprep.subr.mxu0 0.0
      %1500 = vmatpush1.msra.mxu0 %v1472
      %1501 = vmatprep.subr.mxu0 0.0
      %1502 = vmatpush1.msra.mxu0 %v1473
      %1503 = vmatprep.subr.mxu0 0.0
      %1504 = vmatpush1.msra.mxu0 %v1474
      %1505 = vmatprep.subr.mxu0 0.0
      %1506 = vmatpush1.msra.mxu0 %v1475
      %1507 = vmatprep.subr.mxu0 0.0
      %1508 = vmatpush1.msra.mxu0 %v1476
      %1509 = vmatprep.subr.mxu0 0.0
      %1510 = vmatpush1.msra.mxu0 %v1477
      %1511 = vmatprep.subr.mxu0 0.0
      %1512 = vmatpush1.msra.mxu0 %v1478
      %1513 = vmatprep.subr.mxu0 0.0
      %1514 = vmatpush1.msra.mxu0 %v1479
      %1515 = vmatprep.subr.mxu0 0.0
      %1516 = vmatpush1.msra.mxu0 %v1480
      %1517 = vmatprep.subr.mxu0 0.0
      %1518 = vmatpush1.msra.mxu0 %v1481
      %1519 = vmatprep.subr.mxu0 0.0
      %1520 = vmatpush1.msra.mxu0 %v1482
      %1521 = vmatprep.subr.mxu0 0.0
      %1522 = vmatpush1.msra.mxu0 %v1483
      %1523 = vmatprep.subr.mxu0 0.0
      %1524 = vmatpush1.msra.mxu0 0.0
      %1525 = vmatprep.subr.mxu0 0.0
      %1526 = vmatpush1.msra.mxu0 0.0
      %1527 = vmatprep.subr.mxu0 0.0
      %1528 = vmatpush1.msra.mxu0 0.0
      %1529 = vmatprep.subr.mxu0 0.0
      %1530 = vmatpush1.msra.mxu0 0.0
      %1531 = vmatprep.subr.mxu0 0.0
      %1532 = vmatpush1.msra.mxu0 0.0
      %1533 = vmatprep.subr.mxu0 0.0
      %1534 = vmatpush1.msra.mxu0 0.0
      %1535 = vmatprep.subr.mxu0 0.0
      %1536 = vmatpush1.msra.mxu0 0.0
      %1537 = vmatprep.subr.mxu0 0.0
      %1538 = vmatpush1.msra.mxu0 0.0
      %1539 = vmatprep.subr.mxu0 0.0
      %1540 = vmatpush1.msra.mxu0 0.0
      %1541 = vmatprep.subr.mxu0 0.0
      %1542 = vmatpush1.msra.mxu0 0.0
      %1543 = vmatprep.subr.mxu0 0.0
      %1544 = vmatpush1.msra.mxu0 0.0
      %1545 = vmatprep.subr.mxu0 0.0
      %1546 = vmatpush1.msra.mxu0 0.0
      %1547 = vmatprep.subr.mxu0 0.0
      %1548 = vmatpush1.msra.mxu0 0.0
      %1549 = vmatprep.subr.mxu0 0.0
      %1550 = vmatpush1.msra.mxu0 0.0
      %1551 = vmatprep.subr.mxu0 0.0
      %1552 = vmatpush1.msra.mxu0 0.0
      %1553 = vmatprep.subr.mxu0 0.0
      %1554 = vmatpush1.msra.mxu0 0.0
      %1555 = vmatprep.mubr.f32.mxu0 0.0
      %1556 = vmatmul.mubr.f32.gmra.mrb[0].mxu0 %v739
      %v1557 = vpop.f32.mrb[0].mxu0
      %v1558 = vadd.f32 %v1489, %v1557
      %v1559 = vpop.f32.mrb[0].mxu0
      %1560 = vmatprep.mubr.f32.mxu0 0.0
      %1561 = vmatmul.mubr.f32.gmra.mrb[0].mxu0 %v843
      %v1562 = vpop.f32.mrb[0].mxu0
      %v1563 = vadd.f32 %v1489, %v1562
      %v1564 = vpop.f32.mrb[0].mxu0
      %1565 = vmatprep.mubr.f32.mxu0 0.0
      %1566 = vmatmul.mubr.f32.gmra.mrb[0].mxu0 %v947
      %v1567 = vpop.f32.mrb[0].mxu0
      %v1568 = vadd.f32 %v1489, %v1567
      %v1569 = vpop.f32.mrb[0].mxu0
      %1570 = vmatprep.mubr.f32.mxu0 0.0
      %1571 = vmatmul.mubr.f32.gmra.mrb[0].mxu0 %v1051
      %v1572 = vpop.f32.mrb[0].mxu0
      %v1573 = vadd.f32 %v1489, %v1572
      %v1574 = vpop.f32.mrb[0].mxu0
      %1575 = vmatprep.mubr.f32.mxu0 0.0
      %1576 = vmatmul.mubr.f32.gmra.mrb[0].mxu0 %v1155
      %v1577 = vpop.f32.mrb[0].mxu0
      %v1578 = vadd.f32 %v1489, %v1577
      %v1579 = vpop.f32.mrb[0].mxu0
      %1580 = vmatprep.mubr.f32.mxu0 0.0
      %1581 = vmatmul.mubr.f32.gmra.mrb[0].mxu0 %v1259
      %v1582 = vpop.f32.mrb[0].mxu0
      %v1583 = vadd.f32 %v1489, %v1582
      %v1584 = vpop.f32.mrb[0].mxu0
      %1585 = vmatprep.mubr.f32.mxu0 0.0
      %1586 = vmatmul.mubr.f32.gmra.mrb[0].mxu0 %v1363
      %v1587 = vpop.f32.mrb[0].mxu0
      %v1588 = vadd.f32 %v1489, %v1587
      %v1589 = vpop.f32.mrb[0].mxu0
      %1590 = vmatprep.mubr.f32.mxu0 0.0
      %1591 = vmatmul.mubr.f32.gmra.mrb[0].mxu0 %v1467
      %v1592 = vpop.f32.mrb[0].mxu0
      %v1593 = vadd.f32 %v1489, %v1592
      %v1594 = vpop.f32.mrb[0].mxu0
      %1595 = vdwg.mxu0
      %v1596 = vand.u32 2147483647, %v1558
      %vm1597 = vcmp.le.f32.partialorder %v1596, 0.7853982
      %vm1598 = vcmp.lt.s32.totalorder %v1558, 0
      %v1599 = vand.u32 %v1558, 2139095040
      %v1600 = vshrl.u32 %v1599, 23
      %v1601 = vsub.s32 %v1600, 127
      %v1602 = vand.u32 2147483647, %v1558
      %v1603 = vand.u32 %v1602, 8388607
      %v1604 = vor.u32 %v1603, 8388608
      %v1605 = vsub.s32 0, %v1604
      %v1606 = vadd.s32 %v1601, 1
      %vm1607 = vcmp.gt.s32.totalorder %v1606, 0
      %v1608 = vsel %vm1607, %v1606, 0
      %v1609 = vshrl.u32 %v1608, 5
      %v1610 = vand.u32 %v1608, 31
      %v1611 = vsub.s32 32, %v1610
      %v1612 = vshrl.u32 683565275, %v1611
      %v1613 = vshll.u32 683565275, %v1610
      %v1614 = vshrl.u32 2475754826, %v1611
      %v1615 = vor.u32 %v1613, %v1614
      %v1616 = vshll.u32 2475754826, %v1610
      %v1617 = vshrl.u32 2131351028, %v1611
      %v1618 = vor.u32 %v1616, %v1617
      %v1619 = vshll.u32 2131351028, %v1610
      %v1620 = vshrl.u32 2102212464, %v1611
      %v1621 = vor.u32 %v1619, %v1620
      %v1622 = vshll.u32 2102212464, %v1610
      %v1623 = vshrl.u32 920167782, %v1611
      %v1624 = vor.u32 %v1622, %v1623
      %v1625 = vshll.u32 920167782, %v1610
      %v1626 = vshrl.u32 1326507024, %v1611
      %v1627 = vor.u32 %v1625, %v1626
      %vm1628 = vcmp.lt.s32.totalorder %v1609, 1
      %vm1629 = vcmp.lt.s32.totalorder %v1609, 2
      %vm1630 = vcmp.lt.s32.totalorder %v1609, 3
      %vm1631 = vcmp.lt.s32.totalorder %v1609, 4
      %v1632 = vsel %vm1628, %v1612, %v1615
      %v1633 = vsel %vm1631, %v1621, 2102212464
      %v1634 = vsel %vm1630, %v1618, %v1633
      %v1635 = vsel %vm1629, %v1632, %v1634
      %v1636 = vsel %vm1628, %v1615, %v1618
      %v1637 = vsel %vm1631, %v1624, 920167782
      %v1638 = vsel %vm1630, %v1621, %v1637
      %v1639 = vsel %vm1629, %v1636, %v1638
      %v1640 = vsel %vm1628, %v1618, %v1621
      %v1641 = vsel %vm1631, %v1627, 1326507024
      %v1642 = vsel %vm1630, %v1624, %v1641
      %v1643 = vsel %vm1629, %v1640, %v1642
      %v1644 = vshll.u32 %v1604, 8
      %v1645 = vmul.u32.u64.compose %v1644, %v1643
      %v1646 = vextract.low.u32 %v1645
      %v1647 = vextract.high.u32 %v1645
      %v1648 = vmul.u32.u64.compose %v1644, %v1639
      %v1649 = vextract.low.u32 %v1648
      %v1650 = vextract.high.u32 %v1648
      %v1651 = vmul.u32 %v1644, %v1635
      %v1652 = vadd.s32 %v1647, %v1649
      %vm1653 = vc.u32 %v1647, %v1649
      %v1654 = vadd.s32 %v1650, 1
      %v1655 = vsel %vm1653, %v1654, %v1650
      %v1656 = vadd.s32 %v1651, %v1655
      %v1657 = vadd.s32 %v1656, 536870912
      %v1658 = vshrl.u32 %v1657, 30
      %v1659 = vshll.u32 %v1658, 30
      %v1660 = vsub.s32 %v1656, %v1659
      %vm1661 = vcmp.lt.s32.totalorder %v1660, 0
      %v1662 = vsub.s32 0, %v1660
      %v1663 = vsel %vm1661, %v1662, %v1660
      %v1664 = vclz %v1663
      %v1665 = vsub.s32 %v1664, 2
      %vm1666 = vcmp.gt.s32.totalorder 0, %v1665
      %v1667 = vsel %vm1666, 0, %v1665
      %v1668 = vsub.s32 32, %v1667
      %v1669 = vshll.u32 %v1660, %v1667
      %v1670 = vshrl.u32 %v1652, %v1668
      %v1671 = vor.u32 %v1669, %v1670
      %v1672 = vsub.s32 4294967266, %v1667
      %v1673 = vadd.s32 %v1672, 127
      %v1674 = vshll.u32 %v1673, 23
      %v1675 = vor.u32 4788187, %v1674
      %v1676 = vand.u32 2147483647, %v1675
      %v1678 = vcvt.s32.f32 %v1671
      %v1679 = vmul.f32 %v1678, %v1676
      %v1680 = vxor.u32 %v1679, 2147483648
      %v1681 = vsel %vm1598, %v1680, %v1679
      %v1682 = vsub.s32 4, %v1658
      %v1683 = vsel %vm1598, %v1682, %v1658
      %v1684 = vsel %vm1597, %v1558, %v1681
      %v1685 = vsel %vm1597, 0, %v1683
      %v1686 = vcosq.f32.pop %v1684
      %v1687 = vsinq.f32.pop %v1684
      %vm1688 = vweird.f32 %v1558
      %v1689 = vadd.s32 %v1685, 3
      %v1690 = vand.u32 %v1689, 3
      %vm1691 = vcmp.lt.s32.totalorder %v1690, 2
      %vm1692 = vcmp.eq.s32.totalorder %v1690, 0
      %v1693 = vxor.u32 %v1687, 2147483648
      %v1694 = vsel %vm1692, %v1686, %v1693
      %vm1695 = vcmp.eq.s32.totalorder %v1690, 2
      %v1696 = vxor.u32 %v1686, 2147483648
      %v1697 = vsel %vm1695, %v1696, %v1687
      %v1698 = vsel %vm1691, %v1694, %v1697
      %v1699 = vsel %vm1688, nan, %v1698
      %v1700 = vand.u32 2147483647, %v1563
      %vm1701 = vcmp.le.f32.partialorder %v1700, 0.7853982
      %vm1702 = vcmp.lt.s32.totalorder %v1563, 0
      %v1703 = vand.u32 %v1563, 2139095040
      %v1704 = vshrl.u32 %v1703, 23
      %v1705 = vsub.s32 %v1704, 127
      %v1706 = vand.u32 2147483647, %v1563
      %v1707 = vand.u32 %v1706, 8388607
      %v1708 = vor.u32 %v1707, 8388608
      %v1709 = vsub.s32 0, %v1708
      %v1710 = vadd.s32 %v1705, 1
      %vm1711 = vcmp.gt.s32.totalorder %v1710, 0
      %v1712 = vsel %vm1711, %v1710, 0
      %v1713 = vshrl.u32 %v1712, 5
      %v1714 = vand.u32 %v1712, 31
      %v1715 = vsub.s32 32, %v1714
      %v1716 = vshrl.u32 683565275, %v1715
      %v1717 = vshll.u32 683565275, %v1714
      %v1718 = vshrl.u32 2475754826, %v1715
      %v1719 = vor.u32 %v1717, %v1718
      %v1720 = vshll.u32 2475754826, %v1714
      %v1721 = vshrl.u32 2131351028, %v1715
      %v1722 = vor.u32 %v1720, %v1721
      %v1723 = vshll.u32 2131351028, %v1714
      %v1724 = vshrl.u32 2102212464, %v1715
      %v1725 = vor.u32 %v1723, %v1724
      %v1726 = vshll.u32 2102212464, %v1714
      %v1727 = vshrl.u32 920167782, %v1715
      %v1728 = vor.u32 %v1726, %v1727
      %v1729 = vshll.u32 920167782, %v1714
      %v1730 = vshrl.u32 1326507024, %v1715
      %v1731 = vor.u32 %v1729, %v1730
      %vm1732 = vcmp.lt.s32.totalorder %v1713, 1
      %vm1733 = vcmp.lt.s32.totalorder %v1713, 2
      %vm1734 = vcmp.lt.s32.totalorder %v1713, 3
      %vm1735 = vcmp.lt.s32.totalorder %v1713, 4
      %v1736 = vsel %vm1732, %v1716, %v1719
      %v1737 = vsel %vm1735, %v1725, 2102212464
      %v1738 = vsel %vm1734, %v1722, %v1737
      %v1739 = vsel %vm1733, %v1736, %v1738
      %v1740 = vsel %vm1732, %v1719, %v1722
      %v1741 = vsel %vm1735, %v1728, 920167782
      %v1742 = vsel %vm1734, %v1725, %v1741
      %v1743 = vsel %vm1733, %v1740, %v1742
      %v1744 = vsel %vm1732, %v1722, %v1725
      %v1745 = vsel %vm1735, %v1731, 1326507024
      %v1746 = vsel %vm1734, %v1728, %v1745
      %v1747 = vsel %vm1733, %v1744, %v1746
      %v1748 = vshll.u32 %v1708, 8
      %v1749 = vmul.u32.u64.compose %v1748, %v1747
      %v1750 = vextract.low.u32 %v1749
      %v1751 = vextract.high.u32 %v1749
      %v1752 = vmul.u32.u64.compose %v1748, %v1743
      %v1753 = vextract.low.u32 %v1752
      %v1754 = vextract.high.u32 %v1752
      %v1755 = vmul.u32 %v1748, %v1739
      %v1756 = vadd.s32 %v1751, %v1753
      %vm1757 = vc.u32 %v1751, %v1753
      %v1758 = vadd.s32 %v1754, 1
      %v1759 = vsel %vm1757, %v1758, %v1754
      %v1760 = vadd.s32 %v1755, %v1759
      %v1761 = vadd.s32 %v1760, 536870912
      %v1762 = vshrl.u32 %v1761, 30
      %v1763 = vshll.u32 %v1762, 30
      %v1764 = vsub.s32 %v1760, %v1763
      %vm1765 = vcmp.lt.s32.totalorder %v1764, 0
      %v1766 = vsub.s32 0, %v1764
      %v1767 = vsel %vm1765, %v1766, %v1764
      %v1768 = vclz %v1767
      %v1769 = vsub.s32 %v1768, 2
      %vm1770 = vcmp.gt.s32.totalorder 0, %v1769
      %v1771 = vsel %vm1770, 0, %v1769
      %v1772 = vsub.s32 32, %v1771
      %v1773 = vshll.u32 %v1764, %v1771
      %v1774 = vshrl.u32 %v1756, %v1772
      %v1775 = vor.u32 %v1773, %v1774
      %v1776 = vsub.s32 4294967266, %v1771
      %v1777 = vadd.s32 %v1776, 127
      %v1778 = vshll.u32 %v1777, 23
      %v1779 = vor.u32 4788187, %v1778
      %v1780 = vand.u32 2147483647, %v1779
      %v1782 = vcvt.s32.f32 %v1775
      %v1783 = vmul.f32 %v1782, %v1780
      %v1784 = vxor.u32 %v1783, 2147483648
      %v1785 = vsel %vm1702, %v1784, %v1783
      %v1786 = vsub.s32 4, %v1762
      %v1787 = vsel %vm1702, %v1786, %v1762
      %v1788 = vsel %vm1701, %v1563, %v1785
      %v1789 = vsel %vm1701, 0, %v1787
      %v1790 = vcosq.f32.pop %v1788
      %v1791 = vsinq.f32.pop %v1788
      %vm1792 = vweird.f32 %v1563
      %v1793 = vadd.s32 %v1789, 3
      %v1794 = vand.u32 %v1793, 3
      %vm1795 = vcmp.lt.s32.totalorder %v1794, 2
      %vm1796 = vcmp.eq.s32.totalorder %v1794, 0
      %v1797 = vxor.u32 %v1791, 2147483648
      %v1798 = vsel %vm1796, %v1790, %v1797
      %vm1799 = vcmp.eq.s32.totalorder %v1794, 2
      %v1800 = vxor.u32 %v1790, 2147483648
      %v1801 = vsel %vm1799, %v1800, %v1791
      %v1802 = vsel %vm1795, %v1798, %v1801
      %v1803 = vsel %vm1792, nan, %v1802
      %v1804 = vand.u32 2147483647, %v1568
      %vm1805 = vcmp.le.f32.partialorder %v1804, 0.7853982
      %vm1806 = vcmp.lt.s32.totalorder %v1568, 0
      %v1807 = vand.u32 %v1568, 2139095040
      %v1808 = vshrl.u32 %v1807, 23
      %v1809 = vsub.s32 %v1808, 127
      %v1810 = vand.u32 2147483647, %v1568
      %v1811 = vand.u32 %v1810, 8388607
      %v1812 = vor.u32 %v1811, 8388608
      %v1813 = vsub.s32 0, %v1812
      %v1814 = vadd.s32 %v1809, 1
      %vm1815 = vcmp.gt.s32.totalorder %v1814, 0
      %v1816 = vsel %vm1815, %v1814, 0
      %v1817 = vshrl.u32 %v1816, 5
      %v1818 = vand.u32 %v1816, 31
      %v1819 = vsub.s32 32, %v1818
      %v1820 = vshrl.u32 683565275, %v1819
      %v1821 = vshll.u32 683565275, %v1818
      %v1822 = vshrl.u32 2475754826, %v1819
      %v1823 = vor.u32 %v1821, %v1822
      %v1824 = vshll.u32 2475754826, %v1818
      %v1825 = vshrl.u32 2131351028, %v1819
      %v1826 = vor.u32 %v1824, %v1825
      %v1827 = vshll.u32 2131351028, %v1818
      %v1828 = vshrl.u32 2102212464, %v1819
      %v1829 = vor.u32 %v1827, %v1828
      %v1830 = vshll.u32 2102212464, %v1818
      %v1831 = vshrl.u32 920167782, %v1819
      %v1832 = vor.u32 %v1830, %v1831
      %v1833 = vshll.u32 920167782, %v1818
      %v1834 = vshrl.u32 1326507024, %v1819
      %v1835 = vor.u32 %v1833, %v1834
      %vm1836 = vcmp.lt.s32.totalorder %v1817, 1
      %vm1837 = vcmp.lt.s32.totalorder %v1817, 2
      %vm1838 = vcmp.lt.s32.totalorder %v1817, 3
      %vm1839 = vcmp.lt.s32.totalorder %v1817, 4
      %v1840 = vsel %vm1836, %v1820, %v1823
      %v1841 = vsel %vm1839, %v1829, 2102212464
      %v1842 = vsel %vm1838, %v1826, %v1841
      %v1843 = vsel %vm1837, %v1840, %v1842
      %v1844 = vsel %vm1836, %v1823, %v1826
      %v1845 = vsel %vm1839, %v1832, 920167782
      %v1846 = vsel %vm1838, %v1829, %v1845
      %v1847 = vsel %vm1837, %v1844, %v1846
      %v1848 = vsel %vm1836, %v1826, %v1829
      %v1849 = vsel %vm1839, %v1835, 1326507024
      %v1850 = vsel %vm1838, %v1832, %v1849
      %v1851 = vsel %vm1837, %v1848, %v1850
      %v1852 = vshll.u32 %v1812, 8
      %v1853 = vmul.u32.u64.compose %v1852, %v1851
      %v1854 = vextract.low.u32 %v1853
      %v1855 = vextract.high.u32 %v1853
      %v1856 = vmul.u32.u64.compose %v1852, %v1847
      %v1857 = vextract.low.u32 %v1856
      %v1858 = vextract.high.u32 %v1856
      %v1859 = vmul.u32 %v1852, %v1843
      %v1860 = vadd.s32 %v1855, %v1857
      %vm1861 = vc.u32 %v1855, %v1857
      %v1862 = vadd.s32 %v1858, 1
      %v1863 = vsel %vm1861, %v1862, %v1858
      %v1864 = vadd.s32 %v1859, %v1863
      %v1865 = vadd.s32 %v1864, 536870912
      %v1866 = vshrl.u32 %v1865, 30
      %v1867 = vshll.u32 %v1866, 30
      %v1868 = vsub.s32 %v1864, %v1867
      %vm1869 = vcmp.lt.s32.totalorder %v1868, 0
      %v1870 = vsub.s32 0, %v1868
      %v1871 = vsel %vm1869, %v1870, %v1868
      %v1872 = vclz %v1871
      %v1873 = vsub.s32 %v1872, 2
      %vm1874 = vcmp.gt.s32.totalorder 0, %v1873
      %v1875 = vsel %vm1874, 0, %v1873
      %v1876 = vsub.s32 32, %v1875
      %v1877 = vshll.u32 %v1868, %v1875
      %v1878 = vshrl.u32 %v1860, %v1876
      %v1879 = vor.u32 %v1877, %v1878
      %v1880 = vsub.s32 4294967266, %v1875
      %v1881 = vadd.s32 %v1880, 127
      %v1882 = vshll.u32 %v1881, 23
      %v1883 = vor.u32 4788187, %v1882
      %v1884 = vand.u32 2147483647, %v1883
      %v1886 = vcvt.s32.f32 %v1879
      %v1887 = vmul.f32 %v1886, %v1884
      %v1888 = vxor.u32 %v1887, 2147483648
      %v1889 = vsel %vm1806, %v1888, %v1887
      %v1890 = vsub.s32 4, %v1866
      %v1891 = vsel %vm1806, %v1890, %v1866
      %v1892 = vsel %vm1805, %v1568, %v1889
      %v1893 = vsel %vm1805, 0, %v1891
      %v1894 = vcosq.f32.pop %v1892
      %v1895 = vsinq.f32.pop %v1892
      %vm1896 = vweird.f32 %v1568
      %v1897 = vadd.s32 %v1893, 3
      %v1898 = vand.u32 %v1897, 3
      %vm1899 = vcmp.lt.s32.totalorder %v1898, 2
      %vm1900 = vcmp.eq.s32.totalorder %v1898, 0
      %v1901 = vxor.u32 %v1895, 2147483648
      %v1902 = vsel %vm1900, %v1894, %v1901
      %vm1903 = vcmp.eq.s32.totalorder %v1898, 2
      %v1904 = vxor.u32 %v1894, 2147483648
      %v1905 = vsel %vm1903, %v1904, %v1895
      %v1906 = vsel %vm1899, %v1902, %v1905
      %v1907 = vsel %vm1896, nan, %v1906
      %v1908 = vand.u32 2147483647, %v1573
      %vm1909 = vcmp.le.f32.partialorder %v1908, 0.7853982
      %vm1910 = vcmp.lt.s32.totalorder %v1573, 0
      %v1911 = vand.u32 %v1573, 2139095040
      %v1912 = vshrl.u32 %v1911, 23
      %v1913 = vsub.s32 %v1912, 127
      %v1914 = vand.u32 2147483647, %v1573
      %v1915 = vand.u32 %v1914, 8388607
      %v1916 = vor.u32 %v1915, 8388608
      %v1917 = vsub.s32 0, %v1916
      %v1918 = vadd.s32 %v1913, 1
      %vm1919 = vcmp.gt.s32.totalorder %v1918, 0
      %v1920 = vsel %vm1919, %v1918, 0
      %v1921 = vshrl.u32 %v1920, 5
      %v1922 = vand.u32 %v1920, 31
      %v1923 = vsub.s32 32, %v1922
      %v1924 = vshrl.u32 683565275, %v1923
      %v1925 = vshll.u32 683565275, %v1922
      %v1926 = vshrl.u32 2475754826, %v1923
      %v1927 = vor.u32 %v1925, %v1926
      %v1928 = vshll.u32 2475754826, %v1922
      %v1929 = vshrl.u32 2131351028, %v1923
      %v1930 = vor.u32 %v1928, %v1929
      %v1931 = vshll.u32 2131351028, %v1922
      %v1932 = vshrl.u32 2102212464, %v1923
      %v1933 = vor.u32 %v1931, %v1932
      %v1934 = vshll.u32 2102212464, %v1922
      %v1935 = vshrl.u32 920167782, %v1923
      %v1936 = vor.u32 %v1934, %v1935
      %v1937 = vshll.u32 920167782, %v1922
      %v1938 = vshrl.u32 1326507024, %v1923
      %v1939 = vor.u32 %v1937, %v1938
      %vm1940 = vcmp.lt.s32.totalorder %v1921, 1
      %vm1941 = vcmp.lt.s32.totalorder %v1921, 2
      %vm1942 = vcmp.lt.s32.totalorder %v1921, 3
      %vm1943 = vcmp.lt.s32.totalorder %v1921, 4
      %v1944 = vsel %vm1940, %v1924, %v1927
      %v1945 = vsel %vm1943, %v1933, 2102212464
      %v1946 = vsel %vm1942, %v1930, %v1945
      %v1947 = vsel %vm1941, %v1944, %v1946
      %v1948 = vsel %vm1940, %v1927, %v1930
      %v1949 = vsel %vm1943, %v1936, 920167782
      %v1950 = vsel %vm1942, %v1933, %v1949
      %v1951 = vsel %vm1941, %v1948, %v1950
      %v1952 = vsel %vm1940, %v1930, %v1933
      %v1953 = vsel %vm1943, %v1939, 1326507024
      %v1954 = vsel %vm1942, %v1936, %v1953
      %v1955 = vsel %vm1941, %v1952, %v1954
      %v1956 = vshll.u32 %v1916, 8
      %v1957 = vmul.u32.u64.compose %v1956, %v1955
      %v1958 = vextract.low.u32 %v1957
      %v1959 = vextract.high.u32 %v1957
      %v1960 = vmul.u32.u64.compose %v1956, %v1951
      %v1961 = vextract.low.u32 %v1960
      %v1962 = vextract.high.u32 %v1960
      %v1963 = vmul.u32 %v1956, %v1947
      %v1964 = vadd.s32 %v1959, %v1961
      %vm1965 = vc.u32 %v1959, %v1961
      %v1966 = vadd.s32 %v1962, 1
      %v1967 = vsel %vm1965, %v1966, %v1962
      %v1968 = vadd.s32 %v1963, %v1967
      %v1969 = vadd.s32 %v1968, 536870912
      %v1970 = vshrl.u32 %v1969, 30
      %v1971 = vshll.u32 %v1970, 30
      %v1972 = vsub.s32 %v1968, %v1971
      %vm1973 = vcmp.lt.s32.totalorder %v1972, 0
      %v1974 = vsub.s32 0, %v1972
      %v1975 = vsel %vm1973, %v1974, %v1972
      %v1976 = vclz %v1975
      %v1977 = vsub.s32 %v1976, 2
      %vm1978 = vcmp.gt.s32.totalorder 0, %v1977
      %v1979 = vsel %vm1978, 0, %v1977
      %v1980 = vsub.s32 32, %v1979
      %v1981 = vshll.u32 %v1972, %v1979
      %v1982 = vshrl.u32 %v1964, %v1980
      %v1983 = vor.u32 %v1981, %v1982
      %v1984 = vsub.s32 4294967266, %v1979
      %v1985 = vadd.s32 %v1984, 127
      %v1986 = vshll.u32 %v1985, 23
      %v1987 = vor.u32 4788187, %v1986
      %v1988 = vand.u32 2147483647, %v1987
      %v1990 = vcvt.s32.f32 %v1983
      %v1991 = vmul.f32 %v1990, %v1988
      %v1992 = vxor.u32 %v1991, 2147483648
      %v1993 = vsel %vm1910, %v1992, %v1991
      %v1994 = vsub.s32 4, %v1970
      %v1995 = vsel %vm1910, %v1994, %v1970
      %v1996 = vsel %vm1909, %v1573, %v1993
      %v1997 = vsel %vm1909, 0, %v1995
      %v1998 = vcosq.f32.pop %v1996
      %v1999 = vsinq.f32.pop %v1996
      %vm2000 = vweird.f32 %v1573
      %v2001 = vadd.s32 %v1997, 3
      %v2002 = vand.u32 %v2001, 3
      %vm2003 = vcmp.lt.s32.totalorder %v2002, 2
      %vm2004 = vcmp.eq.s32.totalorder %v2002, 0
      %v2005 = vxor.u32 %v1999, 2147483648
      %v2006 = vsel %vm2004, %v1998, %v2005
      %vm2007 = vcmp.eq.s32.totalorder %v2002, 2
      %v2008 = vxor.u32 %v1998, 2147483648
      %v2009 = vsel %vm2007, %v2008, %v1999
      %v2010 = vsel %vm2003, %v2006, %v2009
      %v2011 = vsel %vm2000, nan, %v2010
      %v2012 = vand.u32 2147483647, %v1578
      %vm2013 = vcmp.le.f32.partialorder %v2012, 0.7853982
      %vm2014 = vcmp.lt.s32.totalorder %v1578, 0
      %v2015 = vand.u32 %v1578, 2139095040
      %v2016 = vshrl.u32 %v2015, 23
      %v2017 = vsub.s32 %v2016, 127
      %v2018 = vand.u32 2147483647, %v1578
      %v2019 = vand.u32 %v2018, 8388607
      %v2020 = vor.u32 %v2019, 8388608
      %v2021 = vsub.s32 0, %v2020
      %v2022 = vadd.s32 %v2017, 1
      %vm2023 = vcmp.gt.s32.totalorder %v2022, 0
      %v2024 = vsel %vm2023, %v2022, 0
      %v2025 = vshrl.u32 %v2024, 5
      %v2026 = vand.u32 %v2024, 31
      %v2027 = vsub.s32 32, %v2026
      %v2028 = vshrl.u32 683565275, %v2027
      %v2029 = vshll.u32 683565275, %v2026
      %v2030 = vshrl.u32 2475754826, %v2027
      %v2031 = vor.u32 %v2029, %v2030
      %v2032 = vshll.u32 2475754826, %v2026
      %v2033 = vshrl.u32 2131351028, %v2027
      %v2034 = vor.u32 %v2032, %v2033
      %v2035 = vshll.u32 2131351028, %v2026
      %v2036 = vshrl.u32 2102212464, %v2027
      %v2037 = vor.u32 %v2035, %v2036
      %v2038 = vshll.u32 2102212464, %v2026
      %v2039 = vshrl.u32 920167782, %v2027
      %v2040 = vor.u32 %v2038, %v2039
      %v2041 = vshll.u32 920167782, %v2026
      %v2042 = vshrl.u32 1326507024, %v2027
      %v2043 = vor.u32 %v2041, %v2042
      %vm2044 = vcmp.lt.s32.totalorder %v2025, 1
      %vm2045 = vcmp.lt.s32.totalorder %v2025, 2
      %vm2046 = vcmp.lt.s32.totalorder %v2025, 3
      %vm2047 = vcmp.lt.s32.totalorder %v2025, 4
      %v2048 = vsel %vm2044, %v2028, %v2031
      %v2049 = vsel %vm2047, %v2037, 2102212464
      %v2050 = vsel %vm2046, %v2034, %v2049
      %v2051 = vsel %vm2045, %v2048, %v2050
      %v2052 = vsel %vm2044, %v2031, %v2034
      %v2053 = vsel %vm2047, %v2040, 920167782
      %v2054 = vsel %vm2046, %v2037, %v2053
      %v2055 = vsel %vm2045, %v2052, %v2054
      %v2056 = vsel %vm2044, %v2034, %v2037
      %v2057 = vsel %vm2047, %v2043, 1326507024
      %v2058 = vsel %vm2046, %v2040, %v2057
      %v2059 = vsel %vm2045, %v2056, %v2058
      %v2060 = vshll.u32 %v2020, 8
      %v2061 = vmul.u32.u64.compose %v2060, %v2059
      %v2062 = vextract.low.u32 %v2061
      %v2063 = vextract.high.u32 %v2061
      %v2064 = vmul.u32.u64.compose %v2060, %v2055
      %v2065 = vextract.low.u32 %v2064
      %v2066 = vextract.high.u32 %v2064
      %v2067 = vmul.u32 %v2060, %v2051
      %v2068 = vadd.s32 %v2063, %v2065
      %vm2069 = vc.u32 %v2063, %v2065
      %v2070 = vadd.s32 %v2066, 1
      %v2071 = vsel %vm2069, %v2070, %v2066
      %v2072 = vadd.s32 %v2067, %v2071
      %v2073 = vadd.s32 %v2072, 536870912
      %v2074 = vshrl.u32 %v2073, 30
      %v2075 = vshll.u32 %v2074, 30
      %v2076 = vsub.s32 %v2072, %v2075
      %vm2077 = vcmp.lt.s32.totalorder %v2076, 0
      %v2078 = vsub.s32 0, %v2076
      %v2079 = vsel %vm2077, %v2078, %v2076
      %v2080 = vclz %v2079
      %v2081 = vsub.s32 %v2080, 2
      %vm2082 = vcmp.gt.s32.totalorder 0, %v2081
      %v2083 = vsel %vm2082, 0, %v2081
      %v2084 = vsub.s32 32, %v2083
      %v2085 = vshll.u32 %v2076, %v2083
      %v2086 = vshrl.u32 %v2068, %v2084
      %v2087 = vor.u32 %v2085, %v2086
      %v2088 = vsub.s32 4294967266, %v2083
      %v2089 = vadd.s32 %v2088, 127
      %v2090 = vshll.u32 %v2089, 23
      %v2091 = vor.u32 4788187, %v2090
      %v2092 = vand.u32 2147483647, %v2091
      %v2094 = vcvt.s32.f32 %v2087
      %v2095 = vmul.f32 %v2094, %v2092
      %v2096 = vxor.u32 %v2095, 2147483648
      %v2097 = vsel %vm2014, %v2096, %v2095
      %v2098 = vsub.s32 4, %v2074
      %v2099 = vsel %vm2014, %v2098, %v2074
      %v2100 = vsel %vm2013, %v1578, %v2097
      %v2101 = vsel %vm2013, 0, %v2099
      %v2102 = vcosq.f32.pop %v2100
      %v2103 = vsinq.f32.pop %v2100
      %vm2104 = vweird.f32 %v1578
      %v2105 = vadd.s32 %v2101, 3
      %v2106 = vand.u32 %v2105, 3
      %vm2107 = vcmp.lt.s32.totalorder %v2106, 2
      %vm2108 = vcmp.eq.s32.totalorder %v2106, 0
      %v2109 = vxor.u32 %v2103, 2147483648
      %v2110 = vsel %vm2108, %v2102, %v2109
      %vm2111 = vcmp.eq.s32.totalorder %v2106, 2
      %v2112 = vxor.u32 %v2102, 2147483648
      %v2113 = vsel %vm2111, %v2112, %v2103
      %v2114 = vsel %vm2107, %v2110, %v2113
      %v2115 = vsel %vm2104, nan, %v2114
      %v2116 = vand.u32 2147483647, %v1583
      %vm2117 = vcmp.le.f32.partialorder %v2116, 0.7853982
      %vm2118 = vcmp.lt.s32.totalorder %v1583, 0
      %v2119 = vand.u32 %v1583, 2139095040
      %v2120 = vshrl.u32 %v2119, 23
      %v2121 = vsub.s32 %v2120, 127
      %v2122 = vand.u32 2147483647, %v1583
      %v2123 = vand.u32 %v2122, 8388607
      %v2124 = vor.u32 %v2123, 8388608
      %v2125 = vsub.s32 0, %v2124
      %v2126 = vadd.s32 %v2121, 1
      %vm2127 = vcmp.gt.s32.totalorder %v2126, 0
      %v2128 = vsel %vm2127, %v2126, 0
      %v2129 = vshrl.u32 %v2128, 5
      %v2130 = vand.u32 %v2128, 31
      %v2131 = vsub.s32 32, %v2130
      %v2132 = vshrl.u32 683565275, %v2131
      %v2133 = vshll.u32 683565275, %v2130
      %v2134 = vshrl.u32 2475754826, %v2131
      %v2135 = vor.u32 %v2133, %v2134
      %v2136 = vshll.u32 2475754826, %v2130
      %v2137 = vshrl.u32 2131351028, %v2131
      %v2138 = vor.u32 %v2136, %v2137
      %v2139 = vshll.u32 2131351028, %v2130
      %v2140 = vshrl.u32 2102212464, %v2131
      %v2141 = vor.u32 %v2139, %v2140
      %v2142 = vshll.u32 2102212464, %v2130
      %v2143 = vshrl.u32 920167782, %v2131
      %v2144 = vor.u32 %v2142, %v2143
      %v2145 = vshll.u32 920167782, %v2130
      %v2146 = vshrl.u32 1326507024, %v2131
      %v2147 = vor.u32 %v2145, %v2146
      %vm2148 = vcmp.lt.s32.totalorder %v2129, 1
      %vm2149 = vcmp.lt.s32.totalorder %v2129, 2
      %vm2150 = vcmp.lt.s32.totalorder %v2129, 3
      %vm2151 = vcmp.lt.s32.totalorder %v2129, 4
      %v2152 = vsel %vm2148, %v2132, %v2135
      %v2153 = vsel %vm2151, %v2141, 2102212464
      %v2154 = vsel %vm2150, %v2138, %v2153
      %v2155 = vsel %vm2149, %v2152, %v2154
      %v2156 = vsel %vm2148, %v2135, %v2138
      %v2157 = vsel %vm2151, %v2144, 920167782
      %v2158 = vsel %vm2150, %v2141, %v2157
      %v2159 = vsel %vm2149, %v2156, %v2158
      %v2160 = vsel %vm2148, %v2138, %v2141
      %v2161 = vsel %vm2151, %v2147, 1326507024
      %v2162 = vsel %vm2150, %v2144, %v2161
      %v2163 = vsel %vm2149, %v2160, %v2162
      %v2164 = vshll.u32 %v2124, 8
      %v2165 = vmul.u32.u64.compose %v2164, %v2163
      %v2166 = vextract.low.u32 %v2165
      %v2167 = vextract.high.u32 %v2165
      %v2168 = vmul.u32.u64.compose %v2164, %v2159
      %v2169 = vextract.low.u32 %v2168
      %v2170 = vextract.high.u32 %v2168
      %v2171 = vmul.u32 %v2164, %v2155
      %v2172 = vadd.s32 %v2167, %v2169
      %vm2173 = vc.u32 %v2167, %v2169
      %v2174 = vadd.s32 %v2170, 1
      %v2175 = vsel %vm2173, %v2174, %v2170
      %v2176 = vadd.s32 %v2171, %v2175
      %v2177 = vadd.s32 %v2176, 536870912
      %v2178 = vshrl.u32 %v2177, 30
      %v2179 = vshll.u32 %v2178, 30
      %v2180 = vsub.s32 %v2176, %v2179
      %vm2181 = vcmp.lt.s32.totalorder %v2180, 0
      %v2182 = vsub.s32 0, %v2180
      %v2183 = vsel %vm2181, %v2182, %v2180
      %v2184 = vclz %v2183
      %v2185 = vsub.s32 %v2184, 2
      %vm2186 = vcmp.gt.s32.totalorder 0, %v2185
      %v2187 = vsel %vm2186, 0, %v2185
      %v2188 = vsub.s32 32, %v2187
      %v2189 = vshll.u32 %v2180, %v2187
      %v2190 = vshrl.u32 %v2172, %v2188
      %v2191 = vor.u32 %v2189, %v2190
      %v2192 = vsub.s32 4294967266, %v2187
      %v2193 = vadd.s32 %v2192, 127
      %v2194 = vshll.u32 %v2193, 23
      %v2195 = vor.u32 4788187, %v2194
      %v2196 = vand.u32 2147483647, %v2195
      %v2198 = vcvt.s32.f32 %v2191
      %v2199 = vmul.f32 %v2198, %v2196
      %v2200 = vxor.u32 %v2199, 2147483648
      %v2201 = vsel %vm2118, %v2200, %v2199
      %v2202 = vsub.s32 4, %v2178
      %v2203 = vsel %vm2118, %v2202, %v2178
      %v2204 = vsel %vm2117, %v1583, %v2201
      %v2205 = vsel %vm2117, 0, %v2203
      %v2206 = vcosq.f32.pop %v2204
      %v2207 = vsinq.f32.pop %v2204
      %vm2208 = vweird.f32 %v1583
      %v2209 = vadd.s32 %v2205, 3
      %v2210 = vand.u32 %v2209, 3
      %vm2211 = vcmp.lt.s32.totalorder %v2210, 2
      %vm2212 = vcmp.eq.s32.totalorder %v2210, 0
      %v2213 = vxor.u32 %v2207, 2147483648
      %v2214 = vsel %vm2212, %v2206, %v2213
      %vm2215 = vcmp.eq.s32.totalorder %v2210, 2
      %v2216 = vxor.u32 %v2206, 2147483648
      %v2217 = vsel %vm2215, %v2216, %v2207
      %v2218 = vsel %vm2211, %v2214, %v2217
      %v2219 = vsel %vm2208, nan, %v2218
      %v2220 = vand.u32 2147483647, %v1588
      %vm2221 = vcmp.le.f32.partialorder %v2220, 0.7853982
      %vm2222 = vcmp.lt.s32.totalorder %v1588, 0
      %v2223 = vand.u32 %v1588, 2139095040
      %v2224 = vshrl.u32 %v2223, 23
      %v2225 = vsub.s32 %v2224, 127
      %v2226 = vand.u32 2147483647, %v1588
      %v2227 = vand.u32 %v2226, 8388607
      %v2228 = vor.u32 %v2227, 8388608
      %v2229 = vsub.s32 0, %v2228
      %v2230 = vadd.s32 %v2225, 1
      %vm2231 = vcmp.gt.s32.totalorder %v2230, 0
      %v2232 = vsel %vm2231, %v2230, 0
      %v2233 = vshrl.u32 %v2232, 5
      %v2234 = vand.u32 %v2232, 31
      %v2235 = vsub.s32 32, %v2234
      %v2236 = vshrl.u32 683565275, %v2235
      %v2237 = vshll.u32 683565275, %v2234
      %v2238 = vshrl.u32 2475754826, %v2235
      %v2239 = vor.u32 %v2237, %v2238
      %v2240 = vshll.u32 2475754826, %v2234
      %v2241 = vshrl.u32 2131351028, %v2235
      %v2242 = vor.u32 %v2240, %v2241
      %v2243 = vshll.u32 2131351028, %v2234
      %v2244 = vshrl.u32 2102212464, %v2235
      %v2245 = vor.u32 %v2243, %v2244
      %v2246 = vshll.u32 2102212464, %v2234
      %v2247 = vshrl.u32 920167782, %v2235
      %v2248 = vor.u32 %v2246, %v2247
      %v2249 = vshll.u32 920167782, %v2234
      %v2250 = vshrl.u32 1326507024, %v2235
      %v2251 = vor.u32 %v2249, %v2250
      %vm2252 = vcmp.lt.s32.totalorder %v2233, 1
      %vm2253 = vcmp.lt.s32.totalorder %v2233, 2
      %vm2254 = vcmp.lt.s32.totalorder %v2233, 3
      %vm2255 = vcmp.lt.s32.totalorder %v2233, 4
      %v2256 = vsel %vm2252, %v2236, %v2239
      %v2257 = vsel %vm2255, %v2245, 2102212464
      %v2258 = vsel %vm2254, %v2242, %v2257
      %v2259 = vsel %vm2253, %v2256, %v2258
      %v2260 = vsel %vm2252, %v2239, %v2242
      %v2261 = vsel %vm2255, %v2248, 920167782
      %v2262 = vsel %vm2254, %v2245, %v2261
      %v2263 = vsel %vm2253, %v2260, %v2262
      %v2264 = vsel %vm2252, %v2242, %v2245
      %v2265 = vsel %vm2255, %v2251, 1326507024
      %v2266 = vsel %vm2254, %v2248, %v2265
      %v2267 = vsel %vm2253, %v2264, %v2266
      %v2268 = vshll.u32 %v2228, 8
      %v2269 = vmul.u32.u64.compose %v2268, %v2267
      %v2270 = vextract.low.u32 %v2269
      %v2271 = vextract.high.u32 %v2269
      %v2272 = vmul.u32.u64.compose %v2268, %v2263
      %v2273 = vextract.low.u32 %v2272
      %v2274 = vextract.high.u32 %v2272
      %v2275 = vmul.u32 %v2268, %v2259
      %v2276 = vadd.s32 %v2271, %v2273
      %vm2277 = vc.u32 %v2271, %v2273
      %v2278 = vadd.s32 %v2274, 1
      %v2279 = vsel %vm2277, %v2278, %v2274
      %v2280 = vadd.s32 %v2275, %v2279
      %v2281 = vadd.s32 %v2280, 536870912
      %v2282 = vshrl.u32 %v2281, 30
      %v2283 = vshll.u32 %v2282, 30
      %v2284 = vsub.s32 %v2280, %v2283
      %vm2285 = vcmp.lt.s32.totalorder %v2284, 0
      %v2286 = vsub.s32 0, %v2284
      %v2287 = vsel %vm2285, %v2286, %v2284
      %v2288 = vclz %v2287
      %v2289 = vsub.s32 %v2288, 2
      %vm2290 = vcmp.gt.s32.totalorder 0, %v2289
      %v2291 = vsel %vm2290, 0, %v2289
      %v2292 = vsub.s32 32, %v2291
      %v2293 = vshll.u32 %v2284, %v2291
      %v2294 = vshrl.u32 %v2276, %v2292
      %v2295 = vor.u32 %v2293, %v2294
      %v2296 = vsub.s32 4294967266, %v2291
      %v2297 = vadd.s32 %v2296, 127
      %v2298 = vshll.u32 %v2297, 23
      %v2299 = vor.u32 4788187, %v2298
      %v2300 = vand.u32 2147483647, %v2299
      %v2302 = vcvt.s32.f32 %v2295
      %v2303 = vmul.f32 %v2302, %v2300
      %v2304 = vxor.u32 %v2303, 2147483648
      %v2305 = vsel %vm2222, %v2304, %v2303
      %v2306 = vsub.s32 4, %v2282
      %v2307 = vsel %vm2222, %v2306, %v2282
      %v2308 = vsel %vm2221, %v1588, %v2305
      %v2309 = vsel %vm2221, 0, %v2307
      %v2310 = vcosq.f32.pop %v2308
      %v2311 = vsinq.f32.pop %v2308
      %vm2312 = vweird.f32 %v1588
      %v2313 = vadd.s32 %v2309, 3
      %v2314 = vand.u32 %v2313, 3
      %vm2315 = vcmp.lt.s32.totalorder %v2314, 2
      %vm2316 = vcmp.eq.s32.totalorder %v2314, 0
      %v2317 = vxor.u32 %v2311, 2147483648
      %v2318 = vsel %vm2316, %v2310, %v2317
      %vm2319 = vcmp.eq.s32.totalorder %v2314, 2
      %v2320 = vxor.u32 %v2310, 2147483648
      %v2321 = vsel %vm2319, %v2320, %v2311
      %v2322 = vsel %vm2315, %v2318, %v2321
      %v2323 = vsel %vm2312, nan, %v2322
      %v2324 = vand.u32 2147483647, %v1593
      %vm2325 = vcmp.le.f32.partialorder %v2324, 0.7853982
      %vm2326 = vcmp.lt.s32.totalorder %v1593, 0
      %v2327 = vand.u32 %v1593, 2139095040
      %v2328 = vshrl.u32 %v2327, 23
      %v2329 = vsub.s32 %v2328, 127
      %v2330 = vand.u32 2147483647, %v1593
      %v2331 = vand.u32 %v2330, 8388607
      %v2332 = vor.u32 %v2331, 8388608
      %v2333 = vsub.s32 0, %v2332
      %v2334 = vadd.s32 %v2329, 1
      %vm2335 = vcmp.gt.s32.totalorder %v2334, 0
      %v2336 = vsel %vm2335, %v2334, 0
      %v2337 = vshrl.u32 %v2336, 5
      %v2338 = vand.u32 %v2336, 31
      %v2339 = vsub.s32 32, %v2338
      %v2340 = vshrl.u32 683565275, %v2339
      %v2341 = vshll.u32 683565275, %v2338
      %v2342 = vshrl.u32 2475754826, %v2339
      %v2343 = vor.u32 %v2341, %v2342
      %v2344 = vshll.u32 2475754826, %v2338
      %v2345 = vshrl.u32 2131351028, %v2339
      %v2346 = vor.u32 %v2344, %v2345
      %v2347 = vshll.u32 2131351028, %v2338
      %v2348 = vshrl.u32 2102212464, %v2339
      %v2349 = vor.u32 %v2347, %v2348
      %v2350 = vshll.u32 2102212464, %v2338
      %v2351 = vshrl.u32 920167782, %v2339
      %v2352 = vor.u32 %v2350, %v2351
      %v2353 = vshll.u32 920167782, %v2338
      %v2354 = vshrl.u32 1326507024, %v2339
      %v2355 = vor.u32 %v2353, %v2354
      %vm2356 = vcmp.lt.s32.totalorder %v2337, 1
      %vm2357 = vcmp.lt.s32.totalorder %v2337, 2
      %vm2358 = vcmp.lt.s32.totalorder %v2337, 3
      %vm2359 = vcmp.lt.s32.totalorder %v2337, 4
      %v2360 = vsel %vm2356, %v2340, %v2343
      %v2361 = vsel %vm2359, %v2349, 2102212464
      %v2362 = vsel %vm2358, %v2346, %v2361
      %v2363 = vsel %vm2357, %v2360, %v2362
      %v2364 = vsel %vm2356, %v2343, %v2346
      %v2365 = vsel %vm2359, %v2352, 920167782
      %v2366 = vsel %vm2358, %v2349, %v2365
      %v2367 = vsel %vm2357, %v2364, %v2366
      %v2368 = vsel %vm2356, %v2346, %v2349
      %v2369 = vsel %vm2359, %v2355, 1326507024
      %v2370 = vsel %vm2358, %v2352, %v2369
      %v2371 = vsel %vm2357, %v2368, %v2370
      %v2372 = vshll.u32 %v2332, 8
      %v2373 = vmul.u32.u64.compose %v2372, %v2371
      %v2374 = vextract.low.u32 %v2373
      %v2375 = vextract.high.u32 %v2373
      %v2376 = vmul.u32.u64.compose %v2372, %v2367
      %v2377 = vextract.low.u32 %v2376
      %v2378 = vextract.high.u32 %v2376
      %v2379 = vmul.u32 %v2372, %v2363
      %v2380 = vadd.s32 %v2375, %v2377
      %vm2381 = vc.u32 %v2375, %v2377
      %v2382 = vadd.s32 %v2378, 1
      %v2383 = vsel %vm2381, %v2382, %v2378
      %v2384 = vadd.s32 %v2379, %v2383
      %v2385 = vadd.s32 %v2384, 536870912
      %v2386 = vshrl.u32 %v2385, 30
      %v2387 = vshll.u32 %v2386, 30
      %v2388 = vsub.s32 %v2384, %v2387
      %vm2389 = vcmp.lt.s32.totalorder %v2388, 0
      %v2390 = vsub.s32 0, %v2388
      %v2391 = vsel %vm2389, %v2390, %v2388
      %v2392 = vclz %v2391
      %v2393 = vsub.s32 %v2392, 2
      %vm2394 = vcmp.gt.s32.totalorder 0, %v2393
      %v2395 = vsel %vm2394, 0, %v2393
      %v2396 = vsub.s32 32, %v2395
      %v2397 = vshll.u32 %v2388, %v2395
      %v2398 = vshrl.u32 %v2380, %v2396
      %v2399 = vor.u32 %v2397, %v2398
      %v2400 = vsub.s32 4294967266, %v2395
      %v2401 = vadd.s32 %v2400, 127
      %v2402 = vshll.u32 %v2401, 23
      %v2403 = vor.u32 4788187, %v2402
      %v2404 = vand.u32 2147483647, %v2403
      %v2406 = vcvt.s32.f32 %v2399
      %v2407 = vmul.f32 %v2406, %v2404
      %v2408 = vxor.u32 %v2407, 2147483648
      %v2409 = vsel %vm2326, %v2408, %v2407
      %v2410 = vsub.s32 4, %v2386
      %v2411 = vsel %vm2326, %v2410, %v2386
      %v2412 = vsel %vm2325, %v1593, %v2409
      %v2413 = vsel %vm2325, 0, %v2411
      %v2414 = vcosq.f32.pop %v2412
      %v2415 = vsinq.f32.pop %v2412
      %vm2416 = vweird.f32 %v1593
      %v2417 = vadd.s32 %v2413, 3
      %v2418 = vand.u32 %v2417, 3
      %vm2419 = vcmp.lt.s32.totalorder %v2418, 2
      %vm2420 = vcmp.eq.s32.totalorder %v2418, 0
      %v2421 = vxor.u32 %v2415, 2147483648
      %v2422 = vsel %vm2420, %v2414, %v2421
      %vm2423 = vcmp.eq.s32.totalorder %v2418, 2
      %v2424 = vxor.u32 %v2414, 2147483648
      %v2425 = vsel %vm2423, %v2424, %v2415
      %v2426 = vsel %vm2419, %v2422, %v2425
      %v2427 = vsel %vm2416, nan, %v2426
      %v2428 = vld [vmem:[%s8] sm:$0xff]
      %v2429 = vld [vmem:[%s8 + $0x8] sm:$0xff]
      %v2430 = vld [vmem:[%s8 + $0x10] sm:$0xff]
      %v2431 = vld [vmem:[%s8 + $0x18] sm:$0xff]
      %v2432 = vld [vmem:[%s8 + $0x20] sm:$0xff]
      %v2433 = vld [vmem:[%s8 + $0x28] sm:$0xff]
      %v2434 = vld [vmem:[%s8 + $0x30] sm:$0xff]
      %v2435 = vld [vmem:[%s8 + $0x38] sm:$0xff]
      %v2436 = vld [vmem:[%s8 + $0x40] sm:$0xff]
      %v2437 = vld [vmem:[%s8 + $0x48] sm:$0xff]
      %v2438 = vld [vmem:[%s8 + $0x50] sm:$0xff]
      %v2439 = vld [vmem:[%s8 + $0x58] sm:$0xff]
      %v2440 = vld [vmem:[%s8 + $0x60] sm:$0xff]
      %v2441 = vld [vmem:[%s8 + $0x68] sm:$0xff]
      %v2442 = vld [vmem:[%s8 + $0x70] sm:$0xff]
      %v2443 = vld [vmem:[%s8 + $0x78] sm:$0xff]
      %v2444 = vld [vmem:[%s9] sm:$0x1]
      %v2446 = vlaneseq
      %v2447 = vshrl.u32 %v2446, 7
      %v2448 = vsub.s32 0, %v2447
      %v2449 = vrot.slane %v2444, %v2448
      %2451 = vmatprep.subr.mxu0 0.0
      %2452 = vmatpush1.msra.mxu0 %v2428
      %2453 = vmatprep.subr.mxu0 0.0
      %2454 = vmatpush1.msra.mxu0 %v2429
      %2455 = vmatprep.subr.mxu0 0.0
      %2456 = vmatpush1.msra.mxu0 %v2430
      %2457 = vmatprep.subr.mxu0 0.0
      %2458 = vmatpush1.msra.mxu0 %v2431
      %2459 = vmatprep.subr.mxu0 0.0
      %2460 = vmatpush1.msra.mxu0 %v2432
      %2461 = vmatprep.subr.mxu0 0.0
      %2462 = vmatpush1.msra.mxu0 %v2433
      %2463 = vmatprep.subr.mxu0 0.0
      %2464 = vmatpush1.msra.mxu0 %v2434
      %2465 = vmatprep.subr.mxu0 0.0
      %2466 = vmatpush1.msra.mxu0 %v2435
      %2467 = vmatprep.subr.mxu0 0.0
      %2468 = vmatpush1.msra.mxu0 %v2436
      %2469 = vmatprep.subr.mxu0 0.0
      %2470 = vmatpush1.msra.mxu0 %v2437
      %2471 = vmatprep.subr.mxu0 0.0
      %2472 = vmatpush1.msra.mxu0 %v2438
      %2473 = vmatprep.subr.mxu0 0.0
      %2474 = vmatpush1.msra.mxu0 %v2439
      %2475 = vmatprep.subr.mxu0 0.0
      %2476 = vmatpush1.msra.mxu0 %v2440
      %2477 = vmatprep.subr.mxu0 0.0
      %2478 = vmatpush1.msra.mxu0 %v2441
      %2479 = vmatprep.subr.mxu0 0.0
      %2480 = vmatpush1.msra.mxu0 %v2442
      %2481 = vmatprep.subr.mxu0 0.0
      %2482 = vmatpush1.msra.mxu0 %v2443
      %2483 = vmatprep.subr.mxu0 0.0
      %2484 = vmatpush1.msra.mxu0 0.0
      %2485 = vmatprep.subr.mxu0 0.0
      %2486 = vmatpush1.msra.mxu0 0.0
      %2487 = vmatprep.subr.mxu0 0.0
      %2488 = vmatpush1.msra.mxu0 0.0
      %2489 = vmatprep.subr.mxu0 0.0
      %2490 = vmatpush1.msra.mxu0 0.0
      %2491 = vmatprep.subr.mxu0 0.0
      %2492 = vmatpush1.msra.mxu0 0.0
      %2493 = vmatprep.subr.mxu0 0.0
      %2494 = vmatpush1.msra.mxu0 0.0
      %2495 = vmatprep.subr.mxu0 0.0
      %2496 = vmatpush1.msra.mxu0 0.0
      %2497 = vmatprep.subr.mxu0 0.0
      %2498 = vmatpush1.msra.mxu0 0.0
      %2499 = vmatprep.subr.mxu0 0.0
      %2500 = vmatpush1.msra.mxu0 0.0
      %2501 = vmatprep.subr.mxu0 0.0
      %2502 = vmatpush1.msra.mxu0 0.0
      %2503 = vmatprep.subr.mxu0 0.0
      %2504 = vmatpush1.msra.mxu0 0.0
      %2505 = vmatprep.subr.mxu0 0.0
      %2506 = vmatpush1.msra.mxu0 0.0
      %2507 = vmatprep.subr.mxu0 0.0
      %2508 = vmatpush1.msra.mxu0 0.0
      %2509 = vmatprep.subr.mxu0 0.0
      %2510 = vmatpush1.msra.mxu0 0.0
      %2511 = vmatprep.subr.mxu0 0.0
      %2512 = vmatpush1.msra.mxu0 0.0
      %2513 = vmatprep.subr.mxu0 0.0
      %2514 = vmatpush1.msra.mxu0 0.0
      %2515 = vmatprep.mubr.f32.mxu0 0.0
      %2516 = vmatmul.mubr.f32.gmra.mrb[0].mxu0 %v1699
      %v2517 = vpop.f32.mrb[0].mxu0
      %v2518 = vadd.f32 %v2449, %v2517
      %v2519 = vpop.f32.mrb[0].mxu0
      %2520 = vmatprep.mubr.f32.mxu0 0.0
      %2521 = vmatmul.mubr.f32.gmra.mrb[0].mxu0 %v1803
      %v2522 = vpop.f32.mrb[0].mxu0
      %v2523 = vadd.f32 %v2449, %v2522
      %v2524 = vpop.f32.mrb[0].mxu0
      %2525 = vmatprep.mubr.f32.mxu0 0.0
      %2526 = vmatmul.mubr.f32.gmra.mrb[0].mxu0 %v1907
      %v2527 = vpop.f32.mrb[0].mxu0
      %v2528 = vadd.f32 %v2449, %v2527
      %v2529 = vpop.f32.mrb[0].mxu0
      %2530 = vmatprep.mubr.f32.mxu0 0.0
      %2531 = vmatmul.mubr.f32.gmra.mrb[0].mxu0 %v2011
      %v2532 = vpop.f32.mrb[0].mxu0
      %v2533 = vadd.f32 %v2449, %v2532
      %v2534 = vpop.f32.mrb[0].mxu0
      %2535 = vmatprep.mubr.f32.mxu0 0.0
      %2536 = vmatmul.mubr.f32.gmra.mrb[0].mxu0 %v2115
      %v2537 = vpop.f32.mrb[0].mxu0
      %v2538 = vadd.f32 %v2449, %v2537
      %v2539 = vpop.f32.mrb[0].mxu0
      %2540 = vmatprep.mubr.f32.mxu0 0.0
      %2541 = vmatmul.mubr.f32.gmra.mrb[0].mxu0 %v2219
      %v2542 = vpop.f32.mrb[0].mxu0
      %v2543 = vadd.f32 %v2449, %v2542
      %v2544 = vpop.f32.mrb[0].mxu0
      %2545 = vmatprep.mubr.f32.mxu0 0.0
      %2546 = vmatmul.mubr.f32.gmra.mrb[0].mxu0 %v2323
      %v2547 = vpop.f32.mrb[0].mxu0
      %v2548 = vadd.f32 %v2449, %v2547
      %v2549 = vpop.f32.mrb[0].mxu0
      %2550 = vmatprep.mubr.f32.mxu0 0.0
      %2551 = vmatmul.mubr.f32.gmra.mrb[0].mxu0 %v2427
      %v2552 = vpop.f32.mrb[0].mxu0
      %v2553 = vadd.f32 %v2449, %v2552
      %v2554 = vpop.f32.mrb[0].mxu0
      %2555 = vdwg.mxu0
      %v2556 = vand.u32 2147483647, %v2518
      %vm2557 = vcmp.le.f32.partialorder %v2556, 0.7853982
      %vm2558 = vcmp.lt.s32.totalorder %v2518, 0
      %v2559 = vand.u32 %v2518, 2139095040
      %v2560 = vshrl.u32 %v2559, 23
      %v2561 = vsub.s32 %v2560, 127
      %v2562 = vand.u32 2147483647, %v2518
      %v2563 = vand.u32 %v2562, 8388607
      %v2564 = vor.u32 %v2563, 8388608
      %v2565 = vsub.s32 0, %v2564
      %v2566 = vadd.s32 %v2561, 1
      %vm2567 = vcmp.gt.s32.totalorder %v2566, 0
      %v2568 = vsel %vm2567, %v2566, 0
      %v2569 = vshrl.u32 %v2568, 5
      %v2570 = vand.u32 %v2568, 31
      %v2571 = vsub.s32 32, %v2570
      %v2572 = vshrl.u32 683565275, %v2571
      %v2573 = vshll.u32 683565275, %v2570
      %v2574 = vshrl.u32 2475754826, %v2571
      %v2575 = vor.u32 %v2573, %v2574
      %v2576 = vshll.u32 2475754826, %v2570
      %v2577 = vshrl.u32 2131351028, %v2571
      %v2578 = vor.u32 %v2576, %v2577
      %v2579 = vshll.u32 2131351028, %v2570
      %v2580 = vshrl.u32 2102212464, %v2571
      %v2581 = vor.u32 %v2579, %v2580
      %v2582 = vshll.u32 2102212464, %v2570
      %v2583 = vshrl.u32 920167782, %v2571
      %v2584 = vor.u32 %v2582, %v2583
      %v2585 = vshll.u32 920167782, %v2570
      %v2586 = vshrl.u32 1326507024, %v2571
      %v2587 = vor.u32 %v2585, %v2586
      %vm2588 = vcmp.lt.s32.totalorder %v2569, 1
      %vm2589 = vcmp.lt.s32.totalorder %v2569, 2
      %vm2590 = vcmp.lt.s32.totalorder %v2569, 3
      %vm2591 = vcmp.lt.s32.totalorder %v2569, 4
      %v2592 = vsel %vm2588, %v2572, %v2575
      %v2593 = vsel %vm2591, %v2581, 2102212464
      %v2594 = vsel %vm2590, %v2578, %v2593
      %v2595 = vsel %vm2589, %v2592, %v2594
      %v2596 = vsel %vm2588, %v2575, %v2578
      %v2597 = vsel %vm2591, %v2584, 920167782
      %v2598 = vsel %vm2590, %v2581, %v2597
      %v2599 = vsel %vm2589, %v2596, %v2598
      %v2600 = vsel %vm2588, %v2578, %v2581
      %v2601 = vsel %vm2591, %v2587, 1326507024
      %v2602 = vsel %vm2590, %v2584, %v2601
      %v2603 = vsel %vm2589, %v2600, %v2602
      %v2604 = vshll.u32 %v2564, 8
      %v2605 = vmul.u32.u64.compose %v2604, %v2603
      %v2606 = vextract.low.u32 %v2605
      %v2607 = vextract.high.u32 %v2605
      %v2608 = vmul.u32.u64.compose %v2604, %v2599
      %v2609 = vextract.low.u32 %v2608
      %v2610 = vextract.high.u32 %v2608
      %v2611 = vmul.u32 %v2604, %v2595
      %v2612 = vadd.s32 %v2607, %v2609
      %vm2613 = vc.u32 %v2607, %v2609
      %v2614 = vadd.s32 %v2610, 1
      %v2615 = vsel %vm2613, %v2614, %v2610
      %v2616 = vadd.s32 %v2611, %v2615
      %v2617 = vadd.s32 %v2616, 536870912
      %v2618 = vshrl.u32 %v2617, 30
      %v2619 = vshll.u32 %v2618, 30
      %v2620 = vsub.s32 %v2616, %v2619
      %vm2621 = vcmp.lt.s32.totalorder %v2620, 0
      %v2622 = vsub.s32 0, %v2620
      %v2623 = vsel %vm2621, %v2622, %v2620
      %v2624 = vclz %v2623
      %v2625 = vsub.s32 %v2624, 2
      %vm2626 = vcmp.gt.s32.totalorder 0, %v2625
      %v2627 = vsel %vm2626, 0, %v2625
      %v2628 = vsub.s32 32, %v2627
      %v2629 = vshll.u32 %v2620, %v2627
      %v2630 = vshrl.u32 %v2612, %v2628
      %v2631 = vor.u32 %v2629, %v2630
      %v2632 = vsub.s32 4294967266, %v2627
      %v2633 = vadd.s32 %v2632, 127
      %v2634 = vshll.u32 %v2633, 23
      %v2635 = vor.u32 4788187, %v2634
      %v2636 = vand.u32 2147483647, %v2635
      %v2638 = vcvt.s32.f32 %v2631
      %v2639 = vmul.f32 %v2638, %v2636
      %v2640 = vxor.u32 %v2639, 2147483648
      %v2641 = vsel %vm2558, %v2640, %v2639
      %v2642 = vsub.s32 4, %v2618
      %v2643 = vsel %vm2558, %v2642, %v2618
      %v2644 = vsel %vm2557, %v2518, %v2641
      %v2645 = vsel %vm2557, 0, %v2643
      %v2646 = vcosq.f32.pop %v2644
      %v2647 = vsinq.f32.pop %v2644
      %vm2648 = vweird.f32 %v2518
      %v2649 = vadd.s32 %v2645, 3
      %v2650 = vand.u32 %v2649, 3
      %vm2651 = vcmp.lt.s32.totalorder %v2650, 2
      %vm2652 = vcmp.eq.s32.totalorder %v2650, 0
      %v2653 = vxor.u32 %v2647, 2147483648
      %v2654 = vsel %vm2652, %v2646, %v2653
      %vm2655 = vcmp.eq.s32.totalorder %v2650, 2
      %v2656 = vxor.u32 %v2646, 2147483648
      %v2657 = vsel %vm2655, %v2656, %v2647
      %v2658 = vsel %vm2651, %v2654, %v2657
      %v2659 = vsel %vm2648, nan, %v2658
      %v2660 = vand.u32 2147483647, %v2523
      %vm2661 = vcmp.le.f32.partialorder %v2660, 0.7853982
      %vm2662 = vcmp.lt.s32.totalorder %v2523, 0
      %v2663 = vand.u32 %v2523, 2139095040
      %v2664 = vshrl.u32 %v2663, 23
      %v2665 = vsub.s32 %v2664, 127
      %v2666 = vand.u32 2147483647, %v2523
      %v2667 = vand.u32 %v2666, 8388607
      %v2668 = vor.u32 %v2667, 8388608
      %v2669 = vsub.s32 0, %v2668
      %v2670 = vadd.s32 %v2665, 1
      %vm2671 = vcmp.gt.s32.totalorder %v2670, 0
      %v2672 = vsel %vm2671, %v2670, 0
      %v2673 = vshrl.u32 %v2672, 5
      %v2674 = vand.u32 %v2672, 31
      %v2675 = vsub.s32 32, %v2674
      %v2676 = vshrl.u32 683565275, %v2675
      %v2677 = vshll.u32 683565275, %v2674
      %v2678 = vshrl.u32 2475754826, %v2675
      %v2679 = vor.u32 %v2677, %v2678
      %v2680 = vshll.u32 2475754826, %v2674
      %v2681 = vshrl.u32 2131351028, %v2675
      %v2682 = vor.u32 %v2680, %v2681
      %v2683 = vshll.u32 2131351028, %v2674
      %v2684 = vshrl.u32 2102212464, %v2675
      %v2685 = vor.u32 %v2683, %v2684
      %v2686 = vshll.u32 2102212464, %v2674
      %v2687 = vshrl.u32 920167782, %v2675
      %v2688 = vor.u32 %v2686, %v2687
      %v2689 = vshll.u32 920167782, %v2674
      %v2690 = vshrl.u32 1326507024, %v2675
      %v2691 = vor.u32 %v2689, %v2690
      %vm2692 = vcmp.lt.s32.totalorder %v2673, 1
      %vm2693 = vcmp.lt.s32.totalorder %v2673, 2
      %vm2694 = vcmp.lt.s32.totalorder %v2673, 3
      %vm2695 = vcmp.lt.s32.totalorder %v2673, 4
      %v2696 = vsel %vm2692, %v2676, %v2679
      %v2697 = vsel %vm2695, %v2685, 2102212464
      %v2698 = vsel %vm2694, %v2682, %v2697
      %v2699 = vsel %vm2693, %v2696, %v2698
      %v2700 = vsel %vm2692, %v2679, %v2682
      %v2701 = vsel %vm2695, %v2688, 920167782
      %v2702 = vsel %vm2694, %v2685, %v2701
      %v2703 = vsel %vm2693, %v2700, %v2702
      %v2704 = vsel %vm2692, %v2682, %v2685
      %v2705 = vsel %vm2695, %v2691, 1326507024
      %v2706 = vsel %vm2694, %v2688, %v2705
      %v2707 = vsel %vm2693, %v2704, %v2706
      %v2708 = vshll.u32 %v2668, 8
      %v2709 = vmul.u32.u64.compose %v2708, %v2707
      %v2710 = vextract.low.u32 %v2709
      %v2711 = vextract.high.u32 %v2709
      %v2712 = vmul.u32.u64.compose %v2708, %v2703
      %v2713 = vextract.low.u32 %v2712
      %v2714 = vextract.high.u32 %v2712
      %v2715 = vmul.u32 %v2708, %v2699
      %v2716 = vadd.s32 %v2711, %v2713
      %vm2717 = vc.u32 %v2711, %v2713
      %v2718 = vadd.s32 %v2714, 1
      %v2719 = vsel %vm2717, %v2718, %v2714
      %v2720 = vadd.s32 %v2715, %v2719
      %v2721 = vadd.s32 %v2720, 536870912
      %v2722 = vshrl.u32 %v2721, 30
      %v2723 = vshll.u32 %v2722, 30
      %v2724 = vsub.s32 %v2720, %v2723
      %vm2725 = vcmp.lt.s32.totalorder %v2724, 0
      %v2726 = vsub.s32 0, %v2724
      %v2727 = vsel %vm2725, %v2726, %v2724
      %v2728 = vclz %v2727
      %v2729 = vsub.s32 %v2728, 2
      %vm2730 = vcmp.gt.s32.totalorder 0, %v2729
      %v2731 = vsel %vm2730, 0, %v2729
      %v2732 = vsub.s32 32, %v2731
      %v2733 = vshll.u32 %v2724, %v2731
      %v2734 = vshrl.u32 %v2716, %v2732
      %v2735 = vor.u32 %v2733, %v2734
      %v2736 = vsub.s32 4294967266, %v2731
      %v2737 = vadd.s32 %v2736, 127
      %v2738 = vshll.u32 %v2737, 23
      %v2739 = vor.u32 4788187, %v2738
      %v2740 = vand.u32 2147483647, %v2739
      %v2742 = vcvt.s32.f32 %v2735
      %v2743 = vmul.f32 %v2742, %v2740
      %v2744 = vxor.u32 %v2743, 2147483648
      %v2745 = vsel %vm2662, %v2744, %v2743
      %v2746 = vsub.s32 4, %v2722
      %v2747 = vsel %vm2662, %v2746, %v2722
      %v2748 = vsel %vm2661, %v2523, %v2745
      %v2749 = vsel %vm2661, 0, %v2747
      %v2750 = vcosq.f32.pop %v2748
      %v2751 = vsinq.f32.pop %v2748
      %vm2752 = vweird.f32 %v2523
      %v2753 = vadd.s32 %v2749, 3
      %v2754 = vand.u32 %v2753, 3
      %vm2755 = vcmp.lt.s32.totalorder %v2754, 2
      %vm2756 = vcmp.eq.s32.totalorder %v2754, 0
      %v2757 = vxor.u32 %v2751, 2147483648
      %v2758 = vsel %vm2756, %v2750, %v2757
      %vm2759 = vcmp.eq.s32.totalorder %v2754, 2
      %v2760 = vxor.u32 %v2750, 2147483648
      %v2761 = vsel %vm2759, %v2760, %v2751
      %v2762 = vsel %vm2755, %v2758, %v2761
      %v2763 = vsel %vm2752, nan, %v2762
      %v2764 = vand.u32 2147483647, %v2528
      %vm2765 = vcmp.le.f32.partialorder %v2764, 0.7853982
      %vm2766 = vcmp.lt.s32.totalorder %v2528, 0
      %v2767 = vand.u32 %v2528, 2139095040
      %v2768 = vshrl.u32 %v2767, 23
      %v2769 = vsub.s32 %v2768, 127
      %v2770 = vand.u32 2147483647, %v2528
      %v2771 = vand.u32 %v2770, 8388607
      %v2772 = vor.u32 %v2771, 8388608
      %v2773 = vsub.s32 0, %v2772
      %v2774 = vadd.s32 %v2769, 1
      %vm2775 = vcmp.gt.s32.totalorder %v2774, 0
      %v2776 = vsel %vm2775, %v2774, 0
      %v2777 = vshrl.u32 %v2776, 5
      %v2778 = vand.u32 %v2776, 31
      %v2779 = vsub.s32 32, %v2778
      %v2780 = vshrl.u32 683565275, %v2779
      %v2781 = vshll.u32 683565275, %v2778
      %v2782 = vshrl.u32 2475754826, %v2779
      %v2783 = vor.u32 %v2781, %v2782
      %v2784 = vshll.u32 2475754826, %v2778
      %v2785 = vshrl.u32 2131351028, %v2779
      %v2786 = vor.u32 %v2784, %v2785
      %v2787 = vshll.u32 2131351028, %v2778
      %v2788 = vshrl.u32 2102212464, %v2779
      %v2789 = vor.u32 %v2787, %v2788
      %v2790 = vshll.u32 2102212464, %v2778
      %v2791 = vshrl.u32 920167782, %v2779
      %v2792 = vor.u32 %v2790, %v2791
      %v2793 = vshll.u32 920167782, %v2778
      %v2794 = vshrl.u32 1326507024, %v2779
      %v2795 = vor.u32 %v2793, %v2794
      %vm2796 = vcmp.lt.s32.totalorder %v2777, 1
      %vm2797 = vcmp.lt.s32.totalorder %v2777, 2
      %vm2798 = vcmp.lt.s32.totalorder %v2777, 3
      %vm2799 = vcmp.lt.s32.totalorder %v2777, 4
      %v2800 = vsel %vm2796, %v2780, %v2783
      %v2801 = vsel %vm2799, %v2789, 2102212464
      %v2802 = vsel %vm2798, %v2786, %v2801
      %v2803 = vsel %vm2797, %v2800, %v2802
      %v2804 = vsel %vm2796, %v2783, %v2786
      %v2805 = vsel %vm2799, %v2792, 920167782
      %v2806 = vsel %vm2798, %v2789, %v2805
      %v2807 = vsel %vm2797, %v2804, %v2806
      %v2808 = vsel %vm2796, %v2786, %v2789
      %v2809 = vsel %vm2799, %v2795, 1326507024
      %v2810 = vsel %vm2798, %v2792, %v2809
      %v2811 = vsel %vm2797, %v2808, %v2810
      %v2812 = vshll.u32 %v2772, 8
      %v2813 = vmul.u32.u64.compose %v2812, %v2811
      %v2814 = vextract.low.u32 %v2813
      %v2815 = vextract.high.u32 %v2813
      %v2816 = vmul.u32.u64.compose %v2812, %v2807
      %v2817 = vextract.low.u32 %v2816
      %v2818 = vextract.high.u32 %v2816
      %v2819 = vmul.u32 %v2812, %v2803
      %v2820 = vadd.s32 %v2815, %v2817
      %vm2821 = vc.u32 %v2815, %v2817
      %v2822 = vadd.s32 %v2818, 1
      %v2823 = vsel %vm2821, %v2822, %v2818
      %v2824 = vadd.s32 %v2819, %v2823
      %v2825 = vadd.s32 %v2824, 536870912
      %v2826 = vshrl.u32 %v2825, 30
      %v2827 = vshll.u32 %v2826, 30
      %v2828 = vsub.s32 %v2824, %v2827
      %vm2829 = vcmp.lt.s32.totalorder %v2828, 0
      %v2830 = vsub.s32 0, %v2828
      %v2831 = vsel %vm2829, %v2830, %v2828
      %v2832 = vclz %v2831
      %v2833 = vsub.s32 %v2832, 2
      %vm2834 = vcmp.gt.s32.totalorder 0, %v2833
      %v2835 = vsel %vm2834, 0, %v2833
      %v2836 = vsub.s32 32, %v2835
      %v2837 = vshll.u32 %v2828, %v2835
      %v2838 = vshrl.u32 %v2820, %v2836
      %v2839 = vor.u32 %v2837, %v2838
      %v2840 = vsub.s32 4294967266, %v2835
      %v2841 = vadd.s32 %v2840, 127
      %v2842 = vshll.u32 %v2841, 23
      %v2843 = vor.u32 4788187, %v2842
      %v2844 = vand.u32 2147483647, %v2843
      %v2846 = vcvt.s32.f32 %v2839
      %v2847 = vmul.f32 %v2846, %v2844
      %v2848 = vxor.u32 %v2847, 2147483648
      %v2849 = vsel %vm2766, %v2848, %v2847
      %v2850 = vsub.s32 4, %v2826
      %v2851 = vsel %vm2766, %v2850, %v2826
      %v2852 = vsel %vm2765, %v2528, %v2849
      %v2853 = vsel %vm2765, 0, %v2851
      %v2854 = vcosq.f32.pop %v2852
      %v2855 = vsinq.f32.pop %v2852
      %vm2856 = vweird.f32 %v2528
      %v2857 = vadd.s32 %v2853, 3
      %v2858 = vand.u32 %v2857, 3
      %vm2859 = vcmp.lt.s32.totalorder %v2858, 2
      %vm2860 = vcmp.eq.s32.totalorder %v2858, 0
      %v2861 = vxor.u32 %v2855, 2147483648
      %v2862 = vsel %vm2860, %v2854, %v2861
      %vm2863 = vcmp.eq.s32.totalorder %v2858, 2
      %v2864 = vxor.u32 %v2854, 2147483648
      %v2865 = vsel %vm2863, %v2864, %v2855
      %v2866 = vsel %vm2859, %v2862, %v2865
      %v2867 = vsel %vm2856, nan, %v2866
      %v2868 = vand.u32 2147483647, %v2533
      %vm2869 = vcmp.le.f32.partialorder %v2868, 0.7853982
      %vm2870 = vcmp.lt.s32.totalorder %v2533, 0
      %v2871 = vand.u32 %v2533, 2139095040
      %v2872 = vshrl.u32 %v2871, 23
      %v2873 = vsub.s32 %v2872, 127
      %v2874 = vand.u32 2147483647, %v2533
      %v2875 = vand.u32 %v2874, 8388607
      %v2876 = vor.u32 %v2875, 8388608
      %v2877 = vsub.s32 0, %v2876
      %v2878 = vadd.s32 %v2873, 1
      %vm2879 = vcmp.gt.s32.totalorder %v2878, 0
      %v2880 = vsel %vm2879, %v2878, 0
      %v2881 = vshrl.u32 %v2880, 5
      %v2882 = vand.u32 %v2880, 31
      %v2883 = vsub.s32 32, %v2882
      %v2884 = vshrl.u32 683565275, %v2883
      %v2885 = vshll.u32 683565275, %v2882
      %v2886 = vshrl.u32 2475754826, %v2883
      %v2887 = vor.u32 %v2885, %v2886
      %v2888 = vshll.u32 2475754826, %v2882
      %v2889 = vshrl.u32 2131351028, %v2883
      %v2890 = vor.u32 %v2888, %v2889
      %v2891 = vshll.u32 2131351028, %v2882
      %v2892 = vshrl.u32 2102212464, %v2883
      %v2893 = vor.u32 %v2891, %v2892
      %v2894 = vshll.u32 2102212464, %v2882
      %v2895 = vshrl.u32 920167782, %v2883
      %v2896 = vor.u32 %v2894, %v2895
      %v2897 = vshll.u32 920167782, %v2882
      %v2898 = vshrl.u32 1326507024, %v2883
      %v2899 = vor.u32 %v2897, %v2898
      %vm2900 = vcmp.lt.s32.totalorder %v2881, 1
      %vm2901 = vcmp.lt.s32.totalorder %v2881, 2
      %vm2902 = vcmp.lt.s32.totalorder %v2881, 3
      %vm2903 = vcmp.lt.s32.totalorder %v2881, 4
      %v2904 = vsel %vm2900, %v2884, %v2887
      %v2905 = vsel %vm2903, %v2893, 2102212464
      %v2906 = vsel %vm2902, %v2890, %v2905
      %v2907 = vsel %vm2901, %v2904, %v2906
      %v2908 = vsel %vm2900, %v2887, %v2890
      %v2909 = vsel %vm2903, %v2896, 920167782
      %v2910 = vsel %vm2902, %v2893, %v2909
      %v2911 = vsel %vm2901, %v2908, %v2910
      %v2912 = vsel %vm2900, %v2890, %v2893
      %v2913 = vsel %vm2903, %v2899, 1326507024
      %v2914 = vsel %vm2902, %v2896, %v2913
      %v2915 = vsel %vm2901, %v2912, %v2914
      %v2916 = vshll.u32 %v2876, 8
      %v2917 = vmul.u32.u64.compose %v2916, %v2915
      %v2918 = vextract.low.u32 %v2917
      %v2919 = vextract.high.u32 %v2917
      %v2920 = vmul.u32.u64.compose %v2916, %v2911
      %v2921 = vextract.low.u32 %v2920
      %v2922 = vextract.high.u32 %v2920
      %v2923 = vmul.u32 %v2916, %v2907
      %v2924 = vadd.s32 %v2919, %v2921
      %vm2925 = vc.u32 %v2919, %v2921
      %v2926 = vadd.s32 %v2922, 1
      %v2927 = vsel %vm2925, %v2926, %v2922
      %v2928 = vadd.s32 %v2923, %v2927
      %v2929 = vadd.s32 %v2928, 536870912
      %v2930 = vshrl.u32 %v2929, 30
      %v2931 = vshll.u32 %v2930, 30
      %v2932 = vsub.s32 %v2928, %v2931
      %vm2933 = vcmp.lt.s32.totalorder %v2932, 0
      %v2934 = vsub.s32 0, %v2932
      %v2935 = vsel %vm2933, %v2934, %v2932
      %v2936 = vclz %v2935
      %v2937 = vsub.s32 %v2936, 2
      %vm2938 = vcmp.gt.s32.totalorder 0, %v2937
      %v2939 = vsel %vm2938, 0, %v2937
      %v2940 = vsub.s32 32, %v2939
      %v2941 = vshll.u32 %v2932, %v2939
      %v2942 = vshrl.u32 %v2924, %v2940
      %v2943 = vor.u32 %v2941, %v2942
      %v2944 = vsub.s32 4294967266, %v2939
      %v2945 = vadd.s32 %v2944, 127
      %v2946 = vshll.u32 %v2945, 23
      %v2947 = vor.u32 4788187, %v2946
      %v2948 = vand.u32 2147483647, %v2947
      %v2950 = vcvt.s32.f32 %v2943
      %v2951 = vmul.f32 %v2950, %v2948
      %v2952 = vxor.u32 %v2951, 2147483648
      %v2953 = vsel %vm2870, %v2952, %v2951
      %v2954 = vsub.s32 4, %v2930
      %v2955 = vsel %vm2870, %v2954, %v2930
      %v2956 = vsel %vm2869, %v2533, %v2953
      %v2957 = vsel %vm2869, 0, %v2955
      %v2958 = vcosq.f32.pop %v2956
      %v2959 = vsinq.f32.pop %v2956
      %vm2960 = vweird.f32 %v2533
      %v2961 = vadd.s32 %v2957, 3
      %v2962 = vand.u32 %v2961, 3
      %vm2963 = vcmp.lt.s32.totalorder %v2962, 2
      %vm2964 = vcmp.eq.s32.totalorder %v2962, 0
      %v2965 = vxor.u32 %v2959, 2147483648
      %v2966 = vsel %vm2964, %v2958, %v2965
      %vm2967 = vcmp.eq.s32.totalorder %v2962, 2
      %v2968 = vxor.u32 %v2958, 2147483648
      %v2969 = vsel %vm2967, %v2968, %v2959
      %v2970 = vsel %vm2963, %v2966, %v2969
      %v2971 = vsel %vm2960, nan, %v2970
      %v2972 = vand.u32 2147483647, %v2538
      %vm2973 = vcmp.le.f32.partialorder %v2972, 0.7853982
      %vm2974 = vcmp.lt.s32.totalorder %v2538, 0
      %v2975 = vand.u32 %v2538, 2139095040
      %v2976 = vshrl.u32 %v2975, 23
      %v2977 = vsub.s32 %v2976, 127
      %v2978 = vand.u32 2147483647, %v2538
      %v2979 = vand.u32 %v2978, 8388607
      %v2980 = vor.u32 %v2979, 8388608
      %v2981 = vsub.s32 0, %v2980
      %v2982 = vadd.s32 %v2977, 1
      %vm2983 = vcmp.gt.s32.totalorder %v2982, 0
      %v2984 = vsel %vm2983, %v2982, 0
      %v2985 = vshrl.u32 %v2984, 5
      %v2986 = vand.u32 %v2984, 31
      %v2987 = vsub.s32 32, %v2986
      %v2988 = vshrl.u32 683565275, %v2987
      %v2989 = vshll.u32 683565275, %v2986
      %v2990 = vshrl.u32 2475754826, %v2987
      %v2991 = vor.u32 %v2989, %v2990
      %v2992 = vshll.u32 2475754826, %v2986
      %v2993 = vshrl.u32 2131351028, %v2987
      %v2994 = vor.u32 %v2992, %v2993
      %v2995 = vshll.u32 2131351028, %v2986
      %v2996 = vshrl.u32 2102212464, %v2987
      %v2997 = vor.u32 %v2995, %v2996
      %v2998 = vshll.u32 2102212464, %v2986
      %v2999 = vshrl.u32 920167782, %v2987
      %v3000 = vor.u32 %v2998, %v2999
      %v3001 = vshll.u32 920167782, %v2986
      %v3002 = vshrl.u32 1326507024, %v2987
      %v3003 = vor.u32 %v3001, %v3002
      %vm3004 = vcmp.lt.s32.totalorder %v2985, 1
      %vm3005 = vcmp.lt.s32.totalorder %v2985, 2
      %vm3006 = vcmp.lt.s32.totalorder %v2985, 3
      %vm3007 = vcmp.lt.s32.totalorder %v2985, 4
      %v3008 = vsel %vm3004, %v2988, %v2991
      %v3009 = vsel %vm3007, %v2997, 2102212464
      %v3010 = vsel %vm3006, %v2994, %v3009
      %v3011 = vsel %vm3005, %v3008, %v3010
      %v3012 = vsel %vm3004, %v2991, %v2994
      %v3013 = vsel %vm3007, %v3000, 920167782
      %v3014 = vsel %vm3006, %v2997, %v3013
      %v3015 = vsel %vm3005, %v3012, %v3014
      %v3016 = vsel %vm3004, %v2994, %v2997
      %v3017 = vsel %vm3007, %v3003, 1326507024
      %v3018 = vsel %vm3006, %v3000, %v3017
      %v3019 = vsel %vm3005, %v3016, %v3018
      %v3020 = vshll.u32 %v2980, 8
      %v3021 = vmul.u32.u64.compose %v3020, %v3019
      %v3022 = vextract.low.u32 %v3021
      %v3023 = vextract.high.u32 %v3021
      %v3024 = vmul.u32.u64.compose %v3020, %v3015
      %v3025 = vextract.low.u32 %v3024
      %v3026 = vextract.high.u32 %v3024
      %v3027 = vmul.u32 %v3020, %v3011
      %v3028 = vadd.s32 %v3023, %v3025
      %vm3029 = vc.u32 %v3023, %v3025
      %v3030 = vadd.s32 %v3026, 1
      %v3031 = vsel %vm3029, %v3030, %v3026
      %v3032 = vadd.s32 %v3027, %v3031
      %v3033 = vadd.s32 %v3032, 536870912
      %v3034 = vshrl.u32 %v3033, 30
      %v3035 = vshll.u32 %v3034, 30
      %v3036 = vsub.s32 %v3032, %v3035
      %vm3037 = vcmp.lt.s32.totalorder %v3036, 0
      %v3038 = vsub.s32 0, %v3036
      %v3039 = vsel %vm3037, %v3038, %v3036
      %v3040 = vclz %v3039
      %v3041 = vsub.s32 %v3040, 2
      %vm3042 = vcmp.gt.s32.totalorder 0, %v3041
      %v3043 = vsel %vm3042, 0, %v3041
      %v3044 = vsub.s32 32, %v3043
      %v3045 = vshll.u32 %v3036, %v3043
      %v3046 = vshrl.u32 %v3028, %v3044
      %v3047 = vor.u32 %v3045, %v3046
      %v3048 = vsub.s32 4294967266, %v3043
      %v3049 = vadd.s32 %v3048, 127
      %v3050 = vshll.u32 %v3049, 23
      %v3051 = vor.u32 4788187, %v3050
      %v3052 = vand.u32 2147483647, %v3051
      %v3054 = vcvt.s32.f32 %v3047
      %v3055 = vmul.f32 %v3054, %v3052
      %v3056 = vxor.u32 %v3055, 2147483648
      %v3057 = vsel %vm2974, %v3056, %v3055
      %v3058 = vsub.s32 4, %v3034
      %v3059 = vsel %vm2974, %v3058, %v3034
      %v3060 = vsel %vm2973, %v2538, %v3057
      %v3061 = vsel %vm2973, 0, %v3059
      %v3062 = vcosq.f32.pop %v3060
      %v3063 = vsinq.f32.pop %v3060
      %vm3064 = vweird.f32 %v2538
      %v3065 = vadd.s32 %v3061, 3
      %v3066 = vand.u32 %v3065, 3
      %vm3067 = vcmp.lt.s32.totalorder %v3066, 2
      %vm3068 = vcmp.eq.s32.totalorder %v3066, 0
      %v3069 = vxor.u32 %v3063, 2147483648
      %v3070 = vsel %vm3068, %v3062, %v3069
      %vm3071 = vcmp.eq.s32.totalorder %v3066, 2
      %v3072 = vxor.u32 %v3062, 2147483648
      %v3073 = vsel %vm3071, %v3072, %v3063
      %v3074 = vsel %vm3067, %v3070, %v3073
      %v3075 = vsel %vm3064, nan, %v3074
      %v3076 = vand.u32 2147483647, %v2543
      %vm3077 = vcmp.le.f32.partialorder %v3076, 0.7853982
      %vm3078 = vcmp.lt.s32.totalorder %v2543, 0
      %v3079 = vand.u32 %v2543, 2139095040
      %v3080 = vshrl.u32 %v3079, 23
      %v3081 = vsub.s32 %v3080, 127
      %v3082 = vand.u32 2147483647, %v2543
      %v3083 = vand.u32 %v3082, 8388607
      %v3084 = vor.u32 %v3083, 8388608
      %v3085 = vsub.s32 0, %v3084
      %v3086 = vadd.s32 %v3081, 1
      %vm3087 = vcmp.gt.s32.totalorder %v3086, 0
      %v3088 = vsel %vm3087, %v3086, 0
      %v3089 = vshrl.u32 %v3088, 5
      %v3090 = vand.u32 %v3088, 31
      %v3091 = vsub.s32 32, %v3090
      %v3092 = vshrl.u32 683565275, %v3091
      %v3093 = vshll.u32 683565275, %v3090
      %v3094 = vshrl.u32 2475754826, %v3091
      %v3095 = vor.u32 %v3093, %v3094
      %v3096 = vshll.u32 2475754826, %v3090
      %v3097 = vshrl.u32 2131351028, %v3091
      %v3098 = vor.u32 %v3096, %v3097
      %v3099 = vshll.u32 2131351028, %v3090
      %v3100 = vshrl.u32 2102212464, %v3091
      %v3101 = vor.u32 %v3099, %v3100
      %v3102 = vshll.u32 2102212464, %v3090
      %v3103 = vshrl.u32 920167782, %v3091
      %v3104 = vor.u32 %v3102, %v3103
      %v3105 = vshll.u32 920167782, %v3090
      %v3106 = vshrl.u32 1326507024, %v3091
      %v3107 = vor.u32 %v3105, %v3106
      %vm3108 = vcmp.lt.s32.totalorder %v3089, 1
      %vm3109 = vcmp.lt.s32.totalorder %v3089, 2
      %vm3110 = vcmp.lt.s32.totalorder %v3089, 3
      %vm3111 = vcmp.lt.s32.totalorder %v3089, 4
      %v3112 = vsel %vm3108, %v3092, %v3095
      %v3113 = vsel %vm3111, %v3101, 2102212464
      %v3114 = vsel %vm3110, %v3098, %v3113
      %v3115 = vsel %vm3109, %v3112, %v3114
      %v3116 = vsel %vm3108, %v3095, %v3098
      %v3117 = vsel %vm3111, %v3104, 920167782
      %v3118 = vsel %vm3110, %v3101, %v3117
      %v3119 = vsel %vm3109, %v3116, %v3118
      %v3120 = vsel %vm3108, %v3098, %v3101
      %v3121 = vsel %vm3111, %v3107, 1326507024
      %v3122 = vsel %vm3110, %v3104, %v3121
      %v3123 = vsel %vm3109, %v3120, %v3122
      %v3124 = vshll.u32 %v3084, 8
      %v3125 = vmul.u32.u64.compose %v3124, %v3123
      %v3126 = vextract.low.u32 %v3125
      %v3127 = vextract.high.u32 %v3125
      %v3128 = vmul.u32.u64.compose %v3124, %v3119
      %v3129 = vextract.low.u32 %v3128
      %v3130 = vextract.high.u32 %v3128
      %v3131 = vmul.u32 %v3124, %v3115
      %v3132 = vadd.s32 %v3127, %v3129
      %vm3133 = vc.u32 %v3127, %v3129
      %v3134 = vadd.s32 %v3130, 1
      %v3135 = vsel %vm3133, %v3134, %v3130
      %v3136 = vadd.s32 %v3131, %v3135
      %v3137 = vadd.s32 %v3136, 536870912
      %v3138 = vshrl.u32 %v3137, 30
      %v3139 = vshll.u32 %v3138, 30
      %v3140 = vsub.s32 %v3136, %v3139
      %vm3141 = vcmp.lt.s32.totalorder %v3140, 0
      %v3142 = vsub.s32 0, %v3140
      %v3143 = vsel %vm3141, %v3142, %v3140
      %v3144 = vclz %v3143
      %v3145 = vsub.s32 %v3144, 2
      %vm3146 = vcmp.gt.s32.totalorder 0, %v3145
      %v3147 = vsel %vm3146, 0, %v3145
      %v3148 = vsub.s32 32, %v3147
      %v3149 = vshll.u32 %v3140, %v3147
      %v3150 = vshrl.u32 %v3132, %v3148
      %v3151 = vor.u32 %v3149, %v3150
      %v3152 = vsub.s32 4294967266, %v3147
      %v3153 = vadd.s32 %v3152, 127
      %v3154 = vshll.u32 %v3153, 23
      %v3155 = vor.u32 4788187, %v3154
      %v3156 = vand.u32 2147483647, %v3155
      %v3158 = vcvt.s32.f32 %v3151
      %v3159 = vmul.f32 %v3158, %v3156
      %v3160 = vxor.u32 %v3159, 2147483648
      %v3161 = vsel %vm3078, %v3160, %v3159
      %v3162 = vsub.s32 4, %v3138
      %v3163 = vsel %vm3078, %v3162, %v3138
      %v3164 = vsel %vm3077, %v2543, %v3161
      %v3165 = vsel %vm3077, 0, %v3163
      %v3166 = vcosq.f32.pop %v3164
      %v3167 = vsinq.f32.pop %v3164
      %vm3168 = vweird.f32 %v2543
      %v3169 = vadd.s32 %v3165, 3
      %v3170 = vand.u32 %v3169, 3
      %vm3171 = vcmp.lt.s32.totalorder %v3170, 2
      %vm3172 = vcmp.eq.s32.totalorder %v3170, 0
      %v3173 = vxor.u32 %v3167, 2147483648
      %v3174 = vsel %vm3172, %v3166, %v3173
      %vm3175 = vcmp.eq.s32.totalorder %v3170, 2
      %v3176 = vxor.u32 %v3166, 2147483648
      %v3177 = vsel %vm3175, %v3176, %v3167
      %v3178 = vsel %vm3171, %v3174, %v3177
      %v3179 = vsel %vm3168, nan, %v3178
      %v3180 = vand.u32 2147483647, %v2548
      %vm3181 = vcmp.le.f32.partialorder %v3180, 0.7853982
      %vm3182 = vcmp.lt.s32.totalorder %v2548, 0
      %v3183 = vand.u32 %v2548, 2139095040
      %v3184 = vshrl.u32 %v3183, 23
      %v3185 = vsub.s32 %v3184, 127
      %v3186 = vand.u32 2147483647, %v2548
      %v3187 = vand.u32 %v3186, 8388607
      %v3188 = vor.u32 %v3187, 8388608
      %v3189 = vsub.s32 0, %v3188
      %v3190 = vadd.s32 %v3185, 1
      %vm3191 = vcmp.gt.s32.totalorder %v3190, 0
      %v3192 = vsel %vm3191, %v3190, 0
      %v3193 = vshrl.u32 %v3192, 5
      %v3194 = vand.u32 %v3192, 31
      %v3195 = vsub.s32 32, %v3194
      %v3196 = vshrl.u32 683565275, %v3195
      %v3197 = vshll.u32 683565275, %v3194
      %v3198 = vshrl.u32 2475754826, %v3195
      %v3199 = vor.u32 %v3197, %v3198
      %v3200 = vshll.u32 2475754826, %v3194
      %v3201 = vshrl.u32 2131351028, %v3195
      %v3202 = vor.u32 %v3200, %v3201
      %v3203 = vshll.u32 2131351028, %v3194
      %v3204 = vshrl.u32 2102212464, %v3195
      %v3205 = vor.u32 %v3203, %v3204
      %v3206 = vshll.u32 2102212464, %v3194
      %v3207 = vshrl.u32 920167782, %v3195
      %v3208 = vor.u32 %v3206, %v3207
      %v3209 = vshll.u32 920167782, %v3194
      %v3210 = vshrl.u32 1326507024, %v3195
      %v3211 = vor.u32 %v3209, %v3210
      %vm3212 = vcmp.lt.s32.totalorder %v3193, 1
      %vm3213 = vcmp.lt.s32.totalorder %v3193, 2
      %vm3214 = vcmp.lt.s32.totalorder %v3193, 3
      %vm3215 = vcmp.lt.s32.totalorder %v3193, 4
      %v3216 = vsel %vm3212, %v3196, %v3199
      %v3217 = vsel %vm3215, %v3205, 2102212464
      %v3218 = vsel %vm3214, %v3202, %v3217
      %v3219 = vsel %vm3213, %v3216, %v3218
      %v3220 = vsel %vm3212, %v3199, %v3202
      %v3221 = vsel %vm3215, %v3208, 920167782
      %v3222 = vsel %vm3214, %v3205, %v3221
      %v3223 = vsel %vm3213, %v3220, %v3222
      %v3224 = vsel %vm3212, %v3202, %v3205
      %v3225 = vsel %vm3215, %v3211, 1326507024
      %v3226 = vsel %vm3214, %v3208, %v3225
      %v3227 = vsel %vm3213, %v3224, %v3226
      %v3228 = vshll.u32 %v3188, 8
      %v3229 = vmul.u32.u64.compose %v3228, %v3227
      %v3230 = vextract.low.u32 %v3229
      %v3231 = vextract.high.u32 %v3229
      %v3232 = vmul.u32.u64.compose %v3228, %v3223
      %v3233 = vextract.low.u32 %v3232
      %v3234 = vextract.high.u32 %v3232
      %v3235 = vmul.u32 %v3228, %v3219
      %v3236 = vadd.s32 %v3231, %v3233
      %vm3237 = vc.u32 %v3231, %v3233
      %v3238 = vadd.s32 %v3234, 1
      %v3239 = vsel %vm3237, %v3238, %v3234
      %v3240 = vadd.s32 %v3235, %v3239
      %v3241 = vadd.s32 %v3240, 536870912
      %v3242 = vshrl.u32 %v3241, 30
      %v3243 = vshll.u32 %v3242, 30
      %v3244 = vsub.s32 %v3240, %v3243
      %vm3245 = vcmp.lt.s32.totalorder %v3244, 0
      %v3246 = vsub.s32 0, %v3244
      %v3247 = vsel %vm3245, %v3246, %v3244
      %v3248 = vclz %v3247
      %v3249 = vsub.s32 %v3248, 2
      %vm3250 = vcmp.gt.s32.totalorder 0, %v3249
      %v3251 = vsel %vm3250, 0, %v3249
      %v3252 = vsub.s32 32, %v3251
      %v3253 = vshll.u32 %v3244, %v3251
      %v3254 = vshrl.u32 %v3236, %v3252
      %v3255 = vor.u32 %v3253, %v3254
      %v3256 = vsub.s32 4294967266, %v3251
      %v3257 = vadd.s32 %v3256, 127
      %v3258 = vshll.u32 %v3257, 23
      %v3259 = vor.u32 4788187, %v3258
      %v3260 = vand.u32 2147483647, %v3259
      %v3262 = vcvt.s32.f32 %v3255
      %v3263 = vmul.f32 %v3262, %v3260
      %v3264 = vxor.u32 %v3263, 2147483648
      %v3265 = vsel %vm3182, %v3264, %v3263
      %v3266 = vsub.s32 4, %v3242
      %v3267 = vsel %vm3182, %v3266, %v3242
      %v3268 = vsel %vm3181, %v2548, %v3265
      %v3269 = vsel %vm3181, 0, %v3267
      %v3270 = vcosq.f32.pop %v3268
      %v3271 = vsinq.f32.pop %v3268
      %vm3272 = vweird.f32 %v2548
      %v3273 = vadd.s32 %v3269, 3
      %v3274 = vand.u32 %v3273, 3
      %vm3275 = vcmp.lt.s32.totalorder %v3274, 2
      %vm3276 = vcmp.eq.s32.totalorder %v3274, 0
      %v3277 = vxor.u32 %v3271, 2147483648
      %v3278 = vsel %vm3276, %v3270, %v3277
      %vm3279 = vcmp.eq.s32.totalorder %v3274, 2
      %v3280 = vxor.u32 %v3270, 2147483648
      %v3281 = vsel %vm3279, %v3280, %v3271
      %v3282 = vsel %vm3275, %v3278, %v3281
      %v3283 = vsel %vm3272, nan, %v3282
      %v3284 = vand.u32 2147483647, %v2553
      %vm3285 = vcmp.le.f32.partialorder %v3284, 0.7853982
      %vm3286 = vcmp.lt.s32.totalorder %v2553, 0
      %v3287 = vand.u32 %v2553, 2139095040
      %v3288 = vshrl.u32 %v3287, 23
      %v3289 = vsub.s32 %v3288, 127
      %v3290 = vand.u32 2147483647, %v2553
      %v3291 = vand.u32 %v3290, 8388607
      %v3292 = vor.u32 %v3291, 8388608
      %v3293 = vsub.s32 0, %v3292
      %v3294 = vadd.s32 %v3289, 1
      %vm3295 = vcmp.gt.s32.totalorder %v3294, 0
      %v3296 = vsel %vm3295, %v3294, 0
      %v3297 = vshrl.u32 %v3296, 5
      %v3298 = vand.u32 %v3296, 31
      %v3299 = vsub.s32 32, %v3298
      %v3300 = vshrl.u32 683565275, %v3299
      %v3301 = vshll.u32 683565275, %v3298
      %v3302 = vshrl.u32 2475754826, %v3299
      %v3303 = vor.u32 %v3301, %v3302
      %v3304 = vshll.u32 2475754826, %v3298
      %v3305 = vshrl.u32 2131351028, %v3299
      %v3306 = vor.u32 %v3304, %v3305
      %v3307 = vshll.u32 2131351028, %v3298
      %v3308 = vshrl.u32 2102212464, %v3299
      %v3309 = vor.u32 %v3307, %v3308
      %v3310 = vshll.u32 2102212464, %v3298
      %v3311 = vshrl.u32 920167782, %v3299
      %v3312 = vor.u32 %v3310, %v3311
      %v3313 = vshll.u32 920167782, %v3298
      %v3314 = vshrl.u32 1326507024, %v3299
      %v3315 = vor.u32 %v3313, %v3314
      %vm3316 = vcmp.lt.s32.totalorder %v3297, 1
      %vm3317 = vcmp.lt.s32.totalorder %v3297, 2
      %vm3318 = vcmp.lt.s32.totalorder %v3297, 3
      %vm3319 = vcmp.lt.s32.totalorder %v3297, 4
      %v3320 = vsel %vm3316, %v3300, %v3303
      %v3321 = vsel %vm3319, %v3309, 2102212464
      %v3322 = vsel %vm3318, %v3306, %v3321
      %v3323 = vsel %vm3317, %v3320, %v3322
      %v3324 = vsel %vm3316, %v3303, %v3306
      %v3325 = vsel %vm3319, %v3312, 920167782
      %v3326 = vsel %vm3318, %v3309, %v3325
      %v3327 = vsel %vm3317, %v3324, %v3326
      %v3328 = vsel %vm3316, %v3306, %v3309
      %v3329 = vsel %vm3319, %v3315, 1326507024
      %v3330 = vsel %vm3318, %v3312, %v3329
      %v3331 = vsel %vm3317, %v3328, %v3330
      %v3332 = vshll.u32 %v3292, 8
      %v3333 = vmul.u32.u64.compose %v3332, %v3331
      %v3334 = vextract.low.u32 %v3333
      %v3335 = vextract.high.u32 %v3333
      %v3336 = vmul.u32.u64.compose %v3332, %v3327
      %v3337 = vextract.low.u32 %v3336
      %v3338 = vextract.high.u32 %v3336
      %v3339 = vmul.u32 %v3332, %v3323
      %v3340 = vadd.s32 %v3335, %v3337
      %vm3341 = vc.u32 %v3335, %v3337
      %v3342 = vadd.s32 %v3338, 1
      %v3343 = vsel %vm3341, %v3342, %v3338
      %v3344 = vadd.s32 %v3339, %v3343
      %v3345 = vadd.s32 %v3344, 536870912
      %v3346 = vshrl.u32 %v3345, 30
      %v3347 = vshll.u32 %v3346, 30
      %v3348 = vsub.s32 %v3344, %v3347
      %vm3349 = vcmp.lt.s32.totalorder %v3348, 0
      %v3350 = vsub.s32 0, %v3348
      %v3351 = vsel %vm3349, %v3350, %v3348
      %v3352 = vclz %v3351
      %v3353 = vsub.s32 %v3352, 2
      %vm3354 = vcmp.gt.s32.totalorder 0, %v3353
      %v3355 = vsel %vm3354, 0, %v3353
      %v3356 = vsub.s32 32, %v3355
      %v3357 = vshll.u32 %v3348, %v3355
      %v3358 = vshrl.u32 %v3340, %v3356
      %v3359 = vor.u32 %v3357, %v3358
      %v3360 = vsub.s32 4294967266, %v3355
      %v3361 = vadd.s32 %v3360, 127
      %v3362 = vshll.u32 %v3361, 23
      %v3363 = vor.u32 4788187, %v3362
      %v3364 = vand.u32 2147483647, %v3363
      %v3366 = vcvt.s32.f32 %v3359
      %v3367 = vmul.f32 %v3366, %v3364
      %v3368 = vxor.u32 %v3367, 2147483648
      %v3369 = vsel %vm3286, %v3368, %v3367
      %v3370 = vsub.s32 4, %v3346
      %v3371 = vsel %vm3286, %v3370, %v3346
      %v3372 = vsel %vm3285, %v2553, %v3369
      %v3373 = vsel %vm3285, 0, %v3371
      %v3374 = vcosq.f32.pop %v3372
      %v3375 = vsinq.f32.pop %v3372
      %vm3376 = vweird.f32 %v2553
      %v3377 = vadd.s32 %v3373, 3
      %v3378 = vand.u32 %v3377, 3
      %vm3379 = vcmp.lt.s32.totalorder %v3378, 2
      %vm3380 = vcmp.eq.s32.totalorder %v3378, 0
      %v3381 = vxor.u32 %v3375, 2147483648
      %v3382 = vsel %vm3380, %v3374, %v3381
      %vm3383 = vcmp.eq.s32.totalorder %v3378, 2
      %v3384 = vxor.u32 %v3374, 2147483648
      %v3385 = vsel %vm3383, %v3384, %v3375
      %v3386 = vsel %vm3379, %v3382, %v3385
      %v3387 = vsel %vm3376, nan, %v3386
      %v3388 = vld [vmem:[%s10] sm:$0xff]
      %v3389 = vld [vmem:[%s10 + $0x8] sm:$0xff]
      %v3390 = vld [vmem:[%s10 + $0x10] sm:$0xff]
      %v3391 = vld [vmem:[%s10 + $0x18] sm:$0xff]
      %v3392 = vld [vmem:[%s10 + $0x20] sm:$0xff]
      %v3393 = vld [vmem:[%s10 + $0x28] sm:$0xff]
      %v3394 = vld [vmem:[%s10 + $0x30] sm:$0xff]
      %v3395 = vld [vmem:[%s10 + $0x38] sm:$0xff]
      %v3396 = vld [vmem:[%s10 + $0x40] sm:$0xff]
      %v3397 = vld [vmem:[%s10 + $0x48] sm:$0xff]
      %v3398 = vld [vmem:[%s10 + $0x50] sm:$0xff]
      %v3399 = vld [vmem:[%s10 + $0x58] sm:$0xff]
      %v3400 = vld [vmem:[%s10 + $0x60] sm:$0xff]
      %v3401 = vld [vmem:[%s10 + $0x68] sm:$0xff]
      %v3402 = vld [vmem:[%s10 + $0x70] sm:$0xff]
      %v3403 = vld [vmem:[%s10 + $0x78] sm:$0xff]
      %3404 = vmatprep.subr.mxu0 0.0
      %3405 = vmatpush1.msra.mxu0 %v3388
      %3406 = vmatprep.subr.mxu0 0.0
      %3407 = vmatpush1.msra.mxu0 %v3389
      %3408 = vmatprep.subr.mxu0 0.0
      %3409 = vmatpush1.msra.mxu0 %v3390
      %3410 = vmatprep.subr.mxu0 0.0
      %3411 = vmatpush1.msra.mxu0 %v3391
      %3412 = vmatprep.subr.mxu0 0.0
      %3413 = vmatpush1.msra.mxu0 %v3392
      %3414 = vmatprep.subr.mxu0 0.0
      %3415 = vmatpush1.msra.mxu0 %v3393
      %3416 = vmatprep.subr.mxu0 0.0
      %3417 = vmatpush1.msra.mxu0 %v3394
      %3418 = vmatprep.subr.mxu0 0.0
      %3419 = vmatpush1.msra.mxu0 %v3395
      %3420 = vmatprep.subr.mxu0 0.0
      %3421 = vmatpush1.msra.mxu0 %v3396
      %3422 = vmatprep.subr.mxu0 0.0
      %3423 = vmatpush1.msra.mxu0 %v3397
      %3424 = vmatprep.subr.mxu0 0.0
      %3425 = vmatpush1.msra.mxu0 %v3398
      %3426 = vmatprep.subr.mxu0 0.0
      %3427 = vmatpush1.msra.mxu0 %v3399
      %3428 = vmatprep.subr.mxu0 0.0
      %3429 = vmatpush1.msra.mxu0 %v3400
      %3430 = vmatprep.subr.mxu0 0.0
      %3431 = vmatpush1.msra.mxu0 %v3401
      %3432 = vmatprep.subr.mxu0 0.0
      %3433 = vmatpush1.msra.mxu0 %v3402
      %3434 = vmatprep.subr.mxu0 0.0
      %3435 = vmatpush1.msra.mxu0 %v3403
      %3436 = vmatprep.subr.mxu0 0.0
      %3437 = vmatpush1.msra.mxu0 0.0
      %3438 = vmatprep.subr.mxu0 0.0
      %3439 = vmatpush1.msra.mxu0 0.0
      %3440 = vmatprep.subr.mxu0 0.0
      %3441 = vmatpush1.msra.mxu0 0.0
      %3442 = vmatprep.subr.mxu0 0.0
      %3443 = vmatpush1.msra.mxu0 0.0
      %3444 = vmatprep.subr.mxu0 0.0
      %3445 = vmatpush1.msra.mxu0 0.0
      %3446 = vmatprep.subr.mxu0 0.0
      %3447 = vmatpush1.msra.mxu0 0.0
      %3448 = vmatprep.subr.mxu0 0.0
      %3449 = vmatpush1.msra.mxu0 0.0
      %3450 = vmatprep.subr.mxu0 0.0
      %3451 = vmatpush1.msra.mxu0 0.0
      %3452 = vmatprep.subr.mxu0 0.0
      %3453 = vmatpush1.msra.mxu0 0.0
      %3454 = vmatprep.subr.mxu0 0.0
      %3455 = vmatpush1.msra.mxu0 0.0
      %3456 = vmatprep.subr.mxu0 0.0
      %3457 = vmatpush1.msra.mxu0 0.0
      %3458 = vmatprep.subr.mxu0 0.0
      %3459 = vmatpush1.msra.mxu0 0.0
      %3460 = vmatprep.subr.mxu0 0.0
      %3461 = vmatpush1.msra.mxu0 0.0
      %3462 = vmatprep.subr.mxu0 0.0
      %3463 = vmatpush1.msra.mxu0 0.0
      %3464 = vmatprep.subr.mxu0 0.0
      %3465 = vmatpush1.msra.mxu0 0.0
      %3466 = vmatprep.subr.mxu0 0.0
      %3467 = vmatpush1.msra.mxu0 0.0
      %3468 = vmatprep.mubr.f32.mxu0 0.0
      %3469 = vmatmul.mubr.f32.gmra.mrb[0].mxu0 %v2659
      %v3470 = vpop.f32.mrb[0].mxu0
      %v3471 = vadd.f32 0.0, %v3470
      %v3472 = vpop.f32.mrb[0].mxu0
      %3473 = vmatprep.mubr.f32.mxu0 0.0
      %3474 = vmatmul.mubr.f32.gmra.mrb[0].mxu0 %v2763
      %v3475 = vpop.f32.mrb[0].mxu0
      %v3476 = vadd.f32 0.0, %v3475
      %v3477 = vpop.f32.mrb[0].mxu0
      %3478 = vmatprep.mubr.f32.mxu0 0.0
      %3479 = vmatmul.mubr.f32.gmra.mrb[0].mxu0 %v2867
      %v3480 = vpop.f32.mrb[0].mxu0
      %v3481 = vadd.f32 0.0, %v3480
      %v3482 = vpop.f32.mrb[0].mxu0
      %3483 = vmatprep.mubr.f32.mxu0 0.0
      %3484 = vmatmul.mubr.f32.gmra.mrb[0].mxu0 %v2971
      %v3485 = vpop.f32.mrb[0].mxu0
      %v3486 = vadd.f32 0.0, %v3485
      %v3487 = vpop.f32.mrb[0].mxu0
      %3488 = vmatprep.mubr.f32.mxu0 0.0
      %3489 = vmatmul.mubr.f32.gmra.mrb[0].mxu0 %v3075
      %v3490 = vpop.f32.mrb[0].mxu0
      %v3491 = vadd.f32 0.0, %v3490
      %v3492 = vpop.f32.mrb[0].mxu0
      %3493 = vmatprep.mubr.f32.mxu0 0.0
      %3494 = vmatmul.mubr.f32.gmra.mrb[0].mxu0 %v3179
      %v3495 = vpop.f32.mrb[0].mxu0
      %v3496 = vadd.f32 0.0, %v3495
      %v3497 = vpop.f32.mrb[0].mxu0
      %3498 = vmatprep.mubr.f32.mxu0 0.0
      %3499 = vmatmul.mubr.f32.gmra.mrb[0].mxu0 %v3283
      %v3500 = vpop.f32.mrb[0].mxu0
      %v3501 = vadd.f32 0.0, %v3500
      %v3502 = vpop.f32.mrb[0].mxu0
      %3503 = vmatprep.mubr.f32.mxu0 0.0
      %3504 = vmatmul.mubr.f32.gmra.mrb[0].mxu0 %v3387
      %v3505 = vpop.f32.mrb[0].mxu0
      %v3506 = vadd.f32 0.0, %v3505
      %v3507 = vpop.f32.mrb[0].mxu0
      %3508 = vdwg.mxu0
      %v3509 = vld [vmem:[%s458] sm:$0xff]
      %v3510 = vld [vmem:[%s458 + $0x8] sm:$0xff]
      %v3511 = vld [vmem:[%s458 + $0x10] sm:$0xff]
      %v3512 = vld [vmem:[%s458 + $0x18] sm:$0xff]
      %v3513 = vld [vmem:[%s458 + $0x20] sm:$0xff]
      %v3514 = vld [vmem:[%s458 + $0x28] sm:$0xff]
      %v3515 = vld [vmem:[%s458 + $0x30] sm:$0xff]
      %v3516 = vld [vmem:[%s458 + $0x38] sm:$0xff]
      %v3517 = vsub.f32 0.0, %v3509
      %v3518 = vsub.f32 0.0, %v3510
      %v3519 = vsub.f32 0.0, %v3511
      %v3520 = vsub.f32 0.0, %v3512
      %v3521 = vsub.f32 0.0, %v3513
      %v3522 = vsub.f32 0.0, %v3514
      %v3523 = vsub.f32 0.0, %v3515
      %v3524 = vsub.f32 0.0, %v3516
      %v3525 = vld [vmem:[%s3] sm:$0x1]
      %3527 = vset.pattern.permute.xlu0 0
      %3528 = vperm.xlu0 %3527, %v3517
      %v3529 = vpop.permute.xlu0 %3528
      %3532 = vset.pattern.permute.xlu0 0
      %3533 = vperm.xlu0 %3532, %v3518
      %v3534 = vpop.permute.xlu0 %3533
      %3537 = vset.pattern.permute.xlu0 0
      %3538 = vperm.xlu0 %3537, %v3519
      %v3539 = vpop.permute.xlu0 %3538
      %3542 = vset.pattern.permute.xlu0 0
      %3543 = vperm.xlu0 %3542, %v3520
      %v3544 = vpop.permute.xlu0 %3543
      %3547 = vset.pattern.permute.xlu0 0
      %3548 = vperm.xlu0 %3547, %v3521
      %v3549 = vpop.permute.xlu0 %3548
      %3552 = vset.pattern.permute.xlu0 0
      %3553 = vperm.xlu0 %3552, %v3522
      %v3554 = vpop.permute.xlu0 %3553
      %3557 = vset.pattern.permute.xlu0 0
      %3558 = vperm.xlu0 %3557, %v3523
      %v3559 = vpop.permute.xlu0 %3558
      %3562 = vset.pattern.permute.xlu0 0
      %3563 = vperm.xlu0 %3562, %v3524
      %v3564 = vpop.permute.xlu0 %3563
      %v3567 = vlaneseq
      %v3568 = vshrl.u32 %v3567, 7
      %v3569 = vsub.s32 0, %v3568
      %v3570 = vrot.slane %v3525, %v3569
      %v3572 = vmul.f32 %v3529, %v3570
      %v3573 = vmul.f32 %v3534, %v3570
      %v3574 = vmul.f32 %v3539, %v3570
      %v3575 = vmul.f32 %v3544, %v3570
      %v3576 = vmul.f32 %v3549, %v3570
      %v3577 = vmul.f32 %v3554, %v3570
      %v3578 = vmul.f32 %v3559, %v3570
      %v3579 = vmul.f32 %v3564, %v3570
      %v3580 = vmul.f32 %v3572, 1.442695
      %v3581 = vpow.pop %v3580
      %v3582 = vmul.f32 %v3573, 1.442695
      %v3583 = vpow.pop %v3582
      %v3584 = vmul.f32 %v3574, 1.442695
      %v3585 = vpow.pop %v3584
      %v3586 = vmul.f32 %v3575, 1.442695
      %v3587 = vpow.pop %v3586
      %v3588 = vmul.f32 %v3576, 1.442695
      %v3589 = vpow.pop %v3588
      %v3590 = vmul.f32 %v3577, 1.442695
      %v3591 = vpow.pop %v3590
      %v3592 = vmul.f32 %v3578, 1.442695
      %v3593 = vpow.pop %v3592
      %v3594 = vmul.f32 %v3579, 1.442695
      %v3595 = vpow.pop %v3594
      %v3596 = vmul.f32 %v3471, %v3581
      %v3597 = vmul.f32 %v3476, %v3583
      %v3598 = vmul.f32 %v3481, %v3585
      %v3599 = vmul.f32 %v3486, %v3587
      %v3600 = vmul.f32 %v3491, %v3589
      %v3601 = vmul.f32 %v3496, %v3591
      %v3602 = vmul.f32 %v3501, %v3593
      %v3603 = vmul.f32 %v3506, %v3595
      %vm3604 = vcmask 261120
      %3605 = vst.msk [vmem:[%s468] sm:$0xff] %vm3604, %v3596
      %3606 = vst.msk [vmem:[%s468 + $0x8] sm:$0xff] %vm3604, %v3597
      %3607 = vst.msk [vmem:[%s468 + $0x10] sm:$0xff] %vm3604, %v3598
      %3608 = vst.msk [vmem:[%s468 + $0x18] sm:$0xff] %vm3604, %v3599
      %3609 = vst.msk [vmem:[%s468 + $0x20] sm:$0xff] %vm3604, %v3600
      %3610 = vst.msk [vmem:[%s468 + $0x28] sm:$0xff] %vm3604, %v3601
      %3611 = vst.msk [vmem:[%s468 + $0x30] sm:$0xff] %vm3604, %v3602
      %3612 = vst.msk [vmem:[%s468 + $0x38] sm:$0xff] %vm3604, %v3603
      %s3613 = smul.u32 8, %s26
      %p3614 = scmp.lt.s32.totalorder %s27, 1
      %s3615 = scalar_select %p3614, %s27, 1
      %p3616 = scmp.lt.s32.totalorder %s3613, 31
      %s3617 = scalar_select %p3616, %s3613, 31
      %s3618 = smul.addr %s3615, 32
      %s3619 = sadd.s32 %s3617, %s3618
      %s3620 = smul.addr %s3619, 8
      %s3621 = scalar_lea.vmem %s11, %s3620
      // Predicated region
      $region65: #{tpu_custom_call.1} parent=63 // pred_check
        %p3622 = pneg %p302
      $region66: #{tpu_custom_call.1} parent=63 // pred_check_branch
        %3624 = sbr.rel (%p3622) target = $region68
      $region67: #{tpu_custom_call.1} parent=63 // pred_region
        %s3625 = smul.u32 8, %s26
      $region68: #{tpu_custom_call.1} parent=63 // pred_fallthru
        _
    $region64: #{tpu_custom_call.1} parent=5 // pred_fallthru
      _
    %p3626 = scmp.le.s32.totalorder 2, %s17
    // Predicated region
    $region69: #{tpu_custom_call.1} parent=5 // pred_check
      %p3627 = pneg %p3626
    $region70: #{tpu_custom_call.1} parent=5 // pred_check_branch
      %3629 = sbr.rel (%p3627) target = $region72
    $region71: #{tpu_custom_call.1} parent=5 // pred_region
      %s3630 = ssub.s32 %s17, 2
      // Predicated region
      $region73: #{tpu_custom_call.1} parent=71 // pred_check
        %p3631 = pneg %p308
      $region74: #{tpu_custom_call.1} parent=71 // pred_check_branch
        %3633 = sbr.rel (%p3631) target = $region76
      $region75: #{tpu_custom_call.1} parent=71 // pred_region
        %s3634 = smul.u32 8, %s28
        %p3635 = scmp.lt.s32.totalorder %s29, 1
        %s3636 = scalar_select %p3635, %s29, 1
        %p3637 = scmp.lt.s32.totalorder %s3634, 31
        %s3638 = scalar_select %p3637, %s3634, 31
        %s3639 = smul.addr %s3636, 32
        %s3640 = sadd.s32 %s3638, %s3639
        %s3641 = smul.addr %s3640, 8
        %s3642 = scalar_lea.vmem %s11, %s3641
      $region76: #{tpu_custom_call.1} parent=71 // pred_fallthru
        _
    $region72: #{tpu_custom_call.1} parent=5 // pred_fallthru
      _
  $region6: #{tpu_custom_call.1} parent=0 // loop_footer
    %s21 = sadd.s32 1, %s17
  $region7: #{tpu_custom_call.1} parent=0 // loop_footer_branch
    %16 = sbr.rel target = $region3
  $region8: #{tpu_custom_call.1} parent=0 // loop_exit
    _

</llo_original>
